<compile_context>
chip_gen: v7x
topology: tpu7x:2x2x1
jax: 0.10.0
libtpu: 0.0.40
codegen_flags: <defaults>
</compile_context>

<pallas_src>
import functools

import jax
import jax.numpy as jnp
from jax import lax
from jax.experimental import pallas as pl
from jax.experimental.pallas import tpu as pltpu

_LANE = 128


def _cdiv(a, b):
    return -(-a // b)


def _bspline_fit_kernel(knots_ref, pts_ref, out_ref, *, degree, M, L, S, d, reg_lambda):
    # knots_ref: (L, blk)   pts_ref: (d, S, blk)   out_ref: (M, d, blk)
    # Batch sits on the lane (last) axis everywhere -> full-lane VPU work throughout.
    t = knots_ref[...]                                   # (L, blk)
    P = pts_ref[...]                                     # (d, S, blk)

    # Per-knot (1, blk) lane vectors (sublane extracts, done once).
    trow = [t[i:i + 1, :] for i in range(L)]

    # u = linspace(0, 1, S) along the sublane (sample) axis, broadcast over lanes.
    u = (lax.broadcasted_iota(jnp.int32, (S, 1), 0).astype(jnp.float32)
         / jnp.float32(S - 1))                           # (S, 1)

    # --- Cox-de Boor recursion: per-basis-function (S, blk) slabs (pure VPU elementwise).
    N = [jnp.logical_and(u >= trow[i], u < trow[i + 1]).astype(jnp.float32)
         for i in range(L - 1)]                          # L-1 slabs of (S, blk)
    for k in range(1, degree + 1):
        nf = L - k - 1
        Nk = []
        for i in range(nf):
            inv1 = 1.0 / jnp.maximum(trow[i + k] - trow[i], 1e-6)          # (1, blk)
            inv2 = 1.0 / jnp.maximum(trow[i + k + 1] - trow[i + 1], 1e-6)  # (1, blk)
            Nk.append((u - trow[i]) * inv1 * N[i]
                      + (trow[i + k + 1] - u) * inv2 * N[i + 1])           # (S, blk)
        N = Nk
    # len(N) == M

    # --- Normal equations: G[i,j] = sum_s N_i N_j (symmetric), R[q,j] = sum_s P_q N_j.
    # Full-lane multiplies + sublane reductions over the S axis (all 128 lanes active).
    gdict = {}
    for i in range(M):
        for j in range(i, M):
            gdict[(i, j)] = jnp.sum(N[i] * N[j], axis=0, keepdims=True)    # (1, blk)

    gcols = []   # column j of G, shape (M, blk)
    rcols = []   # column j of R, shape (d, blk)
    for j in range(M):
        grows = [gdict[(i, j)] if i <= j else gdict[(j, i)] for i in range(M)]
        if reg_lambda > 0.0:
            grows[j] = grows[j] + jnp.float32(reg_lambda)
        gcols.append(jnp.concatenate(grows, axis=0))                       # (M, blk)
        rcols.append(jnp.concatenate(
            [jnp.sum(P[q] * N[j], axis=0, keepdims=True) for q in range(d)], axis=0))

    # --- Column Gauss-Jordan: reduce G to identity with column ops (right-multiply by
    # G^{-1}); the R block then holds C = R G^{-1} directly.
    # TODO(synk): unpivoted elimination (torch.linalg.solve uses pivoted LU); equivalent for
    #             the SPD systems this layer produces (lambda > 0); the tiny pivot clamp
    #             only avoids inf/NaN for singular unregularized systems.
    for i in range(M):
        piv = gcols[i][i:i + 1, :]                                         # (1, blk)
        piv = jnp.where(jnp.abs(piv) > 1e-30, piv, jnp.float32(1e-30))
        inv0 = pl.reciprocal(piv, approx=True)                             # EUP slot
        inv = inv0 * (2.0 - piv * inv0)                                    # Newton -> f32 acc
        cg = gcols[i] * inv                                                # (M, blk)
        cr = rcols[i] * inv                                                # (d, blk)
        for j in range(M):
            if j == i:
                continue
            f = gcols[j][i:i + 1, :]                                       # (1, blk) = G[i,j]
            gcols[j] = gcols[j] - cg * f
            rcols[j] = rcols[j] - cr * f
        gcols[i] = cg
        rcols[i] = cr

    # rcols[m][q, :] == C[b, q, m]; stack on a leading axis (no sublane repack) -> lane-dense.
    out_ref[...] = jnp.stack(rcols, axis=0)                                # (M, d, blk)


def bspline_fitting(knots, points, *, degree, num_control_points, num_samples,
                    regularization_lambda=0.0, block_batch=1024):
    """JAX/Pallas equivalent of BSplineFittingLayer.forward."""
    if knots.ndim == 1:
        knots = knots[None, :]
    if points.ndim == 2:
        points = points[None, :, :]
    batch, L = knots.shape
    _, d, S = points.shape
    M = num_control_points
    assert L == M + degree + 1, "knot vector length must be M + K + 1"
    assert S == num_samples

    # Batch on the lane axis: pad batch to a multiple of 128; block is a multiple of 128.
    # A block of 1024 elements costs only a few MiB of VMEM (inputs ~1 KiB/element plus
    # compiler scratch), well under v7x's 64 MiB physical / 32 MiB scoped budget, so no
    # ">=2 grid steps" heuristic is needed (it only helps dual-TensorCore parts anyway).
    blk = max(_LANE, (min(block_batch, 2048) // _LANE) * _LANE)
    b_ceil = _cdiv(batch, _LANE) * _LANE
    blk = min(blk, b_ceil)
    nb = _cdiv(b_ceil, blk)
    b_pad = nb * blk

    knots_t = knots.astype(jnp.float32).T                               # (L, B)
    pts_t = jnp.transpose(points.astype(jnp.float32), (1, 2, 0))        # (d, S, B)
    if b_pad != batch:
        pad = b_pad - batch
        # replicate the last batch element so padded lanes stay well-posed
        knots_t = jnp.pad(knots_t, ((0, 0), (0, pad)), mode="edge")
        pts_t = jnp.pad(pts_t, ((0, 0), (0, 0), (0, pad)), mode="edge")

    kern = functools.partial(
        _bspline_fit_kernel,
        degree=degree, M=M, L=L, S=S, d=d, reg_lambda=float(regularization_lambda))

    out = pl.pallas_call(
        kern,
        out_shape=jax.ShapeDtypeStruct((M, d, b_pad), jnp.float32),
        grid_spec=pltpu.PrefetchScalarGridSpec(
            num_scalar_prefetch=0,
            grid=(nb,),
            in_specs=[
                pl.BlockSpec((L, blk), lambda b: (0, b)),
                pl.BlockSpec((d, S, blk), lambda b: (0, 0, b)),
            ],
            out_specs=pl.BlockSpec((M, d, blk), lambda b: (0, 0, b)),
        ),
        compiler_params=pltpu.CompilerParams(
            dimension_semantics=("parallel",),
            vmem_limit_bytes=32 * 1024 * 1024),
    )(knots_t, pts_t)

    C = jnp.transpose(out[:, :, :batch], (2, 1, 0))                     # (B, d, M)
    if C.shape[0] == 1:
        return C[0]
    return C


def _bspline_reference(knots, points, degree, M, S, lam):
    """Pure-JAX mirror of the PyTorch forward (for verification)."""
    if knots.ndim == 1:
        knots = knots[None]
    if points.ndim == 2:
        points = points[None]
    batch, L = knots.shape
    u = jnp.linspace(0.0, 1.0, S)
    t = knots[:, :, None]                                               # (B, L, 1)
    u0 = u[None, None, :]
    N = jnp.logical_and(u0 >= t[:, :-1], u0 < t[:, 1:]).astype(jnp.float32)
    for k in range(1, degree + 1):
        nf = L - k - 1
        t_i, t_ik = t[:, :nf], t[:, k:k + nf]
        d1 = jnp.maximum(t_ik - t_i, 1e-6)
        term1 = (u0 - t_i) / d1 * N[:, :nf]
        t_i1, t_ik1 = t[:, 1:1 + nf], t[:, k + 1:k + 1 + nf]
        d2 = jnp.maximum(t_ik1 - t_i1, 1e-6)
        term2 = (t_ik1 - u0) / d2 * N[:, 1:1 + nf]
        N = term1 + term2
    Nmat = jnp.transpose(N, (0, 2, 1))                                  # (B, S, M)
    Pmat = jnp.transpose(points, (0, 2, 1))                             # (B, S, d)
    NTN = jnp.einsum('bsm,bsn->bmn', Nmat, Nmat)
    if lam > 0:
        NTN = NTN + lam * jnp.eye(M, dtype=jnp.float32)[None]
    NTP = jnp.einsum('bsm,bsd->bmd', Nmat, Pmat)
    Cmat = jnp.linalg.solve(NTN, NTP)
    C = jnp.transpose(Cmat, (0, 2, 1))
    return C[0] if C.shape[0] == 1 else C


def _make_clamped_knots(key, batch, degree, M):
    """Clamped knot vectors: [0]*(K+1), sorted interior knots, [1]*(K+1)."""
    n_interior = M - degree - 1
    interior = jnp.sort(
        jax.random.uniform(key, (batch, n_interior), minval=0.1, maxval=0.9), axis=1)
    return jnp.concatenate(
        [jnp.zeros((batch, degree + 1), jnp.float32),
         interior.astype(jnp.float32),
         jnp.ones((batch, degree + 1), jnp.float32)], axis=1)


if __name__ == "__main__":
    degree = 3                 # cubic
    M = 8                      # num_control_points
    S = 16                     # num_samples
    L = M + degree + 1         # 12
    lam = 0.05
    d = 3

    key = jax.random.PRNGKey(0)
    k1, k2, k3, k4 = jax.random.split(key, 4)

    # Case 1: small batch (batch=2) -- single grid step, batch padded to one 128-lane tile.
    batch = 2
    knots = _make_clamped_knots(k1, batch, degree, M)                   # (2, 12)
    points = jax.random.normal(k2, (batch, d, S), dtype=jnp.float32)    # (2, 3, 16)
    C = jax.block_until_ready(bspline_fitting(
        knots, points, degree=degree, num_control_points=M, num_samples=S,
        regularization_lambda=lam))
    C_ref = _bspline_reference(knots, points, degree, M, S, lam)
    assert C.shape == (batch, d, M)
    assert jnp.allclose(C, C_ref, atol=1e-3, rtol=1e-3), "mismatch vs reference (batch=2)"

    # Case 2: larger, non-multiple batch -- exercises lane padding with replication.
    batch2 = 11
    knots2 = _make_clamped_knots(k3, batch2, degree, M)                 # (11, 12)
    points2 = jax.random.normal(k4, (batch2, d, S), dtype=jnp.float32)  # (11, 3, 16)
    C2 = jax.block_until_ready(bspline_fitting(
        knots2, points2, degree=degree, num_control_points=M, num_samples=S,
        regularization_lambda=lam))
    C2_ref = _bspline_reference(knots2, points2, degree, M, S, lam)
    assert C2.shape == (batch2, d, M)
    assert jnp.allclose(C2, C2_ref, atol=1e-3, rtol=1e-3), "mismatch vs reference (batch=11)"

    print("KERNEL_OK")
</pallas_src>

<mosaic_0001>
module attributes {stable_mosaic.version = 11 : i64} {
  func.func @_bspline_fit_kernel(%arg0: i32, %arg1: memref<12x128xf32, #tpu.memory_space<vmem>>, %arg2: memref<3x16x128xf32, #tpu.memory_space<vmem>>, %arg3: memref<8x3x128xf32, #tpu.memory_space<vmem>>) attributes {dimension_semantics = [#tpu.dimension_semantics<parallel>], iteration_bounds = array<i64: 1>, scalar_prefetch = 0 : i64, scratch_operands = 0 : i64, tpu.core_type = #tpu.core_type<tc>, window_params = [{transform_indices = @transform_0, window_bounds = array<i64: 12, 128>}, {transform_indices = @transform_1, window_bounds = array<i64: 3, 16, 128>}, {transform_indices = @transform_2, window_bounds = array<i64: 8, 3, 128>}]} {
    %c0 = arith.constant 0 : index
    %c0_0 = arith.constant 0 : index
    %0 = vector.load %arg1[%c0, %c0_0] : memref<12x128xf32, #tpu.memory_space<vmem>>, vector<12x128xf32>
    %c0_1 = arith.constant 0 : index
    %c0_2 = arith.constant 0 : index
    %c0_3 = arith.constant 0 : index
    %1 = vector.load %arg2[%c0_1, %c0_2, %c0_3] : memref<3x16x128xf32, #tpu.memory_space<vmem>>, vector<3x16x128xf32>
    %2 = vector.extract_strided_slice %0 {offsets = [0, 0], sizes = [1, 128], strides = [1, 1]} : vector<12x128xf32> to vector<1x128xf32>
    %3 = vector.extract_strided_slice %0 {offsets = [1, 0], sizes = [1, 128], strides = [1, 1]} : vector<12x128xf32> to vector<1x128xf32>
    %4 = vector.extract_strided_slice %0 {offsets = [2, 0], sizes = [1, 128], strides = [1, 1]} : vector<12x128xf32> to vector<1x128xf32>
    %5 = vector.extract_strided_slice %0 {offsets = [3, 0], sizes = [1, 128], strides = [1, 1]} : vector<12x128xf32> to vector<1x128xf32>
    %6 = vector.extract_strided_slice %0 {offsets = [4, 0], sizes = [1, 128], strides = [1, 1]} : vector<12x128xf32> to vector<1x128xf32>
    %7 = vector.extract_strided_slice %0 {offsets = [5, 0], sizes = [1, 128], strides = [1, 1]} : vector<12x128xf32> to vector<1x128xf32>
    %8 = vector.extract_strided_slice %0 {offsets = [6, 0], sizes = [1, 128], strides = [1, 1]} : vector<12x128xf32> to vector<1x128xf32>
    %9 = vector.extract_strided_slice %0 {offsets = [7, 0], sizes = [1, 128], strides = [1, 1]} : vector<12x128xf32> to vector<1x128xf32>
    %10 = vector.extract_strided_slice %0 {offsets = [8, 0], sizes = [1, 128], strides = [1, 1]} : vector<12x128xf32> to vector<1x128xf32>
    %11 = vector.extract_strided_slice %0 {offsets = [9, 0], sizes = [1, 128], strides = [1, 1]} : vector<12x128xf32> to vector<1x128xf32>
    %12 = vector.extract_strided_slice %0 {offsets = [10, 0], sizes = [1, 128], strides = [1, 1]} : vector<12x128xf32> to vector<1x128xf32>
    %13 = vector.extract_strided_slice %0 {offsets = [11, 0], sizes = [1, 128], strides = [1, 1]} : vector<12x128xf32> to vector<1x128xf32>
    %14 = tpu.iota {dimensions = array<i32: 0>} : vector<16x1xi32>
    %15 = arith.sitofp %14 : vector<16x1xi32> to vector<16x1xf32>
    %cst = arith.constant 1.500000e+01 : f32
    %16 = vector.broadcast %cst : f32 to vector<16x1xf32>
    %17 = arith.divf %15, %16 : vector<16x1xf32>
    %18 = vector.broadcast %17 : vector<16x1xf32> to vector<16x128xf32>
    %19 = vector.broadcast %2 : vector<1x128xf32> to vector<16x128xf32>
    %20 = arith.cmpf oge, %18, %19 : vector<16x128xf32>
    %21 = vector.broadcast %17 : vector<16x1xf32> to vector<16x128xf32>
    %22 = vector.broadcast %3 : vector<1x128xf32> to vector<16x128xf32>
    %23 = arith.cmpf olt, %21, %22 : vector<16x128xf32>
    %24 = arith.andi %20, %23 : vector<16x128xi1>
    %25 = arith.extui %24 : vector<16x128xi1> to vector<16x128xi32>
    %26 = arith.sitofp %25 : vector<16x128xi32> to vector<16x128xf32>
    %27 = vector.broadcast %17 : vector<16x1xf32> to vector<16x128xf32>
    %28 = vector.broadcast %3 : vector<1x128xf32> to vector<16x128xf32>
    %29 = arith.cmpf oge, %27, %28 : vector<16x128xf32>
    %30 = vector.broadcast %17 : vector<16x1xf32> to vector<16x128xf32>
    %31 = vector.broadcast %4 : vector<1x128xf32> to vector<16x128xf32>
    %32 = arith.cmpf olt, %30, %31 : vector<16x128xf32>
    %33 = arith.andi %29, %32 : vector<16x128xi1>
    %34 = arith.extui %33 : vector<16x128xi1> to vector<16x128xi32>
    %35 = arith.sitofp %34 : vector<16x128xi32> to vector<16x128xf32>
    %36 = vector.broadcast %17 : vector<16x1xf32> to vector<16x128xf32>
    %37 = vector.broadcast %4 : vector<1x128xf32> to vector<16x128xf32>
    %38 = arith.cmpf oge, %36, %37 : vector<16x128xf32>
    %39 = vector.broadcast %17 : vector<16x1xf32> to vector<16x128xf32>
    %40 = vector.broadcast %5 : vector<1x128xf32> to vector<16x128xf32>
    %41 = arith.cmpf olt, %39, %40 : vector<16x128xf32>
    %42 = arith.andi %38, %41 : vector<16x128xi1>
    %43 = arith.extui %42 : vector<16x128xi1> to vector<16x128xi32>
    %44 = arith.sitofp %43 : vector<16x128xi32> to vector<16x128xf32>
    %45 = vector.broadcast %17 : vector<16x1xf32> to vector<16x128xf32>
    %46 = vector.broadcast %5 : vector<1x128xf32> to vector<16x128xf32>
    %47 = arith.cmpf oge, %45, %46 : vector<16x128xf32>
    %48 = vector.broadcast %17 : vector<16x1xf32> to vector<16x128xf32>
    %49 = vector.broadcast %6 : vector<1x128xf32> to vector<16x128xf32>
    %50 = arith.cmpf olt, %48, %49 : vector<16x128xf32>
    %51 = arith.andi %47, %50 : vector<16x128xi1>
    %52 = arith.extui %51 : vector<16x128xi1> to vector<16x128xi32>
    %53 = arith.sitofp %52 : vector<16x128xi32> to vector<16x128xf32>
    %54 = vector.broadcast %17 : vector<16x1xf32> to vector<16x128xf32>
    %55 = vector.broadcast %6 : vector<1x128xf32> to vector<16x128xf32>
    %56 = arith.cmpf oge, %54, %55 : vector<16x128xf32>
    %57 = vector.broadcast %17 : vector<16x1xf32> to vector<16x128xf32>
    %58 = vector.broadcast %7 : vector<1x128xf32> to vector<16x128xf32>
    %59 = arith.cmpf olt, %57, %58 : vector<16x128xf32>
    %60 = arith.andi %56, %59 : vector<16x128xi1>
    %61 = arith.extui %60 : vector<16x128xi1> to vector<16x128xi32>
    %62 = arith.sitofp %61 : vector<16x128xi32> to vector<16x128xf32>
    %63 = vector.broadcast %17 : vector<16x1xf32> to vector<16x128xf32>
    %64 = vector.broadcast %7 : vector<1x128xf32> to vector<16x128xf32>
    %65 = arith.cmpf oge, %63, %64 : vector<16x128xf32>
    %66 = vector.broadcast %17 : vector<16x1xf32> to vector<16x128xf32>
    %67 = vector.broadcast %8 : vector<1x128xf32> to vector<16x128xf32>
    %68 = arith.cmpf olt, %66, %67 : vector<16x128xf32>
    %69 = arith.andi %65, %68 : vector<16x128xi1>
    %70 = arith.extui %69 : vector<16x128xi1> to vector<16x128xi32>
    %71 = arith.sitofp %70 : vector<16x128xi32> to vector<16x128xf32>
    %72 = vector.broadcast %17 : vector<16x1xf32> to vector<16x128xf32>
    %73 = vector.broadcast %8 : vector<1x128xf32> to vector<16x128xf32>
    %74 = arith.cmpf oge, %72, %73 : vector<16x128xf32>
    %75 = vector.broadcast %17 : vector<16x1xf32> to vector<16x128xf32>
    %76 = vector.broadcast %9 : vector<1x128xf32> to vector<16x128xf32>
    %77 = arith.cmpf olt, %75, %76 : vector<16x128xf32>
    %78 = arith.andi %74, %77 : vector<16x128xi1>
    %79 = arith.extui %78 : vector<16x128xi1> to vector<16x128xi32>
    %80 = arith.sitofp %79 : vector<16x128xi32> to vector<16x128xf32>
    %81 = vector.broadcast %17 : vector<16x1xf32> to vector<16x128xf32>
    %82 = vector.broadcast %9 : vector<1x128xf32> to vector<16x128xf32>
    %83 = arith.cmpf oge, %81, %82 : vector<16x128xf32>
    %84 = vector.broadcast %17 : vector<16x1xf32> to vector<16x128xf32>
    %85 = vector.broadcast %10 : vector<1x128xf32> to vector<16x128xf32>
    %86 = arith.cmpf olt, %84, %85 : vector<16x128xf32>
    %87 = arith.andi %83, %86 : vector<16x128xi1>
    %88 = arith.extui %87 : vector<16x128xi1> to vector<16x128xi32>
    %89 = arith.sitofp %88 : vector<16x128xi32> to vector<16x128xf32>
    %90 = vector.broadcast %17 : vector<16x1xf32> to vector<16x128xf32>
    %91 = vector.broadcast %10 : vector<1x128xf32> to vector<16x128xf32>
    %92 = arith.cmpf oge, %90, %91 : vector<16x128xf32>
    %93 = vector.broadcast %17 : vector<16x1xf32> to vector<16x128xf32>
    %94 = vector.broadcast %11 : vector<1x128xf32> to vector<16x128xf32>
    %95 = arith.cmpf olt, %93, %94 : vector<16x128xf32>
    %96 = arith.andi %92, %95 : vector<16x128xi1>
    %97 = arith.extui %96 : vector<16x128xi1> to vector<16x128xi32>
    %98 = arith.sitofp %97 : vector<16x128xi32> to vector<16x128xf32>
    %99 = vector.broadcast %17 : vector<16x1xf32> to vector<16x128xf32>
    %100 = vector.broadcast %11 : vector<1x128xf32> to vector<16x128xf32>
    %101 = arith.cmpf oge, %99, %100 : vector<16x128xf32>
    %102 = vector.broadcast %17 : vector<16x1xf32> to vector<16x128xf32>
    %103 = vector.broadcast %12 : vector<1x128xf32> to vector<16x128xf32>
    %104 = arith.cmpf olt, %102, %103 : vector<16x128xf32>
    %105 = arith.andi %101, %104 : vector<16x128xi1>
    %106 = arith.extui %105 : vector<16x128xi1> to vector<16x128xi32>
    %107 = arith.sitofp %106 : vector<16x128xi32> to vector<16x128xf32>
    %108 = vector.broadcast %17 : vector<16x1xf32> to vector<16x128xf32>
    %109 = vector.broadcast %12 : vector<1x128xf32> to vector<16x128xf32>
    %110 = arith.cmpf oge, %108, %109 : vector<16x128xf32>
    %111 = vector.broadcast %17 : vector<16x1xf32> to vector<16x128xf32>
    %112 = vector.broadcast %13 : vector<1x128xf32> to vector<16x128xf32>
    %113 = arith.cmpf olt, %111, %112 : vector<16x128xf32>
    %114 = arith.andi %110, %113 : vector<16x128xi1>
    %115 = arith.extui %114 : vector<16x128xi1> to vector<16x128xi32>
    %116 = arith.sitofp %115 : vector<16x128xi32> to vector<16x128xf32>
    %117 = arith.subf %3, %2 : vector<1x128xf32>
    %cst_4 = arith.constant 9.99999997E-7 : f32
    %118 = vector.broadcast %cst_4 : f32 to vector<1x128xf32>
    %119 = arith.maximumf %117, %118 : vector<1x128xf32>
    %cst_5 = arith.constant 1.000000e+00 : f32
    %120 = vector.broadcast %cst_5 : f32 to vector<1x128xf32>
    %121 = arith.divf %120, %119 : vector<1x128xf32>
    %122 = arith.subf %4, %3 : vector<1x128xf32>
    %cst_6 = arith.constant 9.99999997E-7 : f32
    %123 = vector.broadcast %cst_6 : f32 to vector<1x128xf32>
    %124 = arith.maximumf %122, %123 : vector<1x128xf32>
    %cst_7 = arith.constant 1.000000e+00 : f32
    %125 = vector.broadcast %cst_7 : f32 to vector<1x128xf32>
    %126 = arith.divf %125, %124 : vector<1x128xf32>
    %127 = vector.broadcast %17 : vector<16x1xf32> to vector<16x128xf32>
    %128 = vector.broadcast %2 : vector<1x128xf32> to vector<16x128xf32>
    %129 = arith.subf %127, %128 : vector<16x128xf32>
    %130 = vector.broadcast %121 : vector<1x128xf32> to vector<16x128xf32>
    %131 = arith.mulf %129, %130 : vector<16x128xf32>
    %132 = arith.mulf %131, %26 : vector<16x128xf32>
    %133 = vector.broadcast %4 : vector<1x128xf32> to vector<16x128xf32>
    %134 = vector.broadcast %17 : vector<16x1xf32> to vector<16x128xf32>
    %135 = arith.subf %133, %134 : vector<16x128xf32>
    %136 = vector.broadcast %126 : vector<1x128xf32> to vector<16x128xf32>
    %137 = arith.mulf %135, %136 : vector<16x128xf32>
    %138 = arith.mulf %137, %35 : vector<16x128xf32>
    %139 = arith.addf %132, %138 : vector<16x128xf32>
    %140 = arith.subf %4, %3 : vector<1x128xf32>
    %cst_8 = arith.constant 9.99999997E-7 : f32
    %141 = vector.broadcast %cst_8 : f32 to vector<1x128xf32>
    %142 = arith.maximumf %140, %141 : vector<1x128xf32>
    %cst_9 = arith.constant 1.000000e+00 : f32
    %143 = vector.broadcast %cst_9 : f32 to vector<1x128xf32>
    %144 = arith.divf %143, %142 : vector<1x128xf32>
    %145 = arith.subf %5, %4 : vector<1x128xf32>
    %cst_10 = arith.constant 9.99999997E-7 : f32
    %146 = vector.broadcast %cst_10 : f32 to vector<1x128xf32>
    %147 = arith.maximumf %145, %146 : vector<1x128xf32>
    %cst_11 = arith.constant 1.000000e+00 : f32
    %148 = vector.broadcast %cst_11 : f32 to vector<1x128xf32>
    %149 = arith.divf %148, %147 : vector<1x128xf32>
    %150 = vector.broadcast %17 : vector<16x1xf32> to vector<16x128xf32>
    %151 = vector.broadcast %3 : vector<1x128xf32> to vector<16x128xf32>
    %152 = arith.subf %150, %151 : vector<16x128xf32>
    %153 = vector.broadcast %144 : vector<1x128xf32> to vector<16x128xf32>
    %154 = arith.mulf %152, %153 : vector<16x128xf32>
    %155 = arith.mulf %154, %35 : vector<16x128xf32>
    %156 = vector.broadcast %5 : vector<1x128xf32> to vector<16x128xf32>
    %157 = vector.broadcast %17 : vector<16x1xf32> to vector<16x128xf32>
    %158 = arith.subf %156, %157 : vector<16x128xf32>
    %159 = vector.broadcast %149 : vector<1x128xf32> to vector<16x128xf32>
    %160 = arith.mulf %158, %159 : vector<16x128xf32>
    %161 = arith.mulf %160, %44 : vector<16x128xf32>
    %162 = arith.addf %155, %161 : vector<16x128xf32>
    %163 = arith.subf %5, %4 : vector<1x128xf32>
    %cst_12 = arith.constant 9.99999997E-7 : f32
    %164 = vector.broadcast %cst_12 : f32 to vector<1x128xf32>
    %165 = arith.maximumf %163, %164 : vector<1x128xf32>
    %cst_13 = arith.constant 1.000000e+00 : f32
    %166 = vector.broadcast %cst_13 : f32 to vector<1x128xf32>
    %167 = arith.divf %166, %165 : vector<1x128xf32>
    %168 = arith.subf %6, %5 : vector<1x128xf32>
    %cst_14 = arith.constant 9.99999997E-7 : f32
    %169 = vector.broadcast %cst_14 : f32 to vector<1x128xf32>
    %170 = arith.maximumf %168, %169 : vector<1x128xf32>
    %cst_15 = arith.constant 1.000000e+00 : f32
    %171 = vector.broadcast %cst_15 : f32 to vector<1x128xf32>
    %172 = arith.divf %171, %170 : vector<1x128xf32>
    %173 = vector.broadcast %17 : vector<16x1xf32> to vector<16x128xf32>
    %174 = vector.broadcast %4 : vector<1x128xf32> to vector<16x128xf32>
    %175 = arith.subf %173, %174 : vector<16x128xf32>
    %176 = vector.broadcast %167 : vector<1x128xf32> to vector<16x128xf32>
    %177 = arith.mulf %175, %176 : vector<16x128xf32>
    %178 = arith.mulf %177, %44 : vector<16x128xf32>
    %179 = vector.broadcast %6 : vector<1x128xf32> to vector<16x128xf32>
    %180 = vector.broadcast %17 : vector<16x1xf32> to vector<16x128xf32>
    %181 = arith.subf %179, %180 : vector<16x128xf32>
    %182 = vector.broadcast %172 : vector<1x128xf32> to vector<16x128xf32>
    %183 = arith.mulf %181, %182 : vector<16x128xf32>
    %184 = arith.mulf %183, %53 : vector<16x128xf32>
    %185 = arith.addf %178, %184 : vector<16x128xf32>
    %186 = arith.subf %6, %5 : vector<1x128xf32>
    %cst_16 = arith.constant 9.99999997E-7 : f32
    %187 = vector.broadcast %cst_16 : f32 to vector<1x128xf32>
    %188 = arith.maximumf %186, %187 : vector<1x128xf32>
    %cst_17 = arith.constant 1.000000e+00 : f32
    %189 = vector.broadcast %cst_17 : f32 to vector<1x128xf32>
    %190 = arith.divf %189, %188 : vector<1x128xf32>
    %191 = arith.subf %7, %6 : vector<1x128xf32>
    %cst_18 = arith.constant 9.99999997E-7 : f32
    %192 = vector.broadcast %cst_18 : f32 to vector<1x128xf32>
    %193 = arith.maximumf %191, %192 : vector<1x128xf32>
    %cst_19 = arith.constant 1.000000e+00 : f32
    %194 = vector.broadcast %cst_19 : f32 to vector<1x128xf32>
    %195 = arith.divf %194, %193 : vector<1x128xf32>
    %196 = vector.broadcast %17 : vector<16x1xf32> to vector<16x128xf32>
    %197 = vector.broadcast %5 : vector<1x128xf32> to vector<16x128xf32>
    %198 = arith.subf %196, %197 : vector<16x128xf32>
    %199 = vector.broadcast %190 : vector<1x128xf32> to vector<16x128xf32>
    %200 = arith.mulf %198, %199 : vector<16x128xf32>
    %201 = arith.mulf %200, %53 : vector<16x128xf32>
    %202 = vector.broadcast %7 : vector<1x128xf32> to vector<16x128xf32>
    %203 = vector.broadcast %17 : vector<16x1xf32> to vector<16x128xf32>
    %204 = arith.subf %202, %203 : vector<16x128xf32>
    %205 = vector.broadcast %195 : vector<1x128xf32> to vector<16x128xf32>
    %206 = arith.mulf %204, %205 : vector<16x128xf32>
    %207 = arith.mulf %206, %62 : vector<16x128xf32>
    %208 = arith.addf %201, %207 : vector<16x128xf32>
    %209 = arith.subf %7, %6 : vector<1x128xf32>
    %cst_20 = arith.constant 9.99999997E-7 : f32
    %210 = vector.broadcast %cst_20 : f32 to vector<1x128xf32>
    %211 = arith.maximumf %209, %210 : vector<1x128xf32>
    %cst_21 = arith.constant 1.000000e+00 : f32
    %212 = vector.broadcast %cst_21 : f32 to vector<1x128xf32>
    %213 = arith.divf %212, %211 : vector<1x128xf32>
    %214 = arith.subf %8, %7 : vector<1x128xf32>
    %cst_22 = arith.constant 9.99999997E-7 : f32
    %215 = vector.broadcast %cst_22 : f32 to vector<1x128xf32>
    %216 = arith.maximumf %214, %215 : vector<1x128xf32>
    %cst_23 = arith.constant 1.000000e+00 : f32
    %217 = vector.broadcast %cst_23 : f32 to vector<1x128xf32>
    %218 = arith.divf %217, %216 : vector<1x128xf32>
    %219 = vector.broadcast %17 : vector<16x1xf32> to vector<16x128xf32>
    %220 = vector.broadcast %6 : vector<1x128xf32> to vector<16x128xf32>
    %221 = arith.subf %219, %220 : vector<16x128xf32>
    %222 = vector.broadcast %213 : vector<1x128xf32> to vector<16x128xf32>
    %223 = arith.mulf %221, %222 : vector<16x128xf32>
    %224 = arith.mulf %223, %62 : vector<16x128xf32>
    %225 = vector.broadcast %8 : vector<1x128xf32> to vector<16x128xf32>
    %226 = vector.broadcast %17 : vector<16x1xf32> to vector<16x128xf32>
    %227 = arith.subf %225, %226 : vector<16x128xf32>
    %228 = vector.broadcast %218 : vector<1x128xf32> to vector<16x128xf32>
    %229 = arith.mulf %227, %228 : vector<16x128xf32>
    %230 = arith.mulf %229, %71 : vector<16x128xf32>
    %231 = arith.addf %224, %230 : vector<16x128xf32>
    %232 = arith.subf %8, %7 : vector<1x128xf32>
    %cst_24 = arith.constant 9.99999997E-7 : f32
    %233 = vector.broadcast %cst_24 : f32 to vector<1x128xf32>
    %234 = arith.maximumf %232, %233 : vector<1x128xf32>
    %cst_25 = arith.constant 1.000000e+00 : f32
    %235 = vector.broadcast %cst_25 : f32 to vector<1x128xf32>
    %236 = arith.divf %235, %234 : vector<1x128xf32>
    %237 = arith.subf %9, %8 : vector<1x128xf32>
    %cst_26 = arith.constant 9.99999997E-7 : f32
    %238 = vector.broadcast %cst_26 : f32 to vector<1x128xf32>
    %239 = arith.maximumf %237, %238 : vector<1x128xf32>
    %cst_27 = arith.constant 1.000000e+00 : f32
    %240 = vector.broadcast %cst_27 : f32 to vector<1x128xf32>
    %241 = arith.divf %240, %239 : vector<1x128xf32>
    %242 = vector.broadcast %17 : vector<16x1xf32> to vector<16x128xf32>
    %243 = vector.broadcast %7 : vector<1x128xf32> to vector<16x128xf32>
    %244 = arith.subf %242, %243 : vector<16x128xf32>
    %245 = vector.broadcast %236 : vector<1x128xf32> to vector<16x128xf32>
    %246 = arith.mulf %244, %245 : vector<16x128xf32>
    %247 = arith.mulf %246, %71 : vector<16x128xf32>
    %248 = vector.broadcast %9 : vector<1x128xf32> to vector<16x128xf32>
    %249 = vector.broadcast %17 : vector<16x1xf32> to vector<16x128xf32>
    %250 = arith.subf %248, %249 : vector<16x128xf32>
    %251 = vector.broadcast %241 : vector<1x128xf32> to vector<16x128xf32>
    %252 = arith.mulf %250, %251 : vector<16x128xf32>
    %253 = arith.mulf %252, %80 : vector<16x128xf32>
    %254 = arith.addf %247, %253 : vector<16x128xf32>
    %255 = arith.subf %9, %8 : vector<1x128xf32>
    %cst_28 = arith.constant 9.99999997E-7 : f32
    %256 = vector.broadcast %cst_28 : f32 to vector<1x128xf32>
    %257 = arith.maximumf %255, %256 : vector<1x128xf32>
    %cst_29 = arith.constant 1.000000e+00 : f32
    %258 = vector.broadcast %cst_29 : f32 to vector<1x128xf32>
    %259 = arith.divf %258, %257 : vector<1x128xf32>
    %260 = arith.subf %10, %9 : vector<1x128xf32>
    %cst_30 = arith.constant 9.99999997E-7 : f32
    %261 = vector.broadcast %cst_30 : f32 to vector<1x128xf32>
    %262 = arith.maximumf %260, %261 : vector<1x128xf32>
    %cst_31 = arith.constant 1.000000e+00 : f32
    %263 = vector.broadcast %cst_31 : f32 to vector<1x128xf32>
    %264 = arith.divf %263, %262 : vector<1x128xf32>
    %265 = vector.broadcast %17 : vector<16x1xf32> to vector<16x128xf32>
    %266 = vector.broadcast %8 : vector<1x128xf32> to vector<16x128xf32>
    %267 = arith.subf %265, %266 : vector<16x128xf32>
    %268 = vector.broadcast %259 : vector<1x128xf32> to vector<16x128xf32>
    %269 = arith.mulf %267, %268 : vector<16x128xf32>
    %270 = arith.mulf %269, %80 : vector<16x128xf32>
    %271 = vector.broadcast %10 : vector<1x128xf32> to vector<16x128xf32>
    %272 = vector.broadcast %17 : vector<16x1xf32> to vector<16x128xf32>
    %273 = arith.subf %271, %272 : vector<16x128xf32>
    %274 = vector.broadcast %264 : vector<1x128xf32> to vector<16x128xf32>
    %275 = arith.mulf %273, %274 : vector<16x128xf32>
    %276 = arith.mulf %275, %89 : vector<16x128xf32>
    %277 = arith.addf %270, %276 : vector<16x128xf32>
    %278 = arith.subf %10, %9 : vector<1x128xf32>
    %cst_32 = arith.constant 9.99999997E-7 : f32
    %279 = vector.broadcast %cst_32 : f32 to vector<1x128xf32>
    %280 = arith.maximumf %278, %279 : vector<1x128xf32>
    %cst_33 = arith.constant 1.000000e+00 : f32
    %281 = vector.broadcast %cst_33 : f32 to vector<1x128xf32>
    %282 = arith.divf %281, %280 : vector<1x128xf32>
    %283 = arith.subf %11, %10 : vector<1x128xf32>
    %cst_34 = arith.constant 9.99999997E-7 : f32
    %284 = vector.broadcast %cst_34 : f32 to vector<1x128xf32>
    %285 = arith.maximumf %283, %284 : vector<1x128xf32>
    %cst_35 = arith.constant 1.000000e+00 : f32
    %286 = vector.broadcast %cst_35 : f32 to vector<1x128xf32>
    %287 = arith.divf %286, %285 : vector<1x128xf32>
    %288 = vector.broadcast %17 : vector<16x1xf32> to vector<16x128xf32>
    %289 = vector.broadcast %9 : vector<1x128xf32> to vector<16x128xf32>
    %290 = arith.subf %288, %289 : vector<16x128xf32>
    %291 = vector.broadcast %282 : vector<1x128xf32> to vector<16x128xf32>
    %292 = arith.mulf %290, %291 : vector<16x128xf32>
    %293 = arith.mulf %292, %89 : vector<16x128xf32>
    %294 = vector.broadcast %11 : vector<1x128xf32> to vector<16x128xf32>
    %295 = vector.broadcast %17 : vector<16x1xf32> to vector<16x128xf32>
    %296 = arith.subf %294, %295 : vector<16x128xf32>
    %297 = vector.broadcast %287 : vector<1x128xf32> to vector<16x128xf32>
    %298 = arith.mulf %296, %297 : vector<16x128xf32>
    %299 = arith.mulf %298, %98 : vector<16x128xf32>
    %300 = arith.addf %293, %299 : vector<16x128xf32>
    %301 = arith.subf %11, %10 : vector<1x128xf32>
    %cst_36 = arith.constant 9.99999997E-7 : f32
    %302 = vector.broadcast %cst_36 : f32 to vector<1x128xf32>
    %303 = arith.maximumf %301, %302 : vector<1x128xf32>
    %cst_37 = arith.constant 1.000000e+00 : f32
    %304 = vector.broadcast %cst_37 : f32 to vector<1x128xf32>
    %305 = arith.divf %304, %303 : vector<1x128xf32>
    %306 = arith.subf %12, %11 : vector<1x128xf32>
    %cst_38 = arith.constant 9.99999997E-7 : f32
    %307 = vector.broadcast %cst_38 : f32 to vector<1x128xf32>
    %308 = arith.maximumf %306, %307 : vector<1x128xf32>
    %cst_39 = arith.constant 1.000000e+00 : f32
    %309 = vector.broadcast %cst_39 : f32 to vector<1x128xf32>
    %310 = arith.divf %309, %308 : vector<1x128xf32>
    %311 = vector.broadcast %17 : vector<16x1xf32> to vector<16x128xf32>
    %312 = vector.broadcast %10 : vector<1x128xf32> to vector<16x128xf32>
    %313 = arith.subf %311, %312 : vector<16x128xf32>
    %314 = vector.broadcast %305 : vector<1x128xf32> to vector<16x128xf32>
    %315 = arith.mulf %313, %314 : vector<16x128xf32>
    %316 = arith.mulf %315, %98 : vector<16x128xf32>
    %317 = vector.broadcast %12 : vector<1x128xf32> to vector<16x128xf32>
    %318 = vector.broadcast %17 : vector<16x1xf32> to vector<16x128xf32>
    %319 = arith.subf %317, %318 : vector<16x128xf32>
    %320 = vector.broadcast %310 : vector<1x128xf32> to vector<16x128xf32>
    %321 = arith.mulf %319, %320 : vector<16x128xf32>
    %322 = arith.mulf %321, %107 : vector<16x128xf32>
    %323 = arith.addf %316, %322 : vector<16x128xf32>
    %324 = arith.subf %12, %11 : vector<1x128xf32>
    %cst_40 = arith.constant 9.99999997E-7 : f32
    %325 = vector.broadcast %cst_40 : f32 to vector<1x128xf32>
    %326 = arith.maximumf %324, %325 : vector<1x128xf32>
    %cst_41 = arith.constant 1.000000e+00 : f32
    %327 = vector.broadcast %cst_41 : f32 to vector<1x128xf32>
    %328 = arith.divf %327, %326 : vector<1x128xf32>
    %329 = arith.subf %13, %12 : vector<1x128xf32>
    %cst_42 = arith.constant 9.99999997E-7 : f32
    %330 = vector.broadcast %cst_42 : f32 to vector<1x128xf32>
    %331 = arith.maximumf %329, %330 : vector<1x128xf32>
    %cst_43 = arith.constant 1.000000e+00 : f32
    %332 = vector.broadcast %cst_43 : f32 to vector<1x128xf32>
    %333 = arith.divf %332, %331 : vector<1x128xf32>
    %334 = vector.broadcast %17 : vector<16x1xf32> to vector<16x128xf32>
    %335 = vector.broadcast %11 : vector<1x128xf32> to vector<16x128xf32>
    %336 = arith.subf %334, %335 : vector<16x128xf32>
    %337 = vector.broadcast %328 : vector<1x128xf32> to vector<16x128xf32>
    %338 = arith.mulf %336, %337 : vector<16x128xf32>
    %339 = arith.mulf %338, %107 : vector<16x128xf32>
    %340 = vector.broadcast %13 : vector<1x128xf32> to vector<16x128xf32>
    %341 = vector.broadcast %17 : vector<16x1xf32> to vector<16x128xf32>
    %342 = arith.subf %340, %341 : vector<16x128xf32>
    %343 = vector.broadcast %333 : vector<1x128xf32> to vector<16x128xf32>
    %344 = arith.mulf %342, %343 : vector<16x128xf32>
    %345 = arith.mulf %344, %116 : vector<16x128xf32>
    %346 = arith.addf %339, %345 : vector<16x128xf32>
    %347 = arith.subf %4, %2 : vector<1x128xf32>
    %cst_44 = arith.constant 9.99999997E-7 : f32
    %348 = vector.broadcast %cst_44 : f32 to vector<1x128xf32>
    %349 = arith.maximumf %347, %348 : vector<1x128xf32>
    %cst_45 = arith.constant 1.000000e+00 : f32
    %350 = vector.broadcast %cst_45 : f32 to vector<1x128xf32>
    %351 = arith.divf %350, %349 : vector<1x128xf32>
    %352 = arith.subf %5, %3 : vector<1x128xf32>
    %cst_46 = arith.constant 9.99999997E-7 : f32
    %353 = vector.broadcast %cst_46 : f32 to vector<1x128xf32>
    %354 = arith.maximumf %352, %353 : vector<1x128xf32>
    %cst_47 = arith.constant 1.000000e+00 : f32
    %355 = vector.broadcast %cst_47 : f32 to vector<1x128xf32>
    %356 = arith.divf %355, %354 : vector<1x128xf32>
    %357 = vector.broadcast %17 : vector<16x1xf32> to vector<16x128xf32>
    %358 = vector.broadcast %2 : vector<1x128xf32> to vector<16x128xf32>
    %359 = arith.subf %357, %358 : vector<16x128xf32>
    %360 = vector.broadcast %351 : vector<1x128xf32> to vector<16x128xf32>
    %361 = arith.mulf %359, %360 : vector<16x128xf32>
    %362 = arith.mulf %361, %139 : vector<16x128xf32>
    %363 = vector.broadcast %5 : vector<1x128xf32> to vector<16x128xf32>
    %364 = vector.broadcast %17 : vector<16x1xf32> to vector<16x128xf32>
    %365 = arith.subf %363, %364 : vector<16x128xf32>
    %366 = vector.broadcast %356 : vector<1x128xf32> to vector<16x128xf32>
    %367 = arith.mulf %365, %366 : vector<16x128xf32>
    %368 = arith.mulf %367, %162 : vector<16x128xf32>
    %369 = arith.addf %362, %368 : vector<16x128xf32>
    %370 = arith.subf %5, %3 : vector<1x128xf32>
    %cst_48 = arith.constant 9.99999997E-7 : f32
    %371 = vector.broadcast %cst_48 : f32 to vector<1x128xf32>
    %372 = arith.maximumf %370, %371 : vector<1x128xf32>
    %cst_49 = arith.constant 1.000000e+00 : f32
    %373 = vector.broadcast %cst_49 : f32 to vector<1x128xf32>
    %374 = arith.divf %373, %372 : vector<1x128xf32>
    %375 = arith.subf %6, %4 : vector<1x128xf32>
    %cst_50 = arith.constant 9.99999997E-7 : f32
    %376 = vector.broadcast %cst_50 : f32 to vector<1x128xf32>
    %377 = arith.maximumf %375, %376 : vector<1x128xf32>
    %cst_51 = arith.constant 1.000000e+00 : f32
    %378 = vector.broadcast %cst_51 : f32 to vector<1x128xf32>
    %379 = arith.divf %378, %377 : vector<1x128xf32>
    %380 = vector.broadcast %17 : vector<16x1xf32> to vector<16x128xf32>
    %381 = vector.broadcast %3 : vector<1x128xf32> to vector<16x128xf32>
    %382 = arith.subf %380, %381 : vector<16x128xf32>
    %383 = vector.broadcast %374 : vector<1x128xf32> to vector<16x128xf32>
    %384 = arith.mulf %382, %383 : vector<16x128xf32>
    %385 = arith.mulf %384, %162 : vector<16x128xf32>
    %386 = vector.broadcast %6 : vector<1x128xf32> to vector<16x128xf32>
    %387 = vector.broadcast %17 : vector<16x1xf32> to vector<16x128xf32>
    %388 = arith.subf %386, %387 : vector<16x128xf32>
    %389 = vector.broadcast %379 : vector<1x128xf32> to vector<16x128xf32>
    %390 = arith.mulf %388, %389 : vector<16x128xf32>
    %391 = arith.mulf %390, %185 : vector<16x128xf32>
    %392 = arith.addf %385, %391 : vector<16x128xf32>
    %393 = arith.subf %6, %4 : vector<1x128xf32>
    %cst_52 = arith.constant 9.99999997E-7 : f32
    %394 = vector.broadcast %cst_52 : f32 to vector<1x128xf32>
    %395 = arith.maximumf %393, %394 : vector<1x128xf32>
    %cst_53 = arith.constant 1.000000e+00 : f32
    %396 = vector.broadcast %cst_53 : f32 to vector<1x128xf32>
    %397 = arith.divf %396, %395 : vector<1x128xf32>
    %398 = arith.subf %7, %5 : vector<1x128xf32>
    %cst_54 = arith.constant 9.99999997E-7 : f32
    %399 = vector.broadcast %cst_54 : f32 to vector<1x128xf32>
    %400 = arith.maximumf %398, %399 : vector<1x128xf32>
    %cst_55 = arith.constant 1.000000e+00 : f32
    %401 = vector.broadcast %cst_55 : f32 to vector<1x128xf32>
    %402 = arith.divf %401, %400 : vector<1x128xf32>
    %403 = vector.broadcast %17 : vector<16x1xf32> to vector<16x128xf32>
    %404 = vector.broadcast %4 : vector<1x128xf32> to vector<16x128xf32>
    %405 = arith.subf %403, %404 : vector<16x128xf32>
    %406 = vector.broadcast %397 : vector<1x128xf32> to vector<16x128xf32>
    %407 = arith.mulf %405, %406 : vector<16x128xf32>
    %408 = arith.mulf %407, %185 : vector<16x128xf32>
    %409 = vector.broadcast %7 : vector<1x128xf32> to vector<16x128xf32>
    %410 = vector.broadcast %17 : vector<16x1xf32> to vector<16x128xf32>
    %411 = arith.subf %409, %410 : vector<16x128xf32>
    %412 = vector.broadcast %402 : vector<1x128xf32> to vector<16x128xf32>
    %413 = arith.mulf %411, %412 : vector<16x128xf32>
    %414 = arith.mulf %413, %208 : vector<16x128xf32>
    %415 = arith.addf %408, %414 : vector<16x128xf32>
    %416 = arith.subf %7, %5 : vector<1x128xf32>
    %cst_56 = arith.constant 9.99999997E-7 : f32
    %417 = vector.broadcast %cst_56 : f32 to vector<1x128xf32>
    %418 = arith.maximumf %416, %417 : vector<1x128xf32>
    %cst_57 = arith.constant 1.000000e+00 : f32
    %419 = vector.broadcast %cst_57 : f32 to vector<1x128xf32>
    %420 = arith.divf %419, %418 : vector<1x128xf32>
    %421 = arith.subf %8, %6 : vector<1x128xf32>
    %cst_58 = arith.constant 9.99999997E-7 : f32
    %422 = vector.broadcast %cst_58 : f32 to vector<1x128xf32>
    %423 = arith.maximumf %421, %422 : vector<1x128xf32>
    %cst_59 = arith.constant 1.000000e+00 : f32
    %424 = vector.broadcast %cst_59 : f32 to vector<1x128xf32>
    %425 = arith.divf %424, %423 : vector<1x128xf32>
    %426 = vector.broadcast %17 : vector<16x1xf32> to vector<16x128xf32>
    %427 = vector.broadcast %5 : vector<1x128xf32> to vector<16x128xf32>
    %428 = arith.subf %426, %427 : vector<16x128xf32>
    %429 = vector.broadcast %420 : vector<1x128xf32> to vector<16x128xf32>
    %430 = arith.mulf %428, %429 : vector<16x128xf32>
    %431 = arith.mulf %430, %208 : vector<16x128xf32>
    %432 = vector.broadcast %8 : vector<1x128xf32> to vector<16x128xf32>
    %433 = vector.broadcast %17 : vector<16x1xf32> to vector<16x128xf32>
    %434 = arith.subf %432, %433 : vector<16x128xf32>
    %435 = vector.broadcast %425 : vector<1x128xf32> to vector<16x128xf32>
    %436 = arith.mulf %434, %435 : vector<16x128xf32>
    %437 = arith.mulf %436, %231 : vector<16x128xf32>
    %438 = arith.addf %431, %437 : vector<16x128xf32>
    %439 = arith.subf %8, %6 : vector<1x128xf32>
    %cst_60 = arith.constant 9.99999997E-7 : f32
    %440 = vector.broadcast %cst_60 : f32 to vector<1x128xf32>
    %441 = arith.maximumf %439, %440 : vector<1x128xf32>
    %cst_61 = arith.constant 1.000000e+00 : f32
    %442 = vector.broadcast %cst_61 : f32 to vector<1x128xf32>
    %443 = arith.divf %442, %441 : vector<1x128xf32>
    %444 = arith.subf %9, %7 : vector<1x128xf32>
    %cst_62 = arith.constant 9.99999997E-7 : f32
    %445 = vector.broadcast %cst_62 : f32 to vector<1x128xf32>
    %446 = arith.maximumf %444, %445 : vector<1x128xf32>
    %cst_63 = arith.constant 1.000000e+00 : f32
    %447 = vector.broadcast %cst_63 : f32 to vector<1x128xf32>
    %448 = arith.divf %447, %446 : vector<1x128xf32>
    %449 = vector.broadcast %17 : vector<16x1xf32> to vector<16x128xf32>
    %450 = vector.broadcast %6 : vector<1x128xf32> to vector<16x128xf32>
    %451 = arith.subf %449, %450 : vector<16x128xf32>
    %452 = vector.broadcast %443 : vector<1x128xf32> to vector<16x128xf32>
    %453 = arith.mulf %451, %452 : vector<16x128xf32>
    %454 = arith.mulf %453, %231 : vector<16x128xf32>
    %455 = vector.broadcast %9 : vector<1x128xf32> to vector<16x128xf32>
    %456 = vector.broadcast %17 : vector<16x1xf32> to vector<16x128xf32>
    %457 = arith.subf %455, %456 : vector<16x128xf32>
    %458 = vector.broadcast %448 : vector<1x128xf32> to vector<16x128xf32>
    %459 = arith.mulf %457, %458 : vector<16x128xf32>
    %460 = arith.mulf %459, %254 : vector<16x128xf32>
    %461 = arith.addf %454, %460 : vector<16x128xf32>
    %462 = arith.subf %9, %7 : vector<1x128xf32>
    %cst_64 = arith.constant 9.99999997E-7 : f32
    %463 = vector.broadcast %cst_64 : f32 to vector<1x128xf32>
    %464 = arith.maximumf %462, %463 : vector<1x128xf32>
    %cst_65 = arith.constant 1.000000e+00 : f32
    %465 = vector.broadcast %cst_65 : f32 to vector<1x128xf32>
    %466 = arith.divf %465, %464 : vector<1x128xf32>
    %467 = arith.subf %10, %8 : vector<1x128xf32>
    %cst_66 = arith.constant 9.99999997E-7 : f32
    %468 = vector.broadcast %cst_66 : f32 to vector<1x128xf32>
    %469 = arith.maximumf %467, %468 : vector<1x128xf32>
    %cst_67 = arith.constant 1.000000e+00 : f32
    %470 = vector.broadcast %cst_67 : f32 to vector<1x128xf32>
    %471 = arith.divf %470, %469 : vector<1x128xf32>
    %472 = vector.broadcast %17 : vector<16x1xf32> to vector<16x128xf32>
    %473 = vector.broadcast %7 : vector<1x128xf32> to vector<16x128xf32>
    %474 = arith.subf %472, %473 : vector<16x128xf32>
    %475 = vector.broadcast %466 : vector<1x128xf32> to vector<16x128xf32>
    %476 = arith.mulf %474, %475 : vector<16x128xf32>
    %477 = arith.mulf %476, %254 : vector<16x128xf32>
    %478 = vector.broadcast %10 : vector<1x128xf32> to vector<16x128xf32>
    %479 = vector.broadcast %17 : vector<16x1xf32> to vector<16x128xf32>
    %480 = arith.subf %478, %479 : vector<16x128xf32>
    %481 = vector.broadcast %471 : vector<1x128xf32> to vector<16x128xf32>
    %482 = arith.mulf %480, %481 : vector<16x128xf32>
    %483 = arith.mulf %482, %277 : vector<16x128xf32>
    %484 = arith.addf %477, %483 : vector<16x128xf32>
    %485 = arith.subf %10, %8 : vector<1x128xf32>
    %cst_68 = arith.constant 9.99999997E-7 : f32
    %486 = vector.broadcast %cst_68 : f32 to vector<1x128xf32>
    %487 = arith.maximumf %485, %486 : vector<1x128xf32>
    %cst_69 = arith.constant 1.000000e+00 : f32
    %488 = vector.broadcast %cst_69 : f32 to vector<1x128xf32>
    %489 = arith.divf %488, %487 : vector<1x128xf32>
    %490 = arith.subf %11, %9 : vector<1x128xf32>
    %cst_70 = arith.constant 9.99999997E-7 : f32
    %491 = vector.broadcast %cst_70 : f32 to vector<1x128xf32>
    %492 = arith.maximumf %490, %491 : vector<1x128xf32>
    %cst_71 = arith.constant 1.000000e+00 : f32
    %493 = vector.broadcast %cst_71 : f32 to vector<1x128xf32>
    %494 = arith.divf %493, %492 : vector<1x128xf32>
    %495 = vector.broadcast %17 : vector<16x1xf32> to vector<16x128xf32>
    %496 = vector.broadcast %8 : vector<1x128xf32> to vector<16x128xf32>
    %497 = arith.subf %495, %496 : vector<16x128xf32>
    %498 = vector.broadcast %489 : vector<1x128xf32> to vector<16x128xf32>
    %499 = arith.mulf %497, %498 : vector<16x128xf32>
    %500 = arith.mulf %499, %277 : vector<16x128xf32>
    %501 = vector.broadcast %11 : vector<1x128xf32> to vector<16x128xf32>
    %502 = vector.broadcast %17 : vector<16x1xf32> to vector<16x128xf32>
    %503 = arith.subf %501, %502 : vector<16x128xf32>
    %504 = vector.broadcast %494 : vector<1x128xf32> to vector<16x128xf32>
    %505 = arith.mulf %503, %504 : vector<16x128xf32>
    %506 = arith.mulf %505, %300 : vector<16x128xf32>
    %507 = arith.addf %500, %506 : vector<16x128xf32>
    %508 = arith.subf %11, %9 : vector<1x128xf32>
    %cst_72 = arith.constant 9.99999997E-7 : f32
    %509 = vector.broadcast %cst_72 : f32 to vector<1x128xf32>
    %510 = arith.maximumf %508, %509 : vector<1x128xf32>
    %cst_73 = arith.constant 1.000000e+00 : f32
    %511 = vector.broadcast %cst_73 : f32 to vector<1x128xf32>
    %512 = arith.divf %511, %510 : vector<1x128xf32>
    %513 = arith.subf %12, %10 : vector<1x128xf32>
    %cst_74 = arith.constant 9.99999997E-7 : f32
    %514 = vector.broadcast %cst_74 : f32 to vector<1x128xf32>
    %515 = arith.maximumf %513, %514 : vector<1x128xf32>
    %cst_75 = arith.constant 1.000000e+00 : f32
    %516 = vector.broadcast %cst_75 : f32 to vector<1x128xf32>
    %517 = arith.divf %516, %515 : vector<1x128xf32>
    %518 = vector.broadcast %17 : vector<16x1xf32> to vector<16x128xf32>
    %519 = vector.broadcast %9 : vector<1x128xf32> to vector<16x128xf32>
    %520 = arith.subf %518, %519 : vector<16x128xf32>
    %521 = vector.broadcast %512 : vector<1x128xf32> to vector<16x128xf32>
    %522 = arith.mulf %520, %521 : vector<16x128xf32>
    %523 = arith.mulf %522, %300 : vector<16x128xf32>
    %524 = vector.broadcast %12 : vector<1x128xf32> to vector<16x128xf32>
    %525 = vector.broadcast %17 : vector<16x1xf32> to vector<16x128xf32>
    %526 = arith.subf %524, %525 : vector<16x128xf32>
    %527 = vector.broadcast %517 : vector<1x128xf32> to vector<16x128xf32>
    %528 = arith.mulf %526, %527 : vector<16x128xf32>
    %529 = arith.mulf %528, %323 : vector<16x128xf32>
    %530 = arith.addf %523, %529 : vector<16x128xf32>
    %531 = arith.subf %12, %10 : vector<1x128xf32>
    %cst_76 = arith.constant 9.99999997E-7 : f32
    %532 = vector.broadcast %cst_76 : f32 to vector<1x128xf32>
    %533 = arith.maximumf %531, %532 : vector<1x128xf32>
    %cst_77 = arith.constant 1.000000e+00 : f32
    %534 = vector.broadcast %cst_77 : f32 to vector<1x128xf32>
    %535 = arith.divf %534, %533 : vector<1x128xf32>
    %536 = arith.subf %13, %11 : vector<1x128xf32>
    %cst_78 = arith.constant 9.99999997E-7 : f32
    %537 = vector.broadcast %cst_78 : f32 to vector<1x128xf32>
    %538 = arith.maximumf %536, %537 : vector<1x128xf32>
    %cst_79 = arith.constant 1.000000e+00 : f32
    %539 = vector.broadcast %cst_79 : f32 to vector<1x128xf32>
    %540 = arith.divf %539, %538 : vector<1x128xf32>
    %541 = vector.broadcast %17 : vector<16x1xf32> to vector<16x128xf32>
    %542 = vector.broadcast %10 : vector<1x128xf32> to vector<16x128xf32>
    %543 = arith.subf %541, %542 : vector<16x128xf32>
    %544 = vector.broadcast %535 : vector<1x128xf32> to vector<16x128xf32>
    %545 = arith.mulf %543, %544 : vector<16x128xf32>
    %546 = arith.mulf %545, %323 : vector<16x128xf32>
    %547 = vector.broadcast %13 : vector<1x128xf32> to vector<16x128xf32>
    %548 = vector.broadcast %17 : vector<16x1xf32> to vector<16x128xf32>
    %549 = arith.subf %547, %548 : vector<16x128xf32>
    %550 = vector.broadcast %540 : vector<1x128xf32> to vector<16x128xf32>
    %551 = arith.mulf %549, %550 : vector<16x128xf32>
    %552 = arith.mulf %551, %346 : vector<16x128xf32>
    %553 = arith.addf %546, %552 : vector<16x128xf32>
    %554 = arith.subf %5, %2 : vector<1x128xf32>
    %cst_80 = arith.constant 9.99999997E-7 : f32
    %555 = vector.broadcast %cst_80 : f32 to vector<1x128xf32>
    %556 = arith.maximumf %554, %555 : vector<1x128xf32>
    %cst_81 = arith.constant 1.000000e+00 : f32
    %557 = vector.broadcast %cst_81 : f32 to vector<1x128xf32>
    %558 = arith.divf %557, %556 : vector<1x128xf32>
    %559 = arith.subf %6, %3 : vector<1x128xf32>
    %cst_82 = arith.constant 9.99999997E-7 : f32
    %560 = vector.broadcast %cst_82 : f32 to vector<1x128xf32>
    %561 = arith.maximumf %559, %560 : vector<1x128xf32>
    %cst_83 = arith.constant 1.000000e+00 : f32
    %562 = vector.broadcast %cst_83 : f32 to vector<1x128xf32>
    %563 = arith.divf %562, %561 : vector<1x128xf32>
    %564 = vector.broadcast %17 : vector<16x1xf32> to vector<16x128xf32>
    %565 = vector.broadcast %2 : vector<1x128xf32> to vector<16x128xf32>
    %566 = arith.subf %564, %565 : vector<16x128xf32>
    %567 = vector.broadcast %558 : vector<1x128xf32> to vector<16x128xf32>
    %568 = arith.mulf %566, %567 : vector<16x128xf32>
    %569 = arith.mulf %568, %369 : vector<16x128xf32>
    %570 = vector.broadcast %6 : vector<1x128xf32> to vector<16x128xf32>
    %571 = vector.broadcast %17 : vector<16x1xf32> to vector<16x128xf32>
    %572 = arith.subf %570, %571 : vector<16x128xf32>
    %573 = vector.broadcast %563 : vector<1x128xf32> to vector<16x128xf32>
    %574 = arith.mulf %572, %573 : vector<16x128xf32>
    %575 = arith.mulf %574, %392 : vector<16x128xf32>
    %576 = arith.addf %569, %575 : vector<16x128xf32>
    %577 = arith.subf %6, %3 : vector<1x128xf32>
    %cst_84 = arith.constant 9.99999997E-7 : f32
    %578 = vector.broadcast %cst_84 : f32 to vector<1x128xf32>
    %579 = arith.maximumf %577, %578 : vector<1x128xf32>
    %cst_85 = arith.constant 1.000000e+00 : f32
    %580 = vector.broadcast %cst_85 : f32 to vector<1x128xf32>
    %581 = arith.divf %580, %579 : vector<1x128xf32>
    %582 = arith.subf %7, %4 : vector<1x128xf32>
    %cst_86 = arith.constant 9.99999997E-7 : f32
    %583 = vector.broadcast %cst_86 : f32 to vector<1x128xf32>
    %584 = arith.maximumf %582, %583 : vector<1x128xf32>
    %cst_87 = arith.constant 1.000000e+00 : f32
    %585 = vector.broadcast %cst_87 : f32 to vector<1x128xf32>
    %586 = arith.divf %585, %584 : vector<1x128xf32>
    %587 = vector.broadcast %17 : vector<16x1xf32> to vector<16x128xf32>
    %588 = vector.broadcast %3 : vector<1x128xf32> to vector<16x128xf32>
    %589 = arith.subf %587, %588 : vector<16x128xf32>
    %590 = vector.broadcast %581 : vector<1x128xf32> to vector<16x128xf32>
    %591 = arith.mulf %589, %590 : vector<16x128xf32>
    %592 = arith.mulf %591, %392 : vector<16x128xf32>
    %593 = vector.broadcast %7 : vector<1x128xf32> to vector<16x128xf32>
    %594 = vector.broadcast %17 : vector<16x1xf32> to vector<16x128xf32>
    %595 = arith.subf %593, %594 : vector<16x128xf32>
    %596 = vector.broadcast %586 : vector<1x128xf32> to vector<16x128xf32>
    %597 = arith.mulf %595, %596 : vector<16x128xf32>
    %598 = arith.mulf %597, %415 : vector<16x128xf32>
    %599 = arith.addf %592, %598 : vector<16x128xf32>
    %600 = arith.subf %7, %4 : vector<1x128xf32>
    %cst_88 = arith.constant 9.99999997E-7 : f32
    %601 = vector.broadcast %cst_88 : f32 to vector<1x128xf32>
    %602 = arith.maximumf %600, %601 : vector<1x128xf32>
    %cst_89 = arith.constant 1.000000e+00 : f32
    %603 = vector.broadcast %cst_89 : f32 to vector<1x128xf32>
    %604 = arith.divf %603, %602 : vector<1x128xf32>
    %605 = arith.subf %8, %5 : vector<1x128xf32>
    %cst_90 = arith.constant 9.99999997E-7 : f32
    %606 = vector.broadcast %cst_90 : f32 to vector<1x128xf32>
    %607 = arith.maximumf %605, %606 : vector<1x128xf32>
    %cst_91 = arith.constant 1.000000e+00 : f32
    %608 = vector.broadcast %cst_91 : f32 to vector<1x128xf32>
    %609 = arith.divf %608, %607 : vector<1x128xf32>
    %610 = vector.broadcast %17 : vector<16x1xf32> to vector<16x128xf32>
    %611 = vector.broadcast %4 : vector<1x128xf32> to vector<16x128xf32>
    %612 = arith.subf %610, %611 : vector<16x128xf32>
    %613 = vector.broadcast %604 : vector<1x128xf32> to vector<16x128xf32>
    %614 = arith.mulf %612, %613 : vector<16x128xf32>
    %615 = arith.mulf %614, %415 : vector<16x128xf32>
    %616 = vector.broadcast %8 : vector<1x128xf32> to vector<16x128xf32>
    %617 = vector.broadcast %17 : vector<16x1xf32> to vector<16x128xf32>
    %618 = arith.subf %616, %617 : vector<16x128xf32>
    %619 = vector.broadcast %609 : vector<1x128xf32> to vector<16x128xf32>
    %620 = arith.mulf %618, %619 : vector<16x128xf32>
    %621 = arith.mulf %620, %438 : vector<16x128xf32>
    %622 = arith.addf %615, %621 : vector<16x128xf32>
    %623 = arith.subf %8, %5 : vector<1x128xf32>
    %cst_92 = arith.constant 9.99999997E-7 : f32
    %624 = vector.broadcast %cst_92 : f32 to vector<1x128xf32>
    %625 = arith.maximumf %623, %624 : vector<1x128xf32>
    %cst_93 = arith.constant 1.000000e+00 : f32
    %626 = vector.broadcast %cst_93 : f32 to vector<1x128xf32>
    %627 = arith.divf %626, %625 : vector<1x128xf32>
    %628 = arith.subf %9, %6 : vector<1x128xf32>
    %cst_94 = arith.constant 9.99999997E-7 : f32
    %629 = vector.broadcast %cst_94 : f32 to vector<1x128xf32>
    %630 = arith.maximumf %628, %629 : vector<1x128xf32>
    %cst_95 = arith.constant 1.000000e+00 : f32
    %631 = vector.broadcast %cst_95 : f32 to vector<1x128xf32>
    %632 = arith.divf %631, %630 : vector<1x128xf32>
    %633 = vector.broadcast %17 : vector<16x1xf32> to vector<16x128xf32>
    %634 = vector.broadcast %5 : vector<1x128xf32> to vector<16x128xf32>
    %635 = arith.subf %633, %634 : vector<16x128xf32>
    %636 = vector.broadcast %627 : vector<1x128xf32> to vector<16x128xf32>
    %637 = arith.mulf %635, %636 : vector<16x128xf32>
    %638 = arith.mulf %637, %438 : vector<16x128xf32>
    %639 = vector.broadcast %9 : vector<1x128xf32> to vector<16x128xf32>
    %640 = vector.broadcast %17 : vector<16x1xf32> to vector<16x128xf32>
    %641 = arith.subf %639, %640 : vector<16x128xf32>
    %642 = vector.broadcast %632 : vector<1x128xf32> to vector<16x128xf32>
    %643 = arith.mulf %641, %642 : vector<16x128xf32>
    %644 = arith.mulf %643, %461 : vector<16x128xf32>
    %645 = arith.addf %638, %644 : vector<16x128xf32>
    %646 = arith.subf %9, %6 : vector<1x128xf32>
    %cst_96 = arith.constant 9.99999997E-7 : f32
    %647 = vector.broadcast %cst_96 : f32 to vector<1x128xf32>
    %648 = arith.maximumf %646, %647 : vector<1x128xf32>
    %cst_97 = arith.constant 1.000000e+00 : f32
    %649 = vector.broadcast %cst_97 : f32 to vector<1x128xf32>
    %650 = arith.divf %649, %648 : vector<1x128xf32>
    %651 = arith.subf %10, %7 : vector<1x128xf32>
    %cst_98 = arith.constant 9.99999997E-7 : f32
    %652 = vector.broadcast %cst_98 : f32 to vector<1x128xf32>
    %653 = arith.maximumf %651, %652 : vector<1x128xf32>
    %cst_99 = arith.constant 1.000000e+00 : f32
    %654 = vector.broadcast %cst_99 : f32 to vector<1x128xf32>
    %655 = arith.divf %654, %653 : vector<1x128xf32>
    %656 = vector.broadcast %17 : vector<16x1xf32> to vector<16x128xf32>
    %657 = vector.broadcast %6 : vector<1x128xf32> to vector<16x128xf32>
    %658 = arith.subf %656, %657 : vector<16x128xf32>
    %659 = vector.broadcast %650 : vector<1x128xf32> to vector<16x128xf32>
    %660 = arith.mulf %658, %659 : vector<16x128xf32>
    %661 = arith.mulf %660, %461 : vector<16x128xf32>
    %662 = vector.broadcast %10 : vector<1x128xf32> to vector<16x128xf32>
    %663 = vector.broadcast %17 : vector<16x1xf32> to vector<16x128xf32>
    %664 = arith.subf %662, %663 : vector<16x128xf32>
    %665 = vector.broadcast %655 : vector<1x128xf32> to vector<16x128xf32>
    %666 = arith.mulf %664, %665 : vector<16x128xf32>
    %667 = arith.mulf %666, %484 : vector<16x128xf32>
    %668 = arith.addf %661, %667 : vector<16x128xf32>
    %669 = arith.subf %10, %7 : vector<1x128xf32>
    %cst_100 = arith.constant 9.99999997E-7 : f32
    %670 = vector.broadcast %cst_100 : f32 to vector<1x128xf32>
    %671 = arith.maximumf %669, %670 : vector<1x128xf32>
    %cst_101 = arith.constant 1.000000e+00 : f32
    %672 = vector.broadcast %cst_101 : f32 to vector<1x128xf32>
    %673 = arith.divf %672, %671 : vector<1x128xf32>
    %674 = arith.subf %11, %8 : vector<1x128xf32>
    %cst_102 = arith.constant 9.99999997E-7 : f32
    %675 = vector.broadcast %cst_102 : f32 to vector<1x128xf32>
    %676 = arith.maximumf %674, %675 : vector<1x128xf32>
    %cst_103 = arith.constant 1.000000e+00 : f32
    %677 = vector.broadcast %cst_103 : f32 to vector<1x128xf32>
    %678 = arith.divf %677, %676 : vector<1x128xf32>
    %679 = vector.broadcast %17 : vector<16x1xf32> to vector<16x128xf32>
    %680 = vector.broadcast %7 : vector<1x128xf32> to vector<16x128xf32>
    %681 = arith.subf %679, %680 : vector<16x128xf32>
    %682 = vector.broadcast %673 : vector<1x128xf32> to vector<16x128xf32>
    %683 = arith.mulf %681, %682 : vector<16x128xf32>
    %684 = arith.mulf %683, %484 : vector<16x128xf32>
    %685 = vector.broadcast %11 : vector<1x128xf32> to vector<16x128xf32>
    %686 = vector.broadcast %17 : vector<16x1xf32> to vector<16x128xf32>
    %687 = arith.subf %685, %686 : vector<16x128xf32>
    %688 = vector.broadcast %678 : vector<1x128xf32> to vector<16x128xf32>
    %689 = arith.mulf %687, %688 : vector<16x128xf32>
    %690 = arith.mulf %689, %507 : vector<16x128xf32>
    %691 = arith.addf %684, %690 : vector<16x128xf32>
    %692 = arith.subf %11, %8 : vector<1x128xf32>
    %cst_104 = arith.constant 9.99999997E-7 : f32
    %693 = vector.broadcast %cst_104 : f32 to vector<1x128xf32>
    %694 = arith.maximumf %692, %693 : vector<1x128xf32>
    %cst_105 = arith.constant 1.000000e+00 : f32
    %695 = vector.broadcast %cst_105 : f32 to vector<1x128xf32>
    %696 = arith.divf %695, %694 : vector<1x128xf32>
    %697 = arith.subf %12, %9 : vector<1x128xf32>
    %cst_106 = arith.constant 9.99999997E-7 : f32
    %698 = vector.broadcast %cst_106 : f32 to vector<1x128xf32>
    %699 = arith.maximumf %697, %698 : vector<1x128xf32>
    %cst_107 = arith.constant 1.000000e+00 : f32
    %700 = vector.broadcast %cst_107 : f32 to vector<1x128xf32>
    %701 = arith.divf %700, %699 : vector<1x128xf32>
    %702 = vector.broadcast %17 : vector<16x1xf32> to vector<16x128xf32>
    %703 = vector.broadcast %8 : vector<1x128xf32> to vector<16x128xf32>
    %704 = arith.subf %702, %703 : vector<16x128xf32>
    %705 = vector.broadcast %696 : vector<1x128xf32> to vector<16x128xf32>
    %706 = arith.mulf %704, %705 : vector<16x128xf32>
    %707 = arith.mulf %706, %507 : vector<16x128xf32>
    %708 = vector.broadcast %12 : vector<1x128xf32> to vector<16x128xf32>
    %709 = vector.broadcast %17 : vector<16x1xf32> to vector<16x128xf32>
    %710 = arith.subf %708, %709 : vector<16x128xf32>
    %711 = vector.broadcast %701 : vector<1x128xf32> to vector<16x128xf32>
    %712 = arith.mulf %710, %711 : vector<16x128xf32>
    %713 = arith.mulf %712, %530 : vector<16x128xf32>
    %714 = arith.addf %707, %713 : vector<16x128xf32>
    %715 = arith.subf %12, %9 : vector<1x128xf32>
    %cst_108 = arith.constant 9.99999997E-7 : f32
    %716 = vector.broadcast %cst_108 : f32 to vector<1x128xf32>
    %717 = arith.maximumf %715, %716 : vector<1x128xf32>
    %cst_109 = arith.constant 1.000000e+00 : f32
    %718 = vector.broadcast %cst_109 : f32 to vector<1x128xf32>
    %719 = arith.divf %718, %717 : vector<1x128xf32>
    %720 = arith.subf %13, %10 : vector<1x128xf32>
    %cst_110 = arith.constant 9.99999997E-7 : f32
    %721 = vector.broadcast %cst_110 : f32 to vector<1x128xf32>
    %722 = arith.maximumf %720, %721 : vector<1x128xf32>
    %cst_111 = arith.constant 1.000000e+00 : f32
    %723 = vector.broadcast %cst_111 : f32 to vector<1x128xf32>
    %724 = arith.divf %723, %722 : vector<1x128xf32>
    %725 = vector.broadcast %17 : vector<16x1xf32> to vector<16x128xf32>
    %726 = vector.broadcast %9 : vector<1x128xf32> to vector<16x128xf32>
    %727 = arith.subf %725, %726 : vector<16x128xf32>
    %728 = vector.broadcast %719 : vector<1x128xf32> to vector<16x128xf32>
    %729 = arith.mulf %727, %728 : vector<16x128xf32>
    %730 = arith.mulf %729, %530 : vector<16x128xf32>
    %731 = vector.broadcast %13 : vector<1x128xf32> to vector<16x128xf32>
    %732 = vector.broadcast %17 : vector<16x1xf32> to vector<16x128xf32>
    %733 = arith.subf %731, %732 : vector<16x128xf32>
    %734 = vector.broadcast %724 : vector<1x128xf32> to vector<16x128xf32>
    %735 = arith.mulf %733, %734 : vector<16x128xf32>
    %736 = arith.mulf %735, %553 : vector<16x128xf32>
    %737 = arith.addf %730, %736 : vector<16x128xf32>
    %738 = arith.mulf %576, %576 : vector<16x128xf32>
    %cst_112 = arith.constant dense<0.000000e+00> : vector<128xf32>
    %739 = vector.multi_reduction <add>, %738, %cst_112 [0] : vector<16x128xf32> to vector<128xf32>
    %740 = vector.shape_cast %739 : vector<128xf32> to vector<1x128xf32>
    %741 = arith.mulf %576, %599 : vector<16x128xf32>
    %cst_113 = arith.constant dense<0.000000e+00> : vector<128xf32>
    %742 = vector.multi_reduction <add>, %741, %cst_113 [0] : vector<16x128xf32> to vector<128xf32>
    %743 = vector.shape_cast %742 : vector<128xf32> to vector<1x128xf32>
    %744 = arith.mulf %576, %622 : vector<16x128xf32>
    %cst_114 = arith.constant dense<0.000000e+00> : vector<128xf32>
    %745 = vector.multi_reduction <add>, %744, %cst_114 [0] : vector<16x128xf32> to vector<128xf32>
    %746 = vector.shape_cast %745 : vector<128xf32> to vector<1x128xf32>
    %747 = arith.mulf %576, %645 : vector<16x128xf32>
    %cst_115 = arith.constant dense<0.000000e+00> : vector<128xf32>
    %748 = vector.multi_reduction <add>, %747, %cst_115 [0] : vector<16x128xf32> to vector<128xf32>
    %749 = vector.shape_cast %748 : vector<128xf32> to vector<1x128xf32>
    %750 = arith.mulf %576, %668 : vector<16x128xf32>
    %cst_116 = arith.constant dense<0.000000e+00> : vector<128xf32>
    %751 = vector.multi_reduction <add>, %750, %cst_116 [0] : vector<16x128xf32> to vector<128xf32>
    %752 = vector.shape_cast %751 : vector<128xf32> to vector<1x128xf32>
    %753 = arith.mulf %576, %691 : vector<16x128xf32>
    %cst_117 = arith.constant dense<0.000000e+00> : vector<128xf32>
    %754 = vector.multi_reduction <add>, %753, %cst_117 [0] : vector<16x128xf32> to vector<128xf32>
    %755 = vector.shape_cast %754 : vector<128xf32> to vector<1x128xf32>
    %756 = arith.mulf %576, %714 : vector<16x128xf32>
    %cst_118 = arith.constant dense<0.000000e+00> : vector<128xf32>
    %757 = vector.multi_reduction <add>, %756, %cst_118 [0] : vector<16x128xf32> to vector<128xf32>
    %758 = vector.shape_cast %757 : vector<128xf32> to vector<1x128xf32>
    %759 = arith.mulf %576, %737 : vector<16x128xf32>
    %cst_119 = arith.constant dense<0.000000e+00> : vector<128xf32>
    %760 = vector.multi_reduction <add>, %759, %cst_119 [0] : vector<16x128xf32> to vector<128xf32>
    %761 = vector.shape_cast %760 : vector<128xf32> to vector<1x128xf32>
    %762 = arith.mulf %599, %599 : vector<16x128xf32>
    %cst_120 = arith.constant dense<0.000000e+00> : vector<128xf32>
    %763 = vector.multi_reduction <add>, %762, %cst_120 [0] : vector<16x128xf32> to vector<128xf32>
    %764 = vector.shape_cast %763 : vector<128xf32> to vector<1x128xf32>
    %765 = arith.mulf %599, %622 : vector<16x128xf32>
    %cst_121 = arith.constant dense<0.000000e+00> : vector<128xf32>
    %766 = vector.multi_reduction <add>, %765, %cst_121 [0] : vector<16x128xf32> to vector<128xf32>
    %767 = vector.shape_cast %766 : vector<128xf32> to vector<1x128xf32>
    %768 = arith.mulf %599, %645 : vector<16x128xf32>
    %cst_122 = arith.constant dense<0.000000e+00> : vector<128xf32>
    %769 = vector.multi_reduction <add>, %768, %cst_122 [0] : vector<16x128xf32> to vector<128xf32>
    %770 = vector.shape_cast %769 : vector<128xf32> to vector<1x128xf32>
    %771 = arith.mulf %599, %668 : vector<16x128xf32>
    %cst_123 = arith.constant dense<0.000000e+00> : vector<128xf32>
    %772 = vector.multi_reduction <add>, %771, %cst_123 [0] : vector<16x128xf32> to vector<128xf32>
    %773 = vector.shape_cast %772 : vector<128xf32> to vector<1x128xf32>
    %774 = arith.mulf %599, %691 : vector<16x128xf32>
    %cst_124 = arith.constant dense<0.000000e+00> : vector<128xf32>
    %775 = vector.multi_reduction <add>, %774, %cst_124 [0] : vector<16x128xf32> to vector<128xf32>
    %776 = vector.shape_cast %775 : vector<128xf32> to vector<1x128xf32>
    %777 = arith.mulf %599, %714 : vector<16x128xf32>
    %cst_125 = arith.constant dense<0.000000e+00> : vector<128xf32>
    %778 = vector.multi_reduction <add>, %777, %cst_125 [0] : vector<16x128xf32> to vector<128xf32>
    %779 = vector.shape_cast %778 : vector<128xf32> to vector<1x128xf32>
    %780 = arith.mulf %599, %737 : vector<16x128xf32>
    %cst_126 = arith.constant dense<0.000000e+00> : vector<128xf32>
    %781 = vector.multi_reduction <add>, %780, %cst_126 [0] : vector<16x128xf32> to vector<128xf32>
    %782 = vector.shape_cast %781 : vector<128xf32> to vector<1x128xf32>
    %783 = arith.mulf %622, %622 : vector<16x128xf32>
    %cst_127 = arith.constant dense<0.000000e+00> : vector<128xf32>
    %784 = vector.multi_reduction <add>, %783, %cst_127 [0] : vector<16x128xf32> to vector<128xf32>
    %785 = vector.shape_cast %784 : vector<128xf32> to vector<1x128xf32>
    %786 = arith.mulf %622, %645 : vector<16x128xf32>
    %cst_128 = arith.constant dense<0.000000e+00> : vector<128xf32>
    %787 = vector.multi_reduction <add>, %786, %cst_128 [0] : vector<16x128xf32> to vector<128xf32>
    %788 = vector.shape_cast %787 : vector<128xf32> to vector<1x128xf32>
    %789 = arith.mulf %622, %668 : vector<16x128xf32>
    %cst_129 = arith.constant dense<0.000000e+00> : vector<128xf32>
    %790 = vector.multi_reduction <add>, %789, %cst_129 [0] : vector<16x128xf32> to vector<128xf32>
    %791 = vector.shape_cast %790 : vector<128xf32> to vector<1x128xf32>
    %792 = arith.mulf %622, %691 : vector<16x128xf32>
    %cst_130 = arith.constant dense<0.000000e+00> : vector<128xf32>
    %793 = vector.multi_reduction <add>, %792, %cst_130 [0] : vector<16x128xf32> to vector<128xf32>
    %794 = vector.shape_cast %793 : vector<128xf32> to vector<1x128xf32>
    %795 = arith.mulf %622, %714 : vector<16x128xf32>
    %cst_131 = arith.constant dense<0.000000e+00> : vector<128xf32>
    %796 = vector.multi_reduction <add>, %795, %cst_131 [0] : vector<16x128xf32> to vector<128xf32>
    %797 = vector.shape_cast %796 : vector<128xf32> to vector<1x128xf32>
    %798 = arith.mulf %622, %737 : vector<16x128xf32>
    %cst_132 = arith.constant dense<0.000000e+00> : vector<128xf32>
    %799 = vector.multi_reduction <add>, %798, %cst_132 [0] : vector<16x128xf32> to vector<128xf32>
    %800 = vector.shape_cast %799 : vector<128xf32> to vector<1x128xf32>
    %801 = arith.mulf %645, %645 : vector<16x128xf32>
    %cst_133 = arith.constant dense<0.000000e+00> : vector<128xf32>
    %802 = vector.multi_reduction <add>, %801, %cst_133 [0] : vector<16x128xf32> to vector<128xf32>
    %803 = vector.shape_cast %802 : vector<128xf32> to vector<1x128xf32>
    %804 = arith.mulf %645, %668 : vector<16x128xf32>
    %cst_134 = arith.constant dense<0.000000e+00> : vector<128xf32>
    %805 = vector.multi_reduction <add>, %804, %cst_134 [0] : vector<16x128xf32> to vector<128xf32>
    %806 = vector.shape_cast %805 : vector<128xf32> to vector<1x128xf32>
    %807 = arith.mulf %645, %691 : vector<16x128xf32>
    %cst_135 = arith.constant dense<0.000000e+00> : vector<128xf32>
    %808 = vector.multi_reduction <add>, %807, %cst_135 [0] : vector<16x128xf32> to vector<128xf32>
    %809 = vector.shape_cast %808 : vector<128xf32> to vector<1x128xf32>
    %810 = arith.mulf %645, %714 : vector<16x128xf32>
    %cst_136 = arith.constant dense<0.000000e+00> : vector<128xf32>
    %811 = vector.multi_reduction <add>, %810, %cst_136 [0] : vector<16x128xf32> to vector<128xf32>
    %812 = vector.shape_cast %811 : vector<128xf32> to vector<1x128xf32>
    %813 = arith.mulf %645, %737 : vector<16x128xf32>
    %cst_137 = arith.constant dense<0.000000e+00> : vector<128xf32>
    %814 = vector.multi_reduction <add>, %813, %cst_137 [0] : vector<16x128xf32> to vector<128xf32>
    %815 = vector.shape_cast %814 : vector<128xf32> to vector<1x128xf32>
    %816 = arith.mulf %668, %668 : vector<16x128xf32>
    %cst_138 = arith.constant dense<0.000000e+00> : vector<128xf32>
    %817 = vector.multi_reduction <add>, %816, %cst_138 [0] : vector<16x128xf32> to vector<128xf32>
    %818 = vector.shape_cast %817 : vector<128xf32> to vector<1x128xf32>
    %819 = arith.mulf %668, %691 : vector<16x128xf32>
    %cst_139 = arith.constant dense<0.000000e+00> : vector<128xf32>
    %820 = vector.multi_reduction <add>, %819, %cst_139 [0] : vector<16x128xf32> to vector<128xf32>
    %821 = vector.shape_cast %820 : vector<128xf32> to vector<1x128xf32>
    %822 = arith.mulf %668, %714 : vector<16x128xf32>
    %cst_140 = arith.constant dense<0.000000e+00> : vector<128xf32>
    %823 = vector.multi_reduction <add>, %822, %cst_140 [0] : vector<16x128xf32> to vector<128xf32>
    %824 = vector.shape_cast %823 : vector<128xf32> to vector<1x128xf32>
    %825 = arith.mulf %668, %737 : vector<16x128xf32>
    %cst_141 = arith.constant dense<0.000000e+00> : vector<128xf32>
    %826 = vector.multi_reduction <add>, %825, %cst_141 [0] : vector<16x128xf32> to vector<128xf32>
    %827 = vector.shape_cast %826 : vector<128xf32> to vector<1x128xf32>
    %828 = arith.mulf %691, %691 : vector<16x128xf32>
    %cst_142 = arith.constant dense<0.000000e+00> : vector<128xf32>
    %829 = vector.multi_reduction <add>, %828, %cst_142 [0] : vector<16x128xf32> to vector<128xf32>
    %830 = vector.shape_cast %829 : vector<128xf32> to vector<1x128xf32>
    %831 = arith.mulf %691, %714 : vector<16x128xf32>
    %cst_143 = arith.constant dense<0.000000e+00> : vector<128xf32>
    %832 = vector.multi_reduction <add>, %831, %cst_143 [0] : vector<16x128xf32> to vector<128xf32>
    %833 = vector.shape_cast %832 : vector<128xf32> to vector<1x128xf32>
    %834 = arith.mulf %691, %737 : vector<16x128xf32>
    %cst_144 = arith.constant dense<0.000000e+00> : vector<128xf32>
    %835 = vector.multi_reduction <add>, %834, %cst_144 [0] : vector<16x128xf32> to vector<128xf32>
    %836 = vector.shape_cast %835 : vector<128xf32> to vector<1x128xf32>
    %837 = arith.mulf %714, %714 : vector<16x128xf32>
    %cst_145 = arith.constant dense<0.000000e+00> : vector<128xf32>
    %838 = vector.multi_reduction <add>, %837, %cst_145 [0] : vector<16x128xf32> to vector<128xf32>
    %839 = vector.shape_cast %838 : vector<128xf32> to vector<1x128xf32>
    %840 = arith.mulf %714, %737 : vector<16x128xf32>
    %cst_146 = arith.constant dense<0.000000e+00> : vector<128xf32>
    %841 = vector.multi_reduction <add>, %840, %cst_146 [0] : vector<16x128xf32> to vector<128xf32>
    %842 = vector.shape_cast %841 : vector<128xf32> to vector<1x128xf32>
    %843 = arith.mulf %737, %737 : vector<16x128xf32>
    %cst_147 = arith.constant dense<0.000000e+00> : vector<128xf32>
    %844 = vector.multi_reduction <add>, %843, %cst_147 [0] : vector<16x128xf32> to vector<128xf32>
    %845 = vector.shape_cast %844 : vector<128xf32> to vector<1x128xf32>
    %cst_148 = arith.constant 5.000000e-02 : f32
    %846 = vector.broadcast %cst_148 : f32 to vector<1x128xf32>
    %847 = arith.addf %740, %846 : vector<1x128xf32>
    %848 = tpu.concatenate %847, %743, %746, %749, %752, %755, %758, %761 in 0 : vector<1x128xf32>, vector<1x128xf32>, vector<1x128xf32>, vector<1x128xf32>, vector<1x128xf32>, vector<1x128xf32>, vector<1x128xf32>, vector<1x128xf32> -> vector<8x128xf32>
    %849 = vector.extract_strided_slice %1 {offsets = [0, 0, 0], sizes = [1, 16, 128], strides = [1, 1, 1]} : vector<3x16x128xf32> to vector<1x16x128xf32>
    %850 = vector.shape_cast %849 : vector<1x16x128xf32> to vector<16x128xf32>
    %851 = arith.mulf %850, %576 : vector<16x128xf32>
    %cst_149 = arith.constant dense<0.000000e+00> : vector<128xf32>
    %852 = vector.multi_reduction <add>, %851, %cst_149 [0] : vector<16x128xf32> to vector<128xf32>
    %853 = vector.shape_cast %852 : vector<128xf32> to vector<1x128xf32>
    %854 = vector.extract_strided_slice %1 {offsets = [1, 0, 0], sizes = [1, 16, 128], strides = [1, 1, 1]} : vector<3x16x128xf32> to vector<1x16x128xf32>
    %855 = vector.shape_cast %854 : vector<1x16x128xf32> to vector<16x128xf32>
    %856 = arith.mulf %855, %576 : vector<16x128xf32>
    %cst_150 = arith.constant dense<0.000000e+00> : vector<128xf32>
    %857 = vector.multi_reduction <add>, %856, %cst_150 [0] : vector<16x128xf32> to vector<128xf32>
    %858 = vector.shape_cast %857 : vector<128xf32> to vector<1x128xf32>
    %859 = vector.extract_strided_slice %1 {offsets = [2, 0, 0], sizes = [1, 16, 128], strides = [1, 1, 1]} : vector<3x16x128xf32> to vector<1x16x128xf32>
    %860 = vector.shape_cast %859 : vector<1x16x128xf32> to vector<16x128xf32>
    %861 = arith.mulf %860, %576 : vector<16x128xf32>
    %cst_151 = arith.constant dense<0.000000e+00> : vector<128xf32>
    %862 = vector.multi_reduction <add>, %861, %cst_151 [0] : vector<16x128xf32> to vector<128xf32>
    %863 = vector.shape_cast %862 : vector<128xf32> to vector<1x128xf32>
    %864 = tpu.concatenate %853, %858, %863 in 0 : vector<1x128xf32>, vector<1x128xf32>, vector<1x128xf32> -> vector<3x128xf32>
    %cst_152 = arith.constant 5.000000e-02 : f32
    %865 = vector.broadcast %cst_152 : f32 to vector<1x128xf32>
    %866 = arith.addf %764, %865 : vector<1x128xf32>
    %867 = tpu.concatenate %743, %866, %767, %770, %773, %776, %779, %782 in 0 : vector<1x128xf32>, vector<1x128xf32>, vector<1x128xf32>, vector<1x128xf32>, vector<1x128xf32>, vector<1x128xf32>, vector<1x128xf32>, vector<1x128xf32> -> vector<8x128xf32>
    %868 = vector.extract_strided_slice %1 {offsets = [0, 0, 0], sizes = [1, 16, 128], strides = [1, 1, 1]} : vector<3x16x128xf32> to vector<1x16x128xf32>
    %869 = vector.shape_cast %868 : vector<1x16x128xf32> to vector<16x128xf32>
    %870 = arith.mulf %869, %599 : vector<16x128xf32>
    %cst_153 = arith.constant dense<0.000000e+00> : vector<128xf32>
    %871 = vector.multi_reduction <add>, %870, %cst_153 [0] : vector<16x128xf32> to vector<128xf32>
    %872 = vector.shape_cast %871 : vector<128xf32> to vector<1x128xf32>
    %873 = vector.extract_strided_slice %1 {offsets = [1, 0, 0], sizes = [1, 16, 128], strides = [1, 1, 1]} : vector<3x16x128xf32> to vector<1x16x128xf32>
    %874 = vector.shape_cast %873 : vector<1x16x128xf32> to vector<16x128xf32>
    %875 = arith.mulf %874, %599 : vector<16x128xf32>
    %cst_154 = arith.constant dense<0.000000e+00> : vector<128xf32>
    %876 = vector.multi_reduction <add>, %875, %cst_154 [0] : vector<16x128xf32> to vector<128xf32>
    %877 = vector.shape_cast %876 : vector<128xf32> to vector<1x128xf32>
    %878 = vector.extract_strided_slice %1 {offsets = [2, 0, 0], sizes = [1, 16, 128], strides = [1, 1, 1]} : vector<3x16x128xf32> to vector<1x16x128xf32>
    %879 = vector.shape_cast %878 : vector<1x16x128xf32> to vector<16x128xf32>
    %880 = arith.mulf %879, %599 : vector<16x128xf32>
    %cst_155 = arith.constant dense<0.000000e+00> : vector<128xf32>
    %881 = vector.multi_reduction <add>, %880, %cst_155 [0] : vector<16x128xf32> to vector<128xf32>
    %882 = vector.shape_cast %881 : vector<128xf32> to vector<1x128xf32>
    %883 = tpu.concatenate %872, %877, %882 in 0 : vector<1x128xf32>, vector<1x128xf32>, vector<1x128xf32> -> vector<3x128xf32>
    %cst_156 = arith.constant 5.000000e-02 : f32
    %884 = vector.broadcast %cst_156 : f32 to vector<1x128xf32>
    %885 = arith.addf %785, %884 : vector<1x128xf32>
    %886 = tpu.concatenate %746, %767, %885, %788, %791, %794, %797, %800 in 0 : vector<1x128xf32>, vector<1x128xf32>, vector<1x128xf32>, vector<1x128xf32>, vector<1x128xf32>, vector<1x128xf32>, vector<1x128xf32>, vector<1x128xf32> -> vector<8x128xf32>
    %887 = vector.extract_strided_slice %1 {offsets = [0, 0, 0], sizes = [1, 16, 128], strides = [1, 1, 1]} : vector<3x16x128xf32> to vector<1x16x128xf32>
    %888 = vector.shape_cast %887 : vector<1x16x128xf32> to vector<16x128xf32>
    %889 = arith.mulf %888, %622 : vector<16x128xf32>
    %cst_157 = arith.constant dense<0.000000e+00> : vector<128xf32>
    %890 = vector.multi_reduction <add>, %889, %cst_157 [0] : vector<16x128xf32> to vector<128xf32>
    %891 = vector.shape_cast %890 : vector<128xf32> to vector<1x128xf32>
    %892 = vector.extract_strided_slice %1 {offsets = [1, 0, 0], sizes = [1, 16, 128], strides = [1, 1, 1]} : vector<3x16x128xf32> to vector<1x16x128xf32>
    %893 = vector.shape_cast %892 : vector<1x16x128xf32> to vector<16x128xf32>
    %894 = arith.mulf %893, %622 : vector<16x128xf32>
    %cst_158 = arith.constant dense<0.000000e+00> : vector<128xf32>
    %895 = vector.multi_reduction <add>, %894, %cst_158 [0] : vector<16x128xf32> to vector<128xf32>
    %896 = vector.shape_cast %895 : vector<128xf32> to vector<1x128xf32>
    %897 = vector.extract_strided_slice %1 {offsets = [2, 0, 0], sizes = [1, 16, 128], strides = [1, 1, 1]} : vector<3x16x128xf32> to vector<1x16x128xf32>
    %898 = vector.shape_cast %897 : vector<1x16x128xf32> to vector<16x128xf32>
    %899 = arith.mulf %898, %622 : vector<16x128xf32>
    %cst_159 = arith.constant dense<0.000000e+00> : vector<128xf32>
    %900 = vector.multi_reduction <add>, %899, %cst_159 [0] : vector<16x128xf32> to vector<128xf32>
    %901 = vector.shape_cast %900 : vector<128xf32> to vector<1x128xf32>
    %902 = tpu.concatenate %891, %896, %901 in 0 : vector<1x128xf32>, vector<1x128xf32>, vector<1x128xf32> -> vector<3x128xf32>
    %cst_160 = arith.constant 5.000000e-02 : f32
    %903 = vector.broadcast %cst_160 : f32 to vector<1x128xf32>
    %904 = arith.addf %803, %903 : vector<1x128xf32>
    %905 = tpu.concatenate %749, %770, %788, %904, %806, %809, %812, %815 in 0 : vector<1x128xf32>, vector<1x128xf32>, vector<1x128xf32>, vector<1x128xf32>, vector<1x128xf32>, vector<1x128xf32>, vector<1x128xf32>, vector<1x128xf32> -> vector<8x128xf32>
    %906 = vector.extract_strided_slice %1 {offsets = [0, 0, 0], sizes = [1, 16, 128], strides = [1, 1, 1]} : vector<3x16x128xf32> to vector<1x16x128xf32>
    %907 = vector.shape_cast %906 : vector<1x16x128xf32> to vector<16x128xf32>
    %908 = arith.mulf %907, %645 : vector<16x128xf32>
    %cst_161 = arith.constant dense<0.000000e+00> : vector<128xf32>
    %909 = vector.multi_reduction <add>, %908, %cst_161 [0] : vector<16x128xf32> to vector<128xf32>
    %910 = vector.shape_cast %909 : vector<128xf32> to vector<1x128xf32>
    %911 = vector.extract_strided_slice %1 {offsets = [1, 0, 0], sizes = [1, 16, 128], strides = [1, 1, 1]} : vector<3x16x128xf32> to vector<1x16x128xf32>
    %912 = vector.shape_cast %911 : vector<1x16x128xf32> to vector<16x128xf32>
    %913 = arith.mulf %912, %645 : vector<16x128xf32>
    %cst_162 = arith.constant dense<0.000000e+00> : vector<128xf32>
    %914 = vector.multi_reduction <add>, %913, %cst_162 [0] : vector<16x128xf32> to vector<128xf32>
    %915 = vector.shape_cast %914 : vector<128xf32> to vector<1x128xf32>
    %916 = vector.extract_strided_slice %1 {offsets = [2, 0, 0], sizes = [1, 16, 128], strides = [1, 1, 1]} : vector<3x16x128xf32> to vector<1x16x128xf32>
    %917 = vector.shape_cast %916 : vector<1x16x128xf32> to vector<16x128xf32>
    %918 = arith.mulf %917, %645 : vector<16x128xf32>
    %cst_163 = arith.constant dense<0.000000e+00> : vector<128xf32>
    %919 = vector.multi_reduction <add>, %918, %cst_163 [0] : vector<16x128xf32> to vector<128xf32>
    %920 = vector.shape_cast %919 : vector<128xf32> to vector<1x128xf32>
    %921 = tpu.concatenate %910, %915, %920 in 0 : vector<1x128xf32>, vector<1x128xf32>, vector<1x128xf32> -> vector<3x128xf32>
    %cst_164 = arith.constant 5.000000e-02 : f32
    %922 = vector.broadcast %cst_164 : f32 to vector<1x128xf32>
    %923 = arith.addf %818, %922 : vector<1x128xf32>
    %924 = tpu.concatenate %752, %773, %791, %806, %923, %821, %824, %827 in 0 : vector<1x128xf32>, vector<1x128xf32>, vector<1x128xf32>, vector<1x128xf32>, vector<1x128xf32>, vector<1x128xf32>, vector<1x128xf32>, vector<1x128xf32> -> vector<8x128xf32>
    %925 = vector.extract_strided_slice %1 {offsets = [0, 0, 0], sizes = [1, 16, 128], strides = [1, 1, 1]} : vector<3x16x128xf32> to vector<1x16x128xf32>
    %926 = vector.shape_cast %925 : vector<1x16x128xf32> to vector<16x128xf32>
    %927 = arith.mulf %926, %668 : vector<16x128xf32>
    %cst_165 = arith.constant dense<0.000000e+00> : vector<128xf32>
    %928 = vector.multi_reduction <add>, %927, %cst_165 [0] : vector<16x128xf32> to vector<128xf32>
    %929 = vector.shape_cast %928 : vector<128xf32> to vector<1x128xf32>
    %930 = vector.extract_strided_slice %1 {offsets = [1, 0, 0], sizes = [1, 16, 128], strides = [1, 1, 1]} : vector<3x16x128xf32> to vector<1x16x128xf32>
    %931 = vector.shape_cast %930 : vector<1x16x128xf32> to vector<16x128xf32>
    %932 = arith.mulf %931, %668 : vector<16x128xf32>
    %cst_166 = arith.constant dense<0.000000e+00> : vector<128xf32>
    %933 = vector.multi_reduction <add>, %932, %cst_166 [0] : vector<16x128xf32> to vector<128xf32>
    %934 = vector.shape_cast %933 : vector<128xf32> to vector<1x128xf32>
    %935 = vector.extract_strided_slice %1 {offsets = [2, 0, 0], sizes = [1, 16, 128], strides = [1, 1, 1]} : vector<3x16x128xf32> to vector<1x16x128xf32>
    %936 = vector.shape_cast %935 : vector<1x16x128xf32> to vector<16x128xf32>
    %937 = arith.mulf %936, %668 : vector<16x128xf32>
    %cst_167 = arith.constant dense<0.000000e+00> : vector<128xf32>
    %938 = vector.multi_reduction <add>, %937, %cst_167 [0] : vector<16x128xf32> to vector<128xf32>
    %939 = vector.shape_cast %938 : vector<128xf32> to vector<1x128xf32>
    %940 = tpu.concatenate %929, %934, %939 in 0 : vector<1x128xf32>, vector<1x128xf32>, vector<1x128xf32> -> vector<3x128xf32>
    %cst_168 = arith.constant 5.000000e-02 : f32
    %941 = vector.broadcast %cst_168 : f32 to vector<1x128xf32>
    %942 = arith.addf %830, %941 : vector<1x128xf32>
    %943 = tpu.concatenate %755, %776, %794, %809, %821, %942, %833, %836 in 0 : vector<1x128xf32>, vector<1x128xf32>, vector<1x128xf32>, vector<1x128xf32>, vector<1x128xf32>, vector<1x128xf32>, vector<1x128xf32>, vector<1x128xf32> -> vector<8x128xf32>
    %944 = vector.extract_strided_slice %1 {offsets = [0, 0, 0], sizes = [1, 16, 128], strides = [1, 1, 1]} : vector<3x16x128xf32> to vector<1x16x128xf32>
    %945 = vector.shape_cast %944 : vector<1x16x128xf32> to vector<16x128xf32>
    %946 = arith.mulf %945, %691 : vector<16x128xf32>
    %cst_169 = arith.constant dense<0.000000e+00> : vector<128xf32>
    %947 = vector.multi_reduction <add>, %946, %cst_169 [0] : vector<16x128xf32> to vector<128xf32>
    %948 = vector.shape_cast %947 : vector<128xf32> to vector<1x128xf32>
    %949 = vector.extract_strided_slice %1 {offsets = [1, 0, 0], sizes = [1, 16, 128], strides = [1, 1, 1]} : vector<3x16x128xf32> to vector<1x16x128xf32>
    %950 = vector.shape_cast %949 : vector<1x16x128xf32> to vector<16x128xf32>
    %951 = arith.mulf %950, %691 : vector<16x128xf32>
    %cst_170 = arith.constant dense<0.000000e+00> : vector<128xf32>
    %952 = vector.multi_reduction <add>, %951, %cst_170 [0] : vector<16x128xf32> to vector<128xf32>
    %953 = vector.shape_cast %952 : vector<128xf32> to vector<1x128xf32>
    %954 = vector.extract_strided_slice %1 {offsets = [2, 0, 0], sizes = [1, 16, 128], strides = [1, 1, 1]} : vector<3x16x128xf32> to vector<1x16x128xf32>
    %955 = vector.shape_cast %954 : vector<1x16x128xf32> to vector<16x128xf32>
    %956 = arith.mulf %955, %691 : vector<16x128xf32>
    %cst_171 = arith.constant dense<0.000000e+00> : vector<128xf32>
    %957 = vector.multi_reduction <add>, %956, %cst_171 [0] : vector<16x128xf32> to vector<128xf32>
    %958 = vector.shape_cast %957 : vector<128xf32> to vector<1x128xf32>
    %959 = tpu.concatenate %948, %953, %958 in 0 : vector<1x128xf32>, vector<1x128xf32>, vector<1x128xf32> -> vector<3x128xf32>
    %cst_172 = arith.constant 5.000000e-02 : f32
    %960 = vector.broadcast %cst_172 : f32 to vector<1x128xf32>
    %961 = arith.addf %839, %960 : vector<1x128xf32>
    %962 = tpu.concatenate %758, %779, %797, %812, %824, %833, %961, %842 in 0 : vector<1x128xf32>, vector<1x128xf32>, vector<1x128xf32>, vector<1x128xf32>, vector<1x128xf32>, vector<1x128xf32>, vector<1x128xf32>, vector<1x128xf32> -> vector<8x128xf32>
    %963 = vector.extract_strided_slice %1 {offsets = [0, 0, 0], sizes = [1, 16, 128], strides = [1, 1, 1]} : vector<3x16x128xf32> to vector<1x16x128xf32>
    %964 = vector.shape_cast %963 : vector<1x16x128xf32> to vector<16x128xf32>
    %965 = arith.mulf %964, %714 : vector<16x128xf32>
    %cst_173 = arith.constant dense<0.000000e+00> : vector<128xf32>
    %966 = vector.multi_reduction <add>, %965, %cst_173 [0] : vector<16x128xf32> to vector<128xf32>
    %967 = vector.shape_cast %966 : vector<128xf32> to vector<1x128xf32>
    %968 = vector.extract_strided_slice %1 {offsets = [1, 0, 0], sizes = [1, 16, 128], strides = [1, 1, 1]} : vector<3x16x128xf32> to vector<1x16x128xf32>
    %969 = vector.shape_cast %968 : vector<1x16x128xf32> to vector<16x128xf32>
    %970 = arith.mulf %969, %714 : vector<16x128xf32>
    %cst_174 = arith.constant dense<0.000000e+00> : vector<128xf32>
    %971 = vector.multi_reduction <add>, %970, %cst_174 [0] : vector<16x128xf32> to vector<128xf32>
    %972 = vector.shape_cast %971 : vector<128xf32> to vector<1x128xf32>
    %973 = vector.extract_strided_slice %1 {offsets = [2, 0, 0], sizes = [1, 16, 128], strides = [1, 1, 1]} : vector<3x16x128xf32> to vector<1x16x128xf32>
    %974 = vector.shape_cast %973 : vector<1x16x128xf32> to vector<16x128xf32>
    %975 = arith.mulf %974, %714 : vector<16x128xf32>
    %cst_175 = arith.constant dense<0.000000e+00> : vector<128xf32>
    %976 = vector.multi_reduction <add>, %975, %cst_175 [0] : vector<16x128xf32> to vector<128xf32>
    %977 = vector.shape_cast %976 : vector<128xf32> to vector<1x128xf32>
    %978 = tpu.concatenate %967, %972, %977 in 0 : vector<1x128xf32>, vector<1x128xf32>, vector<1x128xf32> -> vector<3x128xf32>
    %cst_176 = arith.constant 5.000000e-02 : f32
    %979 = vector.broadcast %cst_176 : f32 to vector<1x128xf32>
    %980 = arith.addf %845, %979 : vector<1x128xf32>
    %981 = tpu.concatenate %761, %782, %800, %815, %827, %836, %842, %980 in 0 : vector<1x128xf32>, vector<1x128xf32>, vector<1x128xf32>, vector<1x128xf32>, vector<1x128xf32>, vector<1x128xf32>, vector<1x128xf32>, vector<1x128xf32> -> vector<8x128xf32>
    %982 = vector.extract_strided_slice %1 {offsets = [0, 0, 0], sizes = [1, 16, 128], strides = [1, 1, 1]} : vector<3x16x128xf32> to vector<1x16x128xf32>
    %983 = vector.shape_cast %982 : vector<1x16x128xf32> to vector<16x128xf32>
    %984 = arith.mulf %983, %737 : vector<16x128xf32>
    %cst_177 = arith.constant dense<0.000000e+00> : vector<128xf32>
    %985 = vector.multi_reduction <add>, %984, %cst_177 [0] : vector<16x128xf32> to vector<128xf32>
    %986 = vector.shape_cast %985 : vector<128xf32> to vector<1x128xf32>
    %987 = vector.extract_strided_slice %1 {offsets = [1, 0, 0], sizes = [1, 16, 128], strides = [1, 1, 1]} : vector<3x16x128xf32> to vector<1x16x128xf32>
    %988 = vector.shape_cast %987 : vector<1x16x128xf32> to vector<16x128xf32>
    %989 = arith.mulf %988, %737 : vector<16x128xf32>
    %cst_178 = arith.constant dense<0.000000e+00> : vector<128xf32>
    %990 = vector.multi_reduction <add>, %989, %cst_178 [0] : vector<16x128xf32> to vector<128xf32>
    %991 = vector.shape_cast %990 : vector<128xf32> to vector<1x128xf32>
    %992 = vector.extract_strided_slice %1 {offsets = [2, 0, 0], sizes = [1, 16, 128], strides = [1, 1, 1]} : vector<3x16x128xf32> to vector<1x16x128xf32>
    %993 = vector.shape_cast %992 : vector<1x16x128xf32> to vector<16x128xf32>
    %994 = arith.mulf %993, %737 : vector<16x128xf32>
    %cst_179 = arith.constant dense<0.000000e+00> : vector<128xf32>
    %995 = vector.multi_reduction <add>, %994, %cst_179 [0] : vector<16x128xf32> to vector<128xf32>
    %996 = vector.shape_cast %995 : vector<128xf32> to vector<1x128xf32>
    %997 = tpu.concatenate %986, %991, %996 in 0 : vector<1x128xf32>, vector<1x128xf32>, vector<1x128xf32> -> vector<3x128xf32>
    %998 = vector.extract_strided_slice %848 {offsets = [0, 0], sizes = [1, 128], strides = [1, 1]} : vector<8x128xf32> to vector<1x128xf32>
    %999 = math.absf %998 : vector<1x128xf32>
    %cst_180 = arith.constant 1.000000e-30 : f32
    %1000 = vector.broadcast %cst_180 : f32 to vector<1x128xf32>
    %1001 = arith.cmpf ogt, %999, %1000 : vector<1x128xf32>
    %cst_181 = arith.constant 1.000000e-30 : f32
    %1002 = vector.broadcast %cst_181 : f32 to vector<1x128xf32>
    %1003 = arith.select %1001, %998, %1002 : vector<1x128xi1>, vector<1x128xf32>
    %1004 = tpu.reciprocal %1003 {approx = true} : vector<1x128xf32> -> vector<1x128xf32>
    %1005 = arith.mulf %1003, %1004 : vector<1x128xf32>
    %cst_182 = arith.constant 2.000000e+00 : f32
    %1006 = vector.broadcast %cst_182 : f32 to vector<1x128xf32>
    %1007 = arith.subf %1006, %1005 : vector<1x128xf32>
    %1008 = arith.mulf %1004, %1007 : vector<1x128xf32>
    %1009 = vector.broadcast %1008 : vector<1x128xf32> to vector<8x128xf32>
    %1010 = arith.mulf %848, %1009 : vector<8x128xf32>
    %1011 = vector.broadcast %1008 : vector<1x128xf32> to vector<3x128xf32>
    %1012 = arith.mulf %864, %1011 : vector<3x128xf32>
    %1013 = vector.extract_strided_slice %867 {offsets = [0, 0], sizes = [1, 128], strides = [1, 1]} : vector<8x128xf32> to vector<1x128xf32>
    %1014 = vector.broadcast %1013 : vector<1x128xf32> to vector<8x128xf32>
    %1015 = arith.mulf %1010, %1014 : vector<8x128xf32>
    %1016 = arith.subf %867, %1015 : vector<8x128xf32>
    %1017 = vector.broadcast %1013 : vector<1x128xf32> to vector<3x128xf32>
    %1018 = arith.mulf %1012, %1017 : vector<3x128xf32>
    %1019 = arith.subf %883, %1018 : vector<3x128xf32>
    %1020 = vector.extract_strided_slice %886 {offsets = [0, 0], sizes = [1, 128], strides = [1, 1]} : vector<8x128xf32> to vector<1x128xf32>
    %1021 = vector.broadcast %1020 : vector<1x128xf32> to vector<8x128xf32>
    %1022 = arith.mulf %1010, %1021 : vector<8x128xf32>
    %1023 = arith.subf %886, %1022 : vector<8x128xf32>
    %1024 = vector.broadcast %1020 : vector<1x128xf32> to vector<3x128xf32>
    %1025 = arith.mulf %1012, %1024 : vector<3x128xf32>
    %1026 = arith.subf %902, %1025 : vector<3x128xf32>
    %1027 = vector.extract_strided_slice %905 {offsets = [0, 0], sizes = [1, 128], strides = [1, 1]} : vector<8x128xf32> to vector<1x128xf32>
    %1028 = vector.broadcast %1027 : vector<1x128xf32> to vector<8x128xf32>
    %1029 = arith.mulf %1010, %1028 : vector<8x128xf32>
    %1030 = arith.subf %905, %1029 : vector<8x128xf32>
    %1031 = vector.broadcast %1027 : vector<1x128xf32> to vector<3x128xf32>
    %1032 = arith.mulf %1012, %1031 : vector<3x128xf32>
    %1033 = arith.subf %921, %1032 : vector<3x128xf32>
    %1034 = vector.extract_strided_slice %924 {offsets = [0, 0], sizes = [1, 128], strides = [1, 1]} : vector<8x128xf32> to vector<1x128xf32>
    %1035 = vector.broadcast %1034 : vector<1x128xf32> to vector<8x128xf32>
    %1036 = arith.mulf %1010, %1035 : vector<8x128xf32>
    %1037 = arith.subf %924, %1036 : vector<8x128xf32>
    %1038 = vector.broadcast %1034 : vector<1x128xf32> to vector<3x128xf32>
    %1039 = arith.mulf %1012, %1038 : vector<3x128xf32>
    %1040 = arith.subf %940, %1039 : vector<3x128xf32>
    %1041 = vector.extract_strided_slice %943 {offsets = [0, 0], sizes = [1, 128], strides = [1, 1]} : vector<8x128xf32> to vector<1x128xf32>
    %1042 = vector.broadcast %1041 : vector<1x128xf32> to vector<8x128xf32>
    %1043 = arith.mulf %1010, %1042 : vector<8x128xf32>
    %1044 = arith.subf %943, %1043 : vector<8x128xf32>
    %1045 = vector.broadcast %1041 : vector<1x128xf32> to vector<3x128xf32>
    %1046 = arith.mulf %1012, %1045 : vector<3x128xf32>
    %1047 = arith.subf %959, %1046 : vector<3x128xf32>
    %1048 = vector.extract_strided_slice %962 {offsets = [0, 0], sizes = [1, 128], strides = [1, 1]} : vector<8x128xf32> to vector<1x128xf32>
    %1049 = vector.broadcast %1048 : vector<1x128xf32> to vector<8x128xf32>
    %1050 = arith.mulf %1010, %1049 : vector<8x128xf32>
    %1051 = arith.subf %962, %1050 : vector<8x128xf32>
    %1052 = vector.broadcast %1048 : vector<1x128xf32> to vector<3x128xf32>
    %1053 = arith.mulf %1012, %1052 : vector<3x128xf32>
    %1054 = arith.subf %978, %1053 : vector<3x128xf32>
    %1055 = vector.extract_strided_slice %981 {offsets = [0, 0], sizes = [1, 128], strides = [1, 1]} : vector<8x128xf32> to vector<1x128xf32>
    %1056 = vector.broadcast %1055 : vector<1x128xf32> to vector<8x128xf32>
    %1057 = arith.mulf %1010, %1056 : vector<8x128xf32>
    %1058 = arith.subf %981, %1057 : vector<8x128xf32>
    %1059 = vector.broadcast %1055 : vector<1x128xf32> to vector<3x128xf32>
    %1060 = arith.mulf %1012, %1059 : vector<3x128xf32>
    %1061 = arith.subf %997, %1060 : vector<3x128xf32>
    %1062 = vector.extract_strided_slice %1016 {offsets = [1, 0], sizes = [1, 128], strides = [1, 1]} : vector<8x128xf32> to vector<1x128xf32>
    %1063 = math.absf %1062 : vector<1x128xf32>
    %cst_183 = arith.constant 1.000000e-30 : f32
    %1064 = vector.broadcast %cst_183 : f32 to vector<1x128xf32>
    %1065 = arith.cmpf ogt, %1063, %1064 : vector<1x128xf32>
    %cst_184 = arith.constant 1.000000e-30 : f32
    %1066 = vector.broadcast %cst_184 : f32 to vector<1x128xf32>
    %1067 = arith.select %1065, %1062, %1066 : vector<1x128xi1>, vector<1x128xf32>
    %1068 = tpu.reciprocal %1067 {approx = true} : vector<1x128xf32> -> vector<1x128xf32>
    %1069 = arith.mulf %1067, %1068 : vector<1x128xf32>
    %cst_185 = arith.constant 2.000000e+00 : f32
    %1070 = vector.broadcast %cst_185 : f32 to vector<1x128xf32>
    %1071 = arith.subf %1070, %1069 : vector<1x128xf32>
    %1072 = arith.mulf %1068, %1071 : vector<1x128xf32>
    %1073 = vector.broadcast %1072 : vector<1x128xf32> to vector<8x128xf32>
    %1074 = arith.mulf %1016, %1073 : vector<8x128xf32>
    %1075 = vector.broadcast %1072 : vector<1x128xf32> to vector<3x128xf32>
    %1076 = arith.mulf %1019, %1075 : vector<3x128xf32>
    %1077 = vector.extract_strided_slice %1010 {offsets = [1, 0], sizes = [1, 128], strides = [1, 1]} : vector<8x128xf32> to vector<1x128xf32>
    %1078 = vector.broadcast %1077 : vector<1x128xf32> to vector<8x128xf32>
    %1079 = arith.mulf %1074, %1078 : vector<8x128xf32>
    %1080 = arith.subf %1010, %1079 : vector<8x128xf32>
    %1081 = vector.broadcast %1077 : vector<1x128xf32> to vector<3x128xf32>
    %1082 = arith.mulf %1076, %1081 : vector<3x128xf32>
    %1083 = arith.subf %1012, %1082 : vector<3x128xf32>
    %1084 = vector.extract_strided_slice %1023 {offsets = [1, 0], sizes = [1, 128], strides = [1, 1]} : vector<8x128xf32> to vector<1x128xf32>
    %1085 = vector.broadcast %1084 : vector<1x128xf32> to vector<8x128xf32>
    %1086 = arith.mulf %1074, %1085 : vector<8x128xf32>
    %1087 = arith.subf %1023, %1086 : vector<8x128xf32>
    %1088 = vector.broadcast %1084 : vector<1x128xf32> to vector<3x128xf32>
    %1089 = arith.mulf %1076, %1088 : vector<3x128xf32>
    %1090 = arith.subf %1026, %1089 : vector<3x128xf32>
    %1091 = vector.extract_strided_slice %1030 {offsets = [1, 0], sizes = [1, 128], strides = [1, 1]} : vector<8x128xf32> to vector<1x128xf32>
    %1092 = vector.broadcast %1091 : vector<1x128xf32> to vector<8x128xf32>
    %1093 = arith.mulf %1074, %1092 : vector<8x128xf32>
    %1094 = arith.subf %1030, %1093 : vector<8x128xf32>
    %1095 = vector.broadcast %1091 : vector<1x128xf32> to vector<3x128xf32>
    %1096 = arith.mulf %1076, %1095 : vector<3x128xf32>
    %1097 = arith.subf %1033, %1096 : vector<3x128xf32>
    %1098 = vector.extract_strided_slice %1037 {offsets = [1, 0], sizes = [1, 128], strides = [1, 1]} : vector<8x128xf32> to vector<1x128xf32>
    %1099 = vector.broadcast %1098 : vector<1x128xf32> to vector<8x128xf32>
    %1100 = arith.mulf %1074, %1099 : vector<8x128xf32>
    %1101 = arith.subf %1037, %1100 : vector<8x128xf32>
    %1102 = vector.broadcast %1098 : vector<1x128xf32> to vector<3x128xf32>
    %1103 = arith.mulf %1076, %1102 : vector<3x128xf32>
    %1104 = arith.subf %1040, %1103 : vector<3x128xf32>
    %1105 = vector.extract_strided_slice %1044 {offsets = [1, 0], sizes = [1, 128], strides = [1, 1]} : vector<8x128xf32> to vector<1x128xf32>
    %1106 = vector.broadcast %1105 : vector<1x128xf32> to vector<8x128xf32>
    %1107 = arith.mulf %1074, %1106 : vector<8x128xf32>
    %1108 = arith.subf %1044, %1107 : vector<8x128xf32>
    %1109 = vector.broadcast %1105 : vector<1x128xf32> to vector<3x128xf32>
    %1110 = arith.mulf %1076, %1109 : vector<3x128xf32>
    %1111 = arith.subf %1047, %1110 : vector<3x128xf32>
    %1112 = vector.extract_strided_slice %1051 {offsets = [1, 0], sizes = [1, 128], strides = [1, 1]} : vector<8x128xf32> to vector<1x128xf32>
    %1113 = vector.broadcast %1112 : vector<1x128xf32> to vector<8x128xf32>
    %1114 = arith.mulf %1074, %1113 : vector<8x128xf32>
    %1115 = arith.subf %1051, %1114 : vector<8x128xf32>
    %1116 = vector.broadcast %1112 : vector<1x128xf32> to vector<3x128xf32>
    %1117 = arith.mulf %1076, %1116 : vector<3x128xf32>
    %1118 = arith.subf %1054, %1117 : vector<3x128xf32>
    %1119 = vector.extract_strided_slice %1058 {offsets = [1, 0], sizes = [1, 128], strides = [1, 1]} : vector<8x128xf32> to vector<1x128xf32>
    %1120 = vector.broadcast %1119 : vector<1x128xf32> to vector<8x128xf32>
    %1121 = arith.mulf %1074, %1120 : vector<8x128xf32>
    %1122 = arith.subf %1058, %1121 : vector<8x128xf32>
    %1123 = vector.broadcast %1119 : vector<1x128xf32> to vector<3x128xf32>
    %1124 = arith.mulf %1076, %1123 : vector<3x128xf32>
    %1125 = arith.subf %1061, %1124 : vector<3x128xf32>
    %1126 = vector.extract_strided_slice %1087 {offsets = [2, 0], sizes = [1, 128], strides = [1, 1]} : vector<8x128xf32> to vector<1x128xf32>
    %1127 = math.absf %1126 : vector<1x128xf32>
    %cst_186 = arith.constant 1.000000e-30 : f32
    %1128 = vector.broadcast %cst_186 : f32 to vector<1x128xf32>
    %1129 = arith.cmpf ogt, %1127, %1128 : vector<1x128xf32>
    %cst_187 = arith.constant 1.000000e-30 : f32
    %1130 = vector.broadcast %cst_187 : f32 to vector<1x128xf32>
    %1131 = arith.select %1129, %1126, %1130 : vector<1x128xi1>, vector<1x128xf32>
    %1132 = tpu.reciprocal %1131 {approx = true} : vector<1x128xf32> -> vector<1x128xf32>
    %1133 = arith.mulf %1131, %1132 : vector<1x128xf32>
    %cst_188 = arith.constant 2.000000e+00 : f32
    %1134 = vector.broadcast %cst_188 : f32 to vector<1x128xf32>
    %1135 = arith.subf %1134, %1133 : vector<1x128xf32>
    %1136 = arith.mulf %1132, %1135 : vector<1x128xf32>
    %1137 = vector.broadcast %1136 : vector<1x128xf32> to vector<8x128xf32>
    %1138 = arith.mulf %1087, %1137 : vector<8x128xf32>
    %1139 = vector.broadcast %1136 : vector<1x128xf32> to vector<3x128xf32>
    %1140 = arith.mulf %1090, %1139 : vector<3x128xf32>
    %1141 = vector.extract_strided_slice %1080 {offsets = [2, 0], sizes = [1, 128], strides = [1, 1]} : vector<8x128xf32> to vector<1x128xf32>
    %1142 = vector.broadcast %1141 : vector<1x128xf32> to vector<8x128xf32>
    %1143 = arith.mulf %1138, %1142 : vector<8x128xf32>
    %1144 = arith.subf %1080, %1143 : vector<8x128xf32>
    %1145 = vector.broadcast %1141 : vector<1x128xf32> to vector<3x128xf32>
    %1146 = arith.mulf %1140, %1145 : vector<3x128xf32>
    %1147 = arith.subf %1083, %1146 : vector<3x128xf32>
    %1148 = vector.extract_strided_slice %1074 {offsets = [2, 0], sizes = [1, 128], strides = [1, 1]} : vector<8x128xf32> to vector<1x128xf32>
    %1149 = vector.broadcast %1148 : vector<1x128xf32> to vector<8x128xf32>
    %1150 = arith.mulf %1138, %1149 : vector<8x128xf32>
    %1151 = arith.subf %1074, %1150 : vector<8x128xf32>
    %1152 = vector.broadcast %1148 : vector<1x128xf32> to vector<3x128xf32>
    %1153 = arith.mulf %1140, %1152 : vector<3x128xf32>
    %1154 = arith.subf %1076, %1153 : vector<3x128xf32>
    %1155 = vector.extract_strided_slice %1094 {offsets = [2, 0], sizes = [1, 128], strides = [1, 1]} : vector<8x128xf32> to vector<1x128xf32>
    %1156 = vector.broadcast %1155 : vector<1x128xf32> to vector<8x128xf32>
    %1157 = arith.mulf %1138, %1156 : vector<8x128xf32>
    %1158 = arith.subf %1094, %1157 : vector<8x128xf32>
    %1159 = vector.broadcast %1155 : vector<1x128xf32> to vector<3x128xf32>
    %1160 = arith.mulf %1140, %1159 : vector<3x128xf32>
    %1161 = arith.subf %1097, %1160 : vector<3x128xf32>
    %1162 = vector.extract_strided_slice %1101 {offsets = [2, 0], sizes = [1, 128], strides = [1, 1]} : vector<8x128xf32> to vector<1x128xf32>
    %1163 = vector.broadcast %1162 : vector<1x128xf32> to vector<8x128xf32>
    %1164 = arith.mulf %1138, %1163 : vector<8x128xf32>
    %1165 = arith.subf %1101, %1164 : vector<8x128xf32>
    %1166 = vector.broadcast %1162 : vector<1x128xf32> to vector<3x128xf32>
    %1167 = arith.mulf %1140, %1166 : vector<3x128xf32>
    %1168 = arith.subf %1104, %1167 : vector<3x128xf32>
    %1169 = vector.extract_strided_slice %1108 {offsets = [2, 0], sizes = [1, 128], strides = [1, 1]} : vector<8x128xf32> to vector<1x128xf32>
    %1170 = vector.broadcast %1169 : vector<1x128xf32> to vector<8x128xf32>
    %1171 = arith.mulf %1138, %1170 : vector<8x128xf32>
    %1172 = arith.subf %1108, %1171 : vector<8x128xf32>
    %1173 = vector.broadcast %1169 : vector<1x128xf32> to vector<3x128xf32>
    %1174 = arith.mulf %1140, %1173 : vector<3x128xf32>
    %1175 = arith.subf %1111, %1174 : vector<3x128xf32>
    %1176 = vector.extract_strided_slice %1115 {offsets = [2, 0], sizes = [1, 128], strides = [1, 1]} : vector<8x128xf32> to vector<1x128xf32>
    %1177 = vector.broadcast %1176 : vector<1x128xf32> to vector<8x128xf32>
    %1178 = arith.mulf %1138, %1177 : vector<8x128xf32>
    %1179 = arith.subf %1115, %1178 : vector<8x128xf32>
    %1180 = vector.broadcast %1176 : vector<1x128xf32> to vector<3x128xf32>
    %1181 = arith.mulf %1140, %1180 : vector<3x128xf32>
    %1182 = arith.subf %1118, %1181 : vector<3x128xf32>
    %1183 = vector.extract_strided_slice %1122 {offsets = [2, 0], sizes = [1, 128], strides = [1, 1]} : vector<8x128xf32> to vector<1x128xf32>
    %1184 = vector.broadcast %1183 : vector<1x128xf32> to vector<8x128xf32>
    %1185 = arith.mulf %1138, %1184 : vector<8x128xf32>
    %1186 = arith.subf %1122, %1185 : vector<8x128xf32>
    %1187 = vector.broadcast %1183 : vector<1x128xf32> to vector<3x128xf32>
    %1188 = arith.mulf %1140, %1187 : vector<3x128xf32>
    %1189 = arith.subf %1125, %1188 : vector<3x128xf32>
    %1190 = vector.extract_strided_slice %1158 {offsets = [3, 0], sizes = [1, 128], strides = [1, 1]} : vector<8x128xf32> to vector<1x128xf32>
    %1191 = math.absf %1190 : vector<1x128xf32>
    %cst_189 = arith.constant 1.000000e-30 : f32
    %1192 = vector.broadcast %cst_189 : f32 to vector<1x128xf32>
    %1193 = arith.cmpf ogt, %1191, %1192 : vector<1x128xf32>
    %cst_190 = arith.constant 1.000000e-30 : f32
    %1194 = vector.broadcast %cst_190 : f32 to vector<1x128xf32>
    %1195 = arith.select %1193, %1190, %1194 : vector<1x128xi1>, vector<1x128xf32>
    %1196 = tpu.reciprocal %1195 {approx = true} : vector<1x128xf32> -> vector<1x128xf32>
    %1197 = arith.mulf %1195, %1196 : vector<1x128xf32>
    %cst_191 = arith.constant 2.000000e+00 : f32
    %1198 = vector.broadcast %cst_191 : f32 to vector<1x128xf32>
    %1199 = arith.subf %1198, %1197 : vector<1x128xf32>
    %1200 = arith.mulf %1196, %1199 : vector<1x128xf32>
    %1201 = vector.broadcast %1200 : vector<1x128xf32> to vector<8x128xf32>
    %1202 = arith.mulf %1158, %1201 : vector<8x128xf32>
    %1203 = vector.broadcast %1200 : vector<1x128xf32> to vector<3x128xf32>
    %1204 = arith.mulf %1161, %1203 : vector<3x128xf32>
    %1205 = vector.extract_strided_slice %1144 {offsets = [3, 0], sizes = [1, 128], strides = [1, 1]} : vector<8x128xf32> to vector<1x128xf32>
    %1206 = vector.broadcast %1205 : vector<1x128xf32> to vector<8x128xf32>
    %1207 = arith.mulf %1202, %1206 : vector<8x128xf32>
    %1208 = arith.subf %1144, %1207 : vector<8x128xf32>
    %1209 = vector.broadcast %1205 : vector<1x128xf32> to vector<3x128xf32>
    %1210 = arith.mulf %1204, %1209 : vector<3x128xf32>
    %1211 = arith.subf %1147, %1210 : vector<3x128xf32>
    %1212 = vector.extract_strided_slice %1151 {offsets = [3, 0], sizes = [1, 128], strides = [1, 1]} : vector<8x128xf32> to vector<1x128xf32>
    %1213 = vector.broadcast %1212 : vector<1x128xf32> to vector<8x128xf32>
    %1214 = arith.mulf %1202, %1213 : vector<8x128xf32>
    %1215 = arith.subf %1151, %1214 : vector<8x128xf32>
    %1216 = vector.broadcast %1212 : vector<1x128xf32> to vector<3x128xf32>
    %1217 = arith.mulf %1204, %1216 : vector<3x128xf32>
    %1218 = arith.subf %1154, %1217 : vector<3x128xf32>
    %1219 = vector.extract_strided_slice %1138 {offsets = [3, 0], sizes = [1, 128], strides = [1, 1]} : vector<8x128xf32> to vector<1x128xf32>
    %1220 = vector.broadcast %1219 : vector<1x128xf32> to vector<8x128xf32>
    %1221 = arith.mulf %1202, %1220 : vector<8x128xf32>
    %1222 = arith.subf %1138, %1221 : vector<8x128xf32>
    %1223 = vector.broadcast %1219 : vector<1x128xf32> to vector<3x128xf32>
    %1224 = arith.mulf %1204, %1223 : vector<3x128xf32>
    %1225 = arith.subf %1140, %1224 : vector<3x128xf32>
    %1226 = vector.extract_strided_slice %1165 {offsets = [3, 0], sizes = [1, 128], strides = [1, 1]} : vector<8x128xf32> to vector<1x128xf32>
    %1227 = vector.broadcast %1226 : vector<1x128xf32> to vector<8x128xf32>
    %1228 = arith.mulf %1202, %1227 : vector<8x128xf32>
    %1229 = arith.subf %1165, %1228 : vector<8x128xf32>
    %1230 = vector.broadcast %1226 : vector<1x128xf32> to vector<3x128xf32>
    %1231 = arith.mulf %1204, %1230 : vector<3x128xf32>
    %1232 = arith.subf %1168, %1231 : vector<3x128xf32>
    %1233 = vector.extract_strided_slice %1172 {offsets = [3, 0], sizes = [1, 128], strides = [1, 1]} : vector<8x128xf32> to vector<1x128xf32>
    %1234 = vector.broadcast %1233 : vector<1x128xf32> to vector<8x128xf32>
    %1235 = arith.mulf %1202, %1234 : vector<8x128xf32>
    %1236 = arith.subf %1172, %1235 : vector<8x128xf32>
    %1237 = vector.broadcast %1233 : vector<1x128xf32> to vector<3x128xf32>
    %1238 = arith.mulf %1204, %1237 : vector<3x128xf32>
    %1239 = arith.subf %1175, %1238 : vector<3x128xf32>
    %1240 = vector.extract_strided_slice %1179 {offsets = [3, 0], sizes = [1, 128], strides = [1, 1]} : vector<8x128xf32> to vector<1x128xf32>
    %1241 = vector.broadcast %1240 : vector<1x128xf32> to vector<8x128xf32>
    %1242 = arith.mulf %1202, %1241 : vector<8x128xf32>
    %1243 = arith.subf %1179, %1242 : vector<8x128xf32>
    %1244 = vector.broadcast %1240 : vector<1x128xf32> to vector<3x128xf32>
    %1245 = arith.mulf %1204, %1244 : vector<3x128xf32>
    %1246 = arith.subf %1182, %1245 : vector<3x128xf32>
    %1247 = vector.extract_strided_slice %1186 {offsets = [3, 0], sizes = [1, 128], strides = [1, 1]} : vector<8x128xf32> to vector<1x128xf32>
    %1248 = vector.broadcast %1247 : vector<1x128xf32> to vector<8x128xf32>
    %1249 = arith.mulf %1202, %1248 : vector<8x128xf32>
    %1250 = arith.subf %1186, %1249 : vector<8x128xf32>
    %1251 = vector.broadcast %1247 : vector<1x128xf32> to vector<3x128xf32>
    %1252 = arith.mulf %1204, %1251 : vector<3x128xf32>
    %1253 = arith.subf %1189, %1252 : vector<3x128xf32>
    %1254 = vector.extract_strided_slice %1229 {offsets = [4, 0], sizes = [1, 128], strides = [1, 1]} : vector<8x128xf32> to vector<1x128xf32>
    %1255 = math.absf %1254 : vector<1x128xf32>
    %cst_192 = arith.constant 1.000000e-30 : f32
    %1256 = vector.broadcast %cst_192 : f32 to vector<1x128xf32>
    %1257 = arith.cmpf ogt, %1255, %1256 : vector<1x128xf32>
    %cst_193 = arith.constant 1.000000e-30 : f32
    %1258 = vector.broadcast %cst_193 : f32 to vector<1x128xf32>
    %1259 = arith.select %1257, %1254, %1258 : vector<1x128xi1>, vector<1x128xf32>
    %1260 = tpu.reciprocal %1259 {approx = true} : vector<1x128xf32> -> vector<1x128xf32>
    %1261 = arith.mulf %1259, %1260 : vector<1x128xf32>
    %cst_194 = arith.constant 2.000000e+00 : f32
    %1262 = vector.broadcast %cst_194 : f32 to vector<1x128xf32>
    %1263 = arith.subf %1262, %1261 : vector<1x128xf32>
    %1264 = arith.mulf %1260, %1263 : vector<1x128xf32>
    %1265 = vector.broadcast %1264 : vector<1x128xf32> to vector<8x128xf32>
    %1266 = arith.mulf %1229, %1265 : vector<8x128xf32>
    %1267 = vector.broadcast %1264 : vector<1x128xf32> to vector<3x128xf32>
    %1268 = arith.mulf %1232, %1267 : vector<3x128xf32>
    %1269 = vector.extract_strided_slice %1208 {offsets = [4, 0], sizes = [1, 128], strides = [1, 1]} : vector<8x128xf32> to vector<1x128xf32>
    %1270 = vector.broadcast %1269 : vector<1x128xf32> to vector<8x128xf32>
    %1271 = arith.mulf %1266, %1270 : vector<8x128xf32>
    %1272 = arith.subf %1208, %1271 : vector<8x128xf32>
    %1273 = vector.broadcast %1269 : vector<1x128xf32> to vector<3x128xf32>
    %1274 = arith.mulf %1268, %1273 : vector<3x128xf32>
    %1275 = arith.subf %1211, %1274 : vector<3x128xf32>
    %1276 = vector.extract_strided_slice %1215 {offsets = [4, 0], sizes = [1, 128], strides = [1, 1]} : vector<8x128xf32> to vector<1x128xf32>
    %1277 = vector.broadcast %1276 : vector<1x128xf32> to vector<8x128xf32>
    %1278 = arith.mulf %1266, %1277 : vector<8x128xf32>
    %1279 = arith.subf %1215, %1278 : vector<8x128xf32>
    %1280 = vector.broadcast %1276 : vector<1x128xf32> to vector<3x128xf32>
    %1281 = arith.mulf %1268, %1280 : vector<3x128xf32>
    %1282 = arith.subf %1218, %1281 : vector<3x128xf32>
    %1283 = vector.extract_strided_slice %1222 {offsets = [4, 0], sizes = [1, 128], strides = [1, 1]} : vector<8x128xf32> to vector<1x128xf32>
    %1284 = vector.broadcast %1283 : vector<1x128xf32> to vector<8x128xf32>
    %1285 = arith.mulf %1266, %1284 : vector<8x128xf32>
    %1286 = arith.subf %1222, %1285 : vector<8x128xf32>
    %1287 = vector.broadcast %1283 : vector<1x128xf32> to vector<3x128xf32>
    %1288 = arith.mulf %1268, %1287 : vector<3x128xf32>
    %1289 = arith.subf %1225, %1288 : vector<3x128xf32>
    %1290 = vector.extract_strided_slice %1202 {offsets = [4, 0], sizes = [1, 128], strides = [1, 1]} : vector<8x128xf32> to vector<1x128xf32>
    %1291 = vector.broadcast %1290 : vector<1x128xf32> to vector<8x128xf32>
    %1292 = arith.mulf %1266, %1291 : vector<8x128xf32>
    %1293 = arith.subf %1202, %1292 : vector<8x128xf32>
    %1294 = vector.broadcast %1290 : vector<1x128xf32> to vector<3x128xf32>
    %1295 = arith.mulf %1268, %1294 : vector<3x128xf32>
    %1296 = arith.subf %1204, %1295 : vector<3x128xf32>
    %1297 = vector.extract_strided_slice %1236 {offsets = [4, 0], sizes = [1, 128], strides = [1, 1]} : vector<8x128xf32> to vector<1x128xf32>
    %1298 = vector.broadcast %1297 : vector<1x128xf32> to vector<8x128xf32>
    %1299 = arith.mulf %1266, %1298 : vector<8x128xf32>
    %1300 = arith.subf %1236, %1299 : vector<8x128xf32>
    %1301 = vector.broadcast %1297 : vector<1x128xf32> to vector<3x128xf32>
    %1302 = arith.mulf %1268, %1301 : vector<3x128xf32>
    %1303 = arith.subf %1239, %1302 : vector<3x128xf32>
    %1304 = vector.extract_strided_slice %1243 {offsets = [4, 0], sizes = [1, 128], strides = [1, 1]} : vector<8x128xf32> to vector<1x128xf32>
    %1305 = vector.broadcast %1304 : vector<1x128xf32> to vector<8x128xf32>
    %1306 = arith.mulf %1266, %1305 : vector<8x128xf32>
    %1307 = arith.subf %1243, %1306 : vector<8x128xf32>
    %1308 = vector.broadcast %1304 : vector<1x128xf32> to vector<3x128xf32>
    %1309 = arith.mulf %1268, %1308 : vector<3x128xf32>
    %1310 = arith.subf %1246, %1309 : vector<3x128xf32>
    %1311 = vector.extract_strided_slice %1250 {offsets = [4, 0], sizes = [1, 128], strides = [1, 1]} : vector<8x128xf32> to vector<1x128xf32>
    %1312 = vector.broadcast %1311 : vector<1x128xf32> to vector<8x128xf32>
    %1313 = arith.mulf %1266, %1312 : vector<8x128xf32>
    %1314 = arith.subf %1250, %1313 : vector<8x128xf32>
    %1315 = vector.broadcast %1311 : vector<1x128xf32> to vector<3x128xf32>
    %1316 = arith.mulf %1268, %1315 : vector<3x128xf32>
    %1317 = arith.subf %1253, %1316 : vector<3x128xf32>
    %1318 = vector.extract_strided_slice %1300 {offsets = [5, 0], sizes = [1, 128], strides = [1, 1]} : vector<8x128xf32> to vector<1x128xf32>
    %1319 = math.absf %1318 : vector<1x128xf32>
    %cst_195 = arith.constant 1.000000e-30 : f32
    %1320 = vector.broadcast %cst_195 : f32 to vector<1x128xf32>
    %1321 = arith.cmpf ogt, %1319, %1320 : vector<1x128xf32>
    %cst_196 = arith.constant 1.000000e-30 : f32
    %1322 = vector.broadcast %cst_196 : f32 to vector<1x128xf32>
    %1323 = arith.select %1321, %1318, %1322 : vector<1x128xi1>, vector<1x128xf32>
    %1324 = tpu.reciprocal %1323 {approx = true} : vector<1x128xf32> -> vector<1x128xf32>
    %1325 = arith.mulf %1323, %1324 : vector<1x128xf32>
    %cst_197 = arith.constant 2.000000e+00 : f32
    %1326 = vector.broadcast %cst_197 : f32 to vector<1x128xf32>
    %1327 = arith.subf %1326, %1325 : vector<1x128xf32>
    %1328 = arith.mulf %1324, %1327 : vector<1x128xf32>
    %1329 = vector.broadcast %1328 : vector<1x128xf32> to vector<8x128xf32>
    %1330 = arith.mulf %1300, %1329 : vector<8x128xf32>
    %1331 = vector.broadcast %1328 : vector<1x128xf32> to vector<3x128xf32>
    %1332 = arith.mulf %1303, %1331 : vector<3x128xf32>
    %1333 = vector.extract_strided_slice %1272 {offsets = [5, 0], sizes = [1, 128], strides = [1, 1]} : vector<8x128xf32> to vector<1x128xf32>
    %1334 = vector.broadcast %1333 : vector<1x128xf32> to vector<8x128xf32>
    %1335 = arith.mulf %1330, %1334 : vector<8x128xf32>
    %1336 = arith.subf %1272, %1335 : vector<8x128xf32>
    %1337 = vector.broadcast %1333 : vector<1x128xf32> to vector<3x128xf32>
    %1338 = arith.mulf %1332, %1337 : vector<3x128xf32>
    %1339 = arith.subf %1275, %1338 : vector<3x128xf32>
    %1340 = vector.extract_strided_slice %1279 {offsets = [5, 0], sizes = [1, 128], strides = [1, 1]} : vector<8x128xf32> to vector<1x128xf32>
    %1341 = vector.broadcast %1340 : vector<1x128xf32> to vector<8x128xf32>
    %1342 = arith.mulf %1330, %1341 : vector<8x128xf32>
    %1343 = arith.subf %1279, %1342 : vector<8x128xf32>
    %1344 = vector.broadcast %1340 : vector<1x128xf32> to vector<3x128xf32>
    %1345 = arith.mulf %1332, %1344 : vector<3x128xf32>
    %1346 = arith.subf %1282, %1345 : vector<3x128xf32>
    %1347 = vector.extract_strided_slice %1286 {offsets = [5, 0], sizes = [1, 128], strides = [1, 1]} : vector<8x128xf32> to vector<1x128xf32>
    %1348 = vector.broadcast %1347 : vector<1x128xf32> to vector<8x128xf32>
    %1349 = arith.mulf %1330, %1348 : vector<8x128xf32>
    %1350 = arith.subf %1286, %1349 : vector<8x128xf32>
    %1351 = vector.broadcast %1347 : vector<1x128xf32> to vector<3x128xf32>
    %1352 = arith.mulf %1332, %1351 : vector<3x128xf32>
    %1353 = arith.subf %1289, %1352 : vector<3x128xf32>
    %1354 = vector.extract_strided_slice %1293 {offsets = [5, 0], sizes = [1, 128], strides = [1, 1]} : vector<8x128xf32> to vector<1x128xf32>
    %1355 = vector.broadcast %1354 : vector<1x128xf32> to vector<8x128xf32>
    %1356 = arith.mulf %1330, %1355 : vector<8x128xf32>
    %1357 = arith.subf %1293, %1356 : vector<8x128xf32>
    %1358 = vector.broadcast %1354 : vector<1x128xf32> to vector<3x128xf32>
    %1359 = arith.mulf %1332, %1358 : vector<3x128xf32>
    %1360 = arith.subf %1296, %1359 : vector<3x128xf32>
    %1361 = vector.extract_strided_slice %1266 {offsets = [5, 0], sizes = [1, 128], strides = [1, 1]} : vector<8x128xf32> to vector<1x128xf32>
    %1362 = vector.broadcast %1361 : vector<1x128xf32> to vector<8x128xf32>
    %1363 = arith.mulf %1330, %1362 : vector<8x128xf32>
    %1364 = arith.subf %1266, %1363 : vector<8x128xf32>
    %1365 = vector.broadcast %1361 : vector<1x128xf32> to vector<3x128xf32>
    %1366 = arith.mulf %1332, %1365 : vector<3x128xf32>
    %1367 = arith.subf %1268, %1366 : vector<3x128xf32>
    %1368 = vector.extract_strided_slice %1307 {offsets = [5, 0], sizes = [1, 128], strides = [1, 1]} : vector<8x128xf32> to vector<1x128xf32>
    %1369 = vector.broadcast %1368 : vector<1x128xf32> to vector<8x128xf32>
    %1370 = arith.mulf %1330, %1369 : vector<8x128xf32>
    %1371 = arith.subf %1307, %1370 : vector<8x128xf32>
    %1372 = vector.broadcast %1368 : vector<1x128xf32> to vector<3x128xf32>
    %1373 = arith.mulf %1332, %1372 : vector<3x128xf32>
    %1374 = arith.subf %1310, %1373 : vector<3x128xf32>
    %1375 = vector.extract_strided_slice %1314 {offsets = [5, 0], sizes = [1, 128], strides = [1, 1]} : vector<8x128xf32> to vector<1x128xf32>
    %1376 = vector.broadcast %1375 : vector<1x128xf32> to vector<8x128xf32>
    %1377 = arith.mulf %1330, %1376 : vector<8x128xf32>
    %1378 = arith.subf %1314, %1377 : vector<8x128xf32>
    %1379 = vector.broadcast %1375 : vector<1x128xf32> to vector<3x128xf32>
    %1380 = arith.mulf %1332, %1379 : vector<3x128xf32>
    %1381 = arith.subf %1317, %1380 : vector<3x128xf32>
    %1382 = vector.extract_strided_slice %1371 {offsets = [6, 0], sizes = [1, 128], strides = [1, 1]} : vector<8x128xf32> to vector<1x128xf32>
    %1383 = math.absf %1382 : vector<1x128xf32>
    %cst_198 = arith.constant 1.000000e-30 : f32
    %1384 = vector.broadcast %cst_198 : f32 to vector<1x128xf32>
    %1385 = arith.cmpf ogt, %1383, %1384 : vector<1x128xf32>
    %cst_199 = arith.constant 1.000000e-30 : f32
    %1386 = vector.broadcast %cst_199 : f32 to vector<1x128xf32>
    %1387 = arith.select %1385, %1382, %1386 : vector<1x128xi1>, vector<1x128xf32>
    %1388 = tpu.reciprocal %1387 {approx = true} : vector<1x128xf32> -> vector<1x128xf32>
    %1389 = arith.mulf %1387, %1388 : vector<1x128xf32>
    %cst_200 = arith.constant 2.000000e+00 : f32
    %1390 = vector.broadcast %cst_200 : f32 to vector<1x128xf32>
    %1391 = arith.subf %1390, %1389 : vector<1x128xf32>
    %1392 = arith.mulf %1388, %1391 : vector<1x128xf32>
    %1393 = vector.broadcast %1392 : vector<1x128xf32> to vector<8x128xf32>
    %1394 = arith.mulf %1371, %1393 : vector<8x128xf32>
    %1395 = vector.broadcast %1392 : vector<1x128xf32> to vector<3x128xf32>
    %1396 = arith.mulf %1374, %1395 : vector<3x128xf32>
    %1397 = vector.extract_strided_slice %1336 {offsets = [6, 0], sizes = [1, 128], strides = [1, 1]} : vector<8x128xf32> to vector<1x128xf32>
    %1398 = vector.broadcast %1397 : vector<1x128xf32> to vector<8x128xf32>
    %1399 = arith.mulf %1394, %1398 : vector<8x128xf32>
    %1400 = arith.subf %1336, %1399 : vector<8x128xf32>
    %1401 = vector.broadcast %1397 : vector<1x128xf32> to vector<3x128xf32>
    %1402 = arith.mulf %1396, %1401 : vector<3x128xf32>
    %1403 = arith.subf %1339, %1402 : vector<3x128xf32>
    %1404 = vector.extract_strided_slice %1343 {offsets = [6, 0], sizes = [1, 128], strides = [1, 1]} : vector<8x128xf32> to vector<1x128xf32>
    %1405 = vector.broadcast %1404 : vector<1x128xf32> to vector<8x128xf32>
    %1406 = arith.mulf %1394, %1405 : vector<8x128xf32>
    %1407 = arith.subf %1343, %1406 : vector<8x128xf32>
    %1408 = vector.broadcast %1404 : vector<1x128xf32> to vector<3x128xf32>
    %1409 = arith.mulf %1396, %1408 : vector<3x128xf32>
    %1410 = arith.subf %1346, %1409 : vector<3x128xf32>
    %1411 = vector.extract_strided_slice %1350 {offsets = [6, 0], sizes = [1, 128], strides = [1, 1]} : vector<8x128xf32> to vector<1x128xf32>
    %1412 = vector.broadcast %1411 : vector<1x128xf32> to vector<8x128xf32>
    %1413 = arith.mulf %1394, %1412 : vector<8x128xf32>
    %1414 = arith.subf %1350, %1413 : vector<8x128xf32>
    %1415 = vector.broadcast %1411 : vector<1x128xf32> to vector<3x128xf32>
    %1416 = arith.mulf %1396, %1415 : vector<3x128xf32>
    %1417 = arith.subf %1353, %1416 : vector<3x128xf32>
    %1418 = vector.extract_strided_slice %1357 {offsets = [6, 0], sizes = [1, 128], strides = [1, 1]} : vector<8x128xf32> to vector<1x128xf32>
    %1419 = vector.broadcast %1418 : vector<1x128xf32> to vector<8x128xf32>
    %1420 = arith.mulf %1394, %1419 : vector<8x128xf32>
    %1421 = arith.subf %1357, %1420 : vector<8x128xf32>
    %1422 = vector.broadcast %1418 : vector<1x128xf32> to vector<3x128xf32>
    %1423 = arith.mulf %1396, %1422 : vector<3x128xf32>
    %1424 = arith.subf %1360, %1423 : vector<3x128xf32>
    %1425 = vector.extract_strided_slice %1364 {offsets = [6, 0], sizes = [1, 128], strides = [1, 1]} : vector<8x128xf32> to vector<1x128xf32>
    %1426 = vector.broadcast %1425 : vector<1x128xf32> to vector<8x128xf32>
    %1427 = arith.mulf %1394, %1426 : vector<8x128xf32>
    %1428 = arith.subf %1364, %1427 : vector<8x128xf32>
    %1429 = vector.broadcast %1425 : vector<1x128xf32> to vector<3x128xf32>
    %1430 = arith.mulf %1396, %1429 : vector<3x128xf32>
    %1431 = arith.subf %1367, %1430 : vector<3x128xf32>
    %1432 = vector.extract_strided_slice %1330 {offsets = [6, 0], sizes = [1, 128], strides = [1, 1]} : vector<8x128xf32> to vector<1x128xf32>
    %1433 = vector.broadcast %1432 : vector<1x128xf32> to vector<8x128xf32>
    %1434 = arith.mulf %1394, %1433 : vector<8x128xf32>
    %1435 = arith.subf %1330, %1434 : vector<8x128xf32>
    %1436 = vector.broadcast %1432 : vector<1x128xf32> to vector<3x128xf32>
    %1437 = arith.mulf %1396, %1436 : vector<3x128xf32>
    %1438 = arith.subf %1332, %1437 : vector<3x128xf32>
    %1439 = vector.extract_strided_slice %1378 {offsets = [6, 0], sizes = [1, 128], strides = [1, 1]} : vector<8x128xf32> to vector<1x128xf32>
    %1440 = vector.broadcast %1439 : vector<1x128xf32> to vector<8x128xf32>
    %1441 = arith.mulf %1394, %1440 : vector<8x128xf32>
    %1442 = arith.subf %1378, %1441 : vector<8x128xf32>
    %1443 = vector.broadcast %1439 : vector<1x128xf32> to vector<3x128xf32>
    %1444 = arith.mulf %1396, %1443 : vector<3x128xf32>
    %1445 = arith.subf %1381, %1444 : vector<3x128xf32>
    %1446 = vector.extract_strided_slice %1442 {offsets = [7, 0], sizes = [1, 128], strides = [1, 1]} : vector<8x128xf32> to vector<1x128xf32>
    %1447 = math.absf %1446 : vector<1x128xf32>
    %cst_201 = arith.constant 1.000000e-30 : f32
    %1448 = vector.broadcast %cst_201 : f32 to vector<1x128xf32>
    %1449 = arith.cmpf ogt, %1447, %1448 : vector<1x128xf32>
    %cst_202 = arith.constant 1.000000e-30 : f32
    %1450 = vector.broadcast %cst_202 : f32 to vector<1x128xf32>
    %1451 = arith.select %1449, %1446, %1450 : vector<1x128xi1>, vector<1x128xf32>
    %1452 = tpu.reciprocal %1451 {approx = true} : vector<1x128xf32> -> vector<1x128xf32>
    %1453 = arith.mulf %1451, %1452 : vector<1x128xf32>
    %cst_203 = arith.constant 2.000000e+00 : f32
    %1454 = vector.broadcast %cst_203 : f32 to vector<1x128xf32>
    %1455 = arith.subf %1454, %1453 : vector<1x128xf32>
    %1456 = arith.mulf %1452, %1455 : vector<1x128xf32>
    %1457 = vector.broadcast %1456 : vector<1x128xf32> to vector<3x128xf32>
    %1458 = arith.mulf %1445, %1457 : vector<3x128xf32>
    %1459 = vector.extract_strided_slice %1400 {offsets = [7, 0], sizes = [1, 128], strides = [1, 1]} : vector<8x128xf32> to vector<1x128xf32>
    %1460 = vector.broadcast %1459 : vector<1x128xf32> to vector<3x128xf32>
    %1461 = arith.mulf %1458, %1460 : vector<3x128xf32>
    %1462 = arith.subf %1403, %1461 : vector<3x128xf32>
    %1463 = vector.extract_strided_slice %1407 {offsets = [7, 0], sizes = [1, 128], strides = [1, 1]} : vector<8x128xf32> to vector<1x128xf32>
    %1464 = vector.broadcast %1463 : vector<1x128xf32> to vector<3x128xf32>
    %1465 = arith.mulf %1458, %1464 : vector<3x128xf32>
    %1466 = arith.subf %1410, %1465 : vector<3x128xf32>
    %1467 = vector.extract_strided_slice %1414 {offsets = [7, 0], sizes = [1, 128], strides = [1, 1]} : vector<8x128xf32> to vector<1x128xf32>
    %1468 = vector.broadcast %1467 : vector<1x128xf32> to vector<3x128xf32>
    %1469 = arith.mulf %1458, %1468 : vector<3x128xf32>
    %1470 = arith.subf %1417, %1469 : vector<3x128xf32>
    %1471 = vector.extract_strided_slice %1421 {offsets = [7, 0], sizes = [1, 128], strides = [1, 1]} : vector<8x128xf32> to vector<1x128xf32>
    %1472 = vector.broadcast %1471 : vector<1x128xf32> to vector<3x128xf32>
    %1473 = arith.mulf %1458, %1472 : vector<3x128xf32>
    %1474 = arith.subf %1424, %1473 : vector<3x128xf32>
    %1475 = vector.extract_strided_slice %1428 {offsets = [7, 0], sizes = [1, 128], strides = [1, 1]} : vector<8x128xf32> to vector<1x128xf32>
    %1476 = vector.broadcast %1475 : vector<1x128xf32> to vector<3x128xf32>
    %1477 = arith.mulf %1458, %1476 : vector<3x128xf32>
    %1478 = arith.subf %1431, %1477 : vector<3x128xf32>
    %1479 = vector.extract_strided_slice %1435 {offsets = [7, 0], sizes = [1, 128], strides = [1, 1]} : vector<8x128xf32> to vector<1x128xf32>
    %1480 = vector.broadcast %1479 : vector<1x128xf32> to vector<3x128xf32>
    %1481 = arith.mulf %1458, %1480 : vector<3x128xf32>
    %1482 = arith.subf %1438, %1481 : vector<3x128xf32>
    %1483 = vector.extract_strided_slice %1394 {offsets = [7, 0], sizes = [1, 128], strides = [1, 1]} : vector<8x128xf32> to vector<1x128xf32>
    %1484 = vector.broadcast %1483 : vector<1x128xf32> to vector<3x128xf32>
    %1485 = arith.mulf %1458, %1484 : vector<3x128xf32>
    %1486 = arith.subf %1396, %1485 : vector<3x128xf32>
    %1487 = vector.shape_cast %1462 : vector<3x128xf32> to vector<1x3x128xf32>
    %1488 = vector.shape_cast %1466 : vector<3x128xf32> to vector<1x3x128xf32>
    %1489 = vector.shape_cast %1470 : vector<3x128xf32> to vector<1x3x128xf32>
    %1490 = vector.shape_cast %1474 : vector<3x128xf32> to vector<1x3x128xf32>
    %1491 = vector.shape_cast %1478 : vector<3x128xf32> to vector<1x3x128xf32>
    %1492 = vector.shape_cast %1482 : vector<3x128xf32> to vector<1x3x128xf32>
    %1493 = vector.shape_cast %1486 : vector<3x128xf32> to vector<1x3x128xf32>
    %1494 = vector.shape_cast %1458 : vector<3x128xf32> to vector<1x3x128xf32>
    %1495 = tpu.concatenate %1487, %1488, %1489, %1490, %1491, %1492, %1493, %1494 in 0 : vector<1x3x128xf32>, vector<1x3x128xf32>, vector<1x3x128xf32>, vector<1x3x128xf32>, vector<1x3x128xf32>, vector<1x3x128xf32>, vector<1x3x128xf32>, vector<1x3x128xf32> -> vector<8x3x128xf32>
    %c0_204 = arith.constant 0 : index
    %c0_205 = arith.constant 0 : index
    %c0_206 = arith.constant 0 : index
    %1496 = vector.load %arg3[%c0_204, %c0_205, %c0_206] : memref<8x3x128xf32, #tpu.memory_space<vmem>>, vector<8x3x128xf32>
    tpu.vector_store %arg3[%c0_204, %c0_205, %c0_206], %1495 {strides = array<i32>} : memref<8x3x128xf32, #tpu.memory_space<vmem>>, vector<8x3x128xf32>,
    return
  }
  func.func @transform_0(%arg0: i32) -> (i32, i32) {
    %c0_i32 = arith.constant 0 : i32
    %c0_i32_0 = arith.constant 0 : i32
    return %c0_i32, %arg0 : i32, i32
  }
  func.func @transform_1(%arg0: i32) -> (i32, i32, i32) {
    %c0_i32 = arith.constant 0 : i32
    %c0_i32_0 = arith.constant 0 : i32
    %c0_i32_1 = arith.constant 0 : i32
    return %c0_i32, %c0_i32_0, %arg0 : i32, i32, i32
  }
  func.func @transform_2(%arg0: i32) -> (i32, i32, i32) {
    %c0_i32 = arith.constant 0 : i32
    %c0_i32_0 = arith.constant 0 : i32
    %c0_i32_1 = arith.constant 0 : i32
    return %c0_i32, %c0_i32_0, %arg0 : i32, i32, i32
  }
}

</mosaic_0001>

<llo_original>
// kernel: tpu_custom_call.1
$region0: #{tpu_custom_call.1}
  #allocation0 [shape = 'u32[]', space=smem, size = 0x4, offset = 0x4, fixed_abs, tag = 'smem constant byte address 0x4 - core index']
  #allocation1 [shape = 'u32[144,128]{1,0:T(1,128)}', space=vmem, size = 0x12000, scoped, tag = 'internal scratch']
  %s0 = inlined_call_operand.hbm [shape: f32[12,128], index: 0, kind: input, shape index: {}]
  %s1 = inlined_call_operand.hbm [shape: f32[3,16,128], index: 1, kind: input, shape index: {}]
  %s2 = inlined_call_operand.vmem [shape: f32[8,3,128], index: 2, kind: output, shape index: {}]
  %s3 = sld [smem:[#allocation0]]
  $region26: #{tpu_custom_call.1} parent=0
    _
  %s5 = ssub.s32 1, %s3
  %s6 = scalar_select 0, %s5, %s3
  $region1: #{tpu_custom_call.1} parent=0
    #allocation2 [shape = 'u8[8192]{0}', space=vmem, size = 0x2000, scoped, tag = 'input window, operand 0, single buffered']
    #allocation3 [shape = 's32[1]{0}', space=sflag, size = 0x4, scoped, tag = 'scoped memory for tpu_custom_call.1']
    #allocation4 [shape = 'u8[24576]{0}', space=vmem, size = 0x6000, scoped, tag = 'input window, operand 1, single buffered']
    #allocation5 [shape = 's32[1]{0}', space=sflag, size = 0x4, scoped, tag = 'scoped memory for tpu_custom_call.1']
    %7 = vsyncpa [#allocation3], 0
    %8 = vsyncpa [#allocation5], 0
    // Predicated region
    $region2: #{tpu_custom_call.1} parent=1 // pred_check
      _
    $region3: #{tpu_custom_call.1} parent=1 // pred_check_branch
      %10 = sbr.rel (0) target = $region5
    $region4: #{tpu_custom_call.1} parent=1 // pred_region
      %s12 = ssub.s32 256, 256
      %13 = vsyncadd [#allocation3], %s12
      %s14 = sshll.u32 [#allocation2], 4
      %s15 = int_to_ptr.vmem [resolvable:$true] %s14
      %20 = dma.hbm_to_vmem [thread:$0]  %s0, 256, %s15, [#allocation3], 128, 128, 8
    $region5: #{tpu_custom_call.1} parent=1 // pred_fallthru
      _
    // Predicated region
    $region6: #{tpu_custom_call.1} parent=1 // pred_check
      _
    $region7: #{tpu_custom_call.1} parent=1 // pred_check_branch
      %22 = sbr.rel (0) target = $region9
    $region8: #{tpu_custom_call.1} parent=1 // pred_region
      %s24 = ssub.s32 768, 768
      %25 = vsyncadd [#allocation5], %s24
      %s26 = sshll.u32 [#allocation4], 4
      %s27 = int_to_ptr.vmem [resolvable:$true] %s26
      %32 = dma.hbm_to_vmem [thread:$0]  %s1, 768, %s27, [#allocation5], 128, 128, 8
    $region9: #{tpu_custom_call.1} parent=1 // pred_fallthru
      _
    // Predicated region
    $region10: #{tpu_custom_call.1} parent=1 // pred_check
      _
    $region11: #{tpu_custom_call.1} parent=1 // pred_check_branch
      %34 = sbr.rel (0) target = $region13
    $region12: #{tpu_custom_call.1} parent=1 // pred_region
      %35 = dma.done [#allocation3], 256
    $region13: #{tpu_custom_call.1} parent=1 // pred_fallthru
      _
    // Predicated region
    $region14: #{tpu_custom_call.1} parent=1 // pred_check
      _
    $region15: #{tpu_custom_call.1} parent=1 // pred_check_branch
      %37 = sbr.rel (0) target = $region17
    $region16: #{tpu_custom_call.1} parent=1 // pred_region
      %38 = dma.done [#allocation5], 768
    $region17: #{tpu_custom_call.1} parent=1 // pred_fallthru
      _
    %v39 = vld [vmem:[#allocation2] sm:$0xff]
    %v40 = vld [vmem:[#allocation2 + $0x8] sm:$0xf]
    %v41 = vld [vmem:[#allocation4] sm:$0xff]
    %v42 = vld [vmem:[#allocation4 + $0x8] sm:$0xff]
    %v43 = vld [vmem:[#allocation4 + $0x10] sm:$0xff]
    %v44 = vld [vmem:[#allocation4 + $0x18] sm:$0xff]
    %v45 = vld [vmem:[#allocation4 + $0x20] sm:$0xff]
    %v46 = vld [vmem:[#allocation4 + $0x28] sm:$0xff]
    %v47 = vlaneseq
    %v48 = vshrl.u32 %v47, 7
    %v49 = vadd.s32 %v48, 8
    %v50 = vcvt.s32.f32 %v48
    %v51 = vcvt.s32.f32 %v49
    %v52 = vrcp.pop 15.0
    %v53 = vmul.f32 %v50, %v52
    %v54 = vmul.f32 %v51, %v52
    %v55 = vlaneseq
    %v56 = vshrl.u32 %v55, 7
    %v57 = vsub.s32 0, %v56
    %v58 = vrot.slane %v39, %v57
    %vm59 = vcmp.ge.f32.partialorder %v53, %v58
    %vm60 = vcmp.ge.f32.partialorder %v54, %v58
    %v61 = vlaneseq
    %v62 = vshrl.u32 %v61, 7
    %v63 = vsub.s32 1, %v62
    %v64 = vrot.slane %v39, %v63
    %vm65 = vcmp.lt.f32.partialorder %v53, %v64
    %vm66 = vcmp.lt.f32.partialorder %v54, %v64
    %vm67 = vmand %vm59, %vm65
    %vm68 = vmand %vm60, %vm66
    %v69 = vsel %vm67, 1, 0
    %v70 = vsel %vm68, 1, 0
    %v71 = vcvt.s32.f32 %v69
    %v72 = vcvt.s32.f32 %v70
    %vm73 = vcmp.ge.f32.partialorder %v53, %v64
    %vm74 = vcmp.ge.f32.partialorder %v54, %v64
    %v75 = vlaneseq
    %v76 = vshrl.u32 %v75, 7
    %v77 = vsub.s32 2, %v76
    %v78 = vrot.slane %v39, %v77
    %vm79 = vcmp.lt.f32.partialorder %v53, %v78
    %vm80 = vcmp.lt.f32.partialorder %v54, %v78
    %vm81 = vmand %vm73, %vm79
    %vm82 = vmand %vm74, %vm80
    %v83 = vsel %vm81, 1, 0
    %v84 = vsel %vm82, 1, 0
    %v85 = vcvt.s32.f32 %v83
    %v86 = vcvt.s32.f32 %v84
    %vm87 = vcmp.ge.f32.partialorder %v53, %v78
    %vm88 = vcmp.ge.f32.partialorder %v54, %v78
    %v89 = vlaneseq
    %v90 = vshrl.u32 %v89, 7
    %v91 = vsub.s32 3, %v90
    %v92 = vrot.slane %v39, %v91
    %vm93 = vcmp.lt.f32.partialorder %v53, %v92
    %vm94 = vcmp.lt.f32.partialorder %v54, %v92
    %vm95 = vmand %vm87, %vm93
    %vm96 = vmand %vm88, %vm94
    %v97 = vsel %vm95, 1, 0
    %v98 = vsel %vm96, 1, 0
    %v99 = vcvt.s32.f32 %v97
    %v100 = vcvt.s32.f32 %v98
    %vm101 = vcmp.ge.f32.partialorder %v53, %v92
    %vm102 = vcmp.ge.f32.partialorder %v54, %v92
    %v103 = vlaneseq
    %v104 = vshrl.u32 %v103, 7
    %v105 = vsub.s32 4, %v104
    %v106 = vrot.slane %v39, %v105
    %vm107 = vcmp.lt.f32.partialorder %v53, %v106
    %vm108 = vcmp.lt.f32.partialorder %v54, %v106
    %vm109 = vmand %vm101, %vm107
    %vm110 = vmand %vm102, %vm108
    %v111 = vsel %vm109, 1, 0
    %v112 = vsel %vm110, 1, 0
    %v113 = vcvt.s32.f32 %v111
    %v114 = vcvt.s32.f32 %v112
    %vm115 = vcmp.ge.f32.partialorder %v53, %v106
    %vm116 = vcmp.ge.f32.partialorder %v54, %v106
    %v117 = vlaneseq
    %v118 = vshrl.u32 %v117, 7
    %v119 = vsub.s32 5, %v118
    %v120 = vrot.slane %v39, %v119
    %vm121 = vcmp.lt.f32.partialorder %v53, %v120
    %vm122 = vcmp.lt.f32.partialorder %v54, %v120
    %vm123 = vmand %vm115, %vm121
    %vm124 = vmand %vm116, %vm122
    %v125 = vsel %vm123, 1, 0
    %v126 = vsel %vm124, 1, 0
    %v127 = vcvt.s32.f32 %v125
    %v128 = vcvt.s32.f32 %v126
    %vm129 = vcmp.ge.f32.partialorder %v53, %v120
    %vm130 = vcmp.ge.f32.partialorder %v54, %v120
    %v131 = vlaneseq
    %v132 = vshrl.u32 %v131, 7
    %v133 = vsub.s32 6, %v132
    %v134 = vrot.slane %v39, %v133
    %vm135 = vcmp.lt.f32.partialorder %v53, %v134
    %vm136 = vcmp.lt.f32.partialorder %v54, %v134
    %vm137 = vmand %vm129, %vm135
    %vm138 = vmand %vm130, %vm136
    %v139 = vsel %vm137, 1, 0
    %v140 = vsel %vm138, 1, 0
    %v141 = vcvt.s32.f32 %v139
    %v142 = vcvt.s32.f32 %v140
    %vm143 = vcmp.ge.f32.partialorder %v53, %v134
    %vm144 = vcmp.ge.f32.partialorder %v54, %v134
    %v145 = vlaneseq
    %v146 = vshrl.u32 %v145, 7
    %v147 = vsub.s32 7, %v146
    %v148 = vrot.slane %v39, %v147
    %vm149 = vcmp.lt.f32.partialorder %v53, %v148
    %vm150 = vcmp.lt.f32.partialorder %v54, %v148
    %vm151 = vmand %vm143, %vm149
    %vm152 = vmand %vm144, %vm150
    %v153 = vsel %vm151, 1, 0
    %v154 = vsel %vm152, 1, 0
    %v155 = vcvt.s32.f32 %v153
    %v156 = vcvt.s32.f32 %v154
    %vm157 = vcmp.ge.f32.partialorder %v53, %v148
    %vm158 = vcmp.ge.f32.partialorder %v54, %v148
    %v159 = vlaneseq
    %v160 = vshrl.u32 %v159, 7
    %v161 = vsub.s32 0, %v160
    %v162 = vrot.slane %v40, %v161
    %vm163 = vcmp.lt.f32.partialorder %v53, %v162
    %vm164 = vcmp.lt.f32.partialorder %v54, %v162
    %vm165 = vmand %vm157, %vm163
    %vm166 = vmand %vm158, %vm164
    %v167 = vsel %vm165, 1, 0
    %v168 = vsel %vm166, 1, 0
    %v169 = vcvt.s32.f32 %v167
    %v170 = vcvt.s32.f32 %v168
    %vm171 = vcmp.ge.f32.partialorder %v53, %v162
    %vm172 = vcmp.ge.f32.partialorder %v54, %v162
    %v173 = vlaneseq
    %v174 = vshrl.u32 %v173, 7
    %v175 = vsub.s32 1, %v174
    %v176 = vrot.slane %v40, %v175
    %vm177 = vcmp.lt.f32.partialorder %v53, %v176
    %vm178 = vcmp.lt.f32.partialorder %v54, %v176
    %vm179 = vmand %vm171, %vm177
    %vm180 = vmand %vm172, %vm178
    %v181 = vsel %vm179, 1, 0
    %v182 = vsel %vm180, 1, 0
    %v183 = vcvt.s32.f32 %v181
    %v184 = vcvt.s32.f32 %v182
    %vm185 = vcmp.ge.f32.partialorder %v53, %v176
    %vm186 = vcmp.ge.f32.partialorder %v54, %v176
    %v187 = vlaneseq
    %v188 = vshrl.u32 %v187, 7
    %v189 = vsub.s32 2, %v188
    %v190 = vrot.slane %v40, %v189
    %vm191 = vcmp.lt.f32.partialorder %v53, %v190
    %vm192 = vcmp.lt.f32.partialorder %v54, %v190
    %vm193 = vmand %vm185, %vm191
    %vm194 = vmand %vm186, %vm192
    %v195 = vsel %vm193, 1, 0
    %v196 = vsel %vm194, 1, 0
    %v197 = vcvt.s32.f32 %v195
    %v198 = vcvt.s32.f32 %v196
    %vm199 = vcmp.ge.f32.partialorder %v53, %v190
    %vm200 = vcmp.ge.f32.partialorder %v54, %v190
    %v201 = vlaneseq
    %v202 = vshrl.u32 %v201, 7
    %v203 = vsub.s32 3, %v202
    %v204 = vrot.slane %v40, %v203
    %vm205 = vcmp.lt.f32.partialorder %v53, %v204
    %vm206 = vcmp.lt.f32.partialorder %v54, %v204
    %vm207 = vmand %vm199, %vm205
    %vm208 = vmand %vm200, %vm206
    %v209 = vsel %vm207, 1, 0
    %v210 = vsel %vm208, 1, 0
    %v211 = vcvt.s32.f32 %v209
    %v212 = vcvt.s32.f32 %v210
    %v214 = vrot.slane %v39, 7
    %v216 = vsub.f32 %v39, %v214
    %v217 = vmax.f32 %v216, 1e-06
    %v218 = vrcp.pop %v217
    %v219 = vmul.f32 1.0, %v218
    %v220 = vsub.f32 %v53, %v58
    %v221 = vsub.f32 %v54, %v58
    %v222 = vlaneseq
    %v223 = vshrl.u32 %v222, 7
    %v224 = vsub.s32 1, %v223
    %v225 = vrot.slane %v219, %v224
    %v226 = vmul.f32 %v220, %v225
    %v227 = vmul.f32 %v221, %v225
    %v228 = vmul.f32 %v226, %v71
    %v229 = vmul.f32 %v227, %v72
    %v230 = vsub.f32 %v78, %v53
    %v231 = vsub.f32 %v78, %v54
    %v232 = vlaneseq
    %v233 = vshrl.u32 %v232, 7
    %v234 = vsub.s32 2, %v233
    %v235 = vrot.slane %v219, %v234
    %v236 = vmul.f32 %v230, %v235
    %v237 = vmul.f32 %v231, %v235
    %v238 = vmul.f32 %v236, %v85
    %v239 = vmul.f32 %v237, %v86
    %v240 = vadd.f32 %v228, %v238
    %v241 = vadd.f32 %v229, %v239
    %v242 = vsub.f32 %v53, %v64
    %v243 = vsub.f32 %v54, %v64
    %v244 = vmul.f32 %v242, %v235
    %v245 = vmul.f32 %v243, %v235
    %v246 = vmul.f32 %v244, %v85
    %v247 = vmul.f32 %v245, %v86
    %v248 = vsub.f32 %v92, %v53
    %v249 = vsub.f32 %v92, %v54
    %v250 = vlaneseq
    %v251 = vshrl.u32 %v250, 7
    %v252 = vsub.s32 3, %v251
    %v253 = vrot.slane %v219, %v252
    %v254 = vmul.f32 %v248, %v253
    %v255 = vmul.f32 %v249, %v253
    %v256 = vmul.f32 %v254, %v99
    %v257 = vmul.f32 %v255, %v100
    %v258 = vadd.f32 %v246, %v256
    %v259 = vadd.f32 %v247, %v257
    %v260 = vsub.f32 %v53, %v78
    %v261 = vsub.f32 %v54, %v78
    %v262 = vmul.f32 %v260, %v253
    %v263 = vmul.f32 %v261, %v253
    %v264 = vmul.f32 %v262, %v99
    %v265 = vmul.f32 %v263, %v100
    %v266 = vsub.f32 %v106, %v53
    %v267 = vsub.f32 %v106, %v54
    %v268 = vlaneseq
    %v269 = vshrl.u32 %v268, 7
    %v270 = vsub.s32 4, %v269
    %v271 = vrot.slane %v219, %v270
    %v272 = vmul.f32 %v266, %v271
    %v273 = vmul.f32 %v267, %v271
    %v274 = vmul.f32 %v272, %v113
    %v275 = vmul.f32 %v273, %v114
    %v276 = vadd.f32 %v264, %v274
    %v277 = vadd.f32 %v265, %v275
    %v278 = vsub.f32 %v53, %v92
    %v279 = vsub.f32 %v54, %v92
    %v280 = vmul.f32 %v278, %v271
    %v281 = vmul.f32 %v279, %v271
    %v282 = vmul.f32 %v280, %v113
    %v283 = vmul.f32 %v281, %v114
    %v284 = vsub.f32 %v120, %v53
    %v285 = vsub.f32 %v120, %v54
    %v286 = vlaneseq
    %v287 = vshrl.u32 %v286, 7
    %v288 = vsub.s32 5, %v287
    %v289 = vrot.slane %v219, %v288
    %v290 = vmul.f32 %v284, %v289
    %v291 = vmul.f32 %v285, %v289
    %v292 = vmul.f32 %v290, %v127
    %v293 = vmul.f32 %v291, %v128
    %v294 = vadd.f32 %v282, %v292
    %v295 = vadd.f32 %v283, %v293
    %v296 = vsub.f32 %v53, %v106
    %v297 = vsub.f32 %v54, %v106
    %v298 = vmul.f32 %v296, %v289
    %v299 = vmul.f32 %v297, %v289
    %v300 = vmul.f32 %v298, %v127
    %v301 = vmul.f32 %v299, %v128
    %v302 = vsub.f32 %v134, %v53
    %v303 = vsub.f32 %v134, %v54
    %v304 = vlaneseq
    %v305 = vshrl.u32 %v304, 7
    %v306 = vsub.s32 6, %v305
    %v307 = vrot.slane %v219, %v306
    %v308 = vmul.f32 %v302, %v307
    %v309 = vmul.f32 %v303, %v307
    %v310 = vmul.f32 %v308, %v141
    %v311 = vmul.f32 %v309, %v142
    %v312 = vadd.f32 %v300, %v310
    %v313 = vadd.f32 %v301, %v311
    %v314 = vsub.f32 %v53, %v120
    %v315 = vsub.f32 %v54, %v120
    %v316 = vmul.f32 %v314, %v307
    %v317 = vmul.f32 %v315, %v307
    %v318 = vmul.f32 %v316, %v141
    %v319 = vmul.f32 %v317, %v142
    %v320 = vsub.f32 %v148, %v53
    %v321 = vsub.f32 %v148, %v54
    %v322 = vlaneseq
    %v323 = vshrl.u32 %v322, 7
    %v324 = vsub.s32 7, %v323
    %v325 = vrot.slane %v219, %v324
    %v326 = vmul.f32 %v320, %v325
    %v327 = vmul.f32 %v321, %v325
    %v328 = vmul.f32 %v326, %v155
    %v329 = vmul.f32 %v327, %v156
    %v330 = vadd.f32 %v318, %v328
    %v331 = vadd.f32 %v319, %v329
    %v332 = vsub.f32 %v40, %v214
    %v333 = vmax.f32 %v332, 1e-06
    %v334 = vrcp.pop %v333
    %v335 = vmul.f32 1.0, %v334
    %v336 = vsub.f32 %v53, %v134
    %v337 = vsub.f32 %v54, %v134
    %v338 = vmul.f32 %v336, %v325
    %v339 = vmul.f32 %v337, %v325
    %v340 = vmul.f32 %v338, %v155
    %v341 = vmul.f32 %v339, %v156
    %v342 = vsub.f32 %v162, %v53
    %v343 = vsub.f32 %v162, %v54
    %v344 = vlaneseq
    %v345 = vshrl.u32 %v344, 7
    %v346 = vsub.s32 0, %v345
    %v347 = vrot.slane %v335, %v346
    %v348 = vmul.f32 %v342, %v347
    %v349 = vmul.f32 %v343, %v347
    %v350 = vmul.f32 %v348, %v169
    %v351 = vmul.f32 %v349, %v170
    %v352 = vadd.f32 %v340, %v350
    %v353 = vadd.f32 %v341, %v351
    %v355 = vrot.slane %v40, 7
    %v357 = vsub.f32 %v40, %v355
    %v358 = vmax.f32 %v357, 1e-06
    %v359 = vrcp.pop %v358
    %v360 = vmul.f32 1.0, %v359
    %v361 = vsub.f32 %v53, %v148
    %v362 = vsub.f32 %v54, %v148
    %v363 = vmul.f32 %v361, %v347
    %v364 = vmul.f32 %v362, %v347
    %v365 = vmul.f32 %v363, %v169
    %v366 = vmul.f32 %v364, %v170
    %v367 = vsub.f32 %v176, %v53
    %v368 = vsub.f32 %v176, %v54
    %v369 = vlaneseq
    %v370 = vshrl.u32 %v369, 7
    %v371 = vsub.s32 1, %v370
    %v372 = vrot.slane %v360, %v371
    %v373 = vmul.f32 %v367, %v372
    %v374 = vmul.f32 %v368, %v372
    %v375 = vmul.f32 %v373, %v183
    %v376 = vmul.f32 %v374, %v184
    %v377 = vadd.f32 %v365, %v375
    %v378 = vadd.f32 %v366, %v376
    %v379 = vsub.f32 %v53, %v162
    %v380 = vsub.f32 %v54, %v162
    %v381 = vmul.f32 %v379, %v372
    %v382 = vmul.f32 %v380, %v372
    %v383 = vmul.f32 %v381, %v183
    %v384 = vmul.f32 %v382, %v184
    %v385 = vsub.f32 %v190, %v53
    %v386 = vsub.f32 %v190, %v54
    %v387 = vlaneseq
    %v388 = vshrl.u32 %v387, 7
    %v389 = vsub.s32 2, %v388
    %v390 = vrot.slane %v360, %v389
    %v391 = vmul.f32 %v385, %v390
    %v392 = vmul.f32 %v386, %v390
    %v393 = vmul.f32 %v391, %v197
    %v394 = vmul.f32 %v392, %v198
    %v395 = vadd.f32 %v383, %v393
    %v396 = vadd.f32 %v384, %v394
    %v397 = vsub.f32 %v53, %v176
    %v398 = vsub.f32 %v54, %v176
    %v399 = vmul.f32 %v397, %v390
    %v400 = vmul.f32 %v398, %v390
    %v401 = vmul.f32 %v399, %v197
    %v402 = vmul.f32 %v400, %v198
    %v403 = vsub.f32 %v204, %v53
    %v404 = vsub.f32 %v204, %v54
    %v405 = vlaneseq
    %v406 = vshrl.u32 %v405, 7
    %v407 = vsub.s32 3, %v406
    %v408 = vrot.slane %v360, %v407
    %v409 = vmul.f32 %v403, %v408
    %v410 = vmul.f32 %v404, %v408
    %v411 = vmul.f32 %v409, %v211
    %v412 = vmul.f32 %v410, %v212
    %v413 = vadd.f32 %v401, %v411
    %v414 = vadd.f32 %v402, %v412
    %v415 = vrot.slane %v39, 6
    %v417 = vsub.f32 %v39, %v415
    %v418 = vmax.f32 %v417, 1e-06
    %v419 = vrcp.pop %v418
    %v420 = vmul.f32 1.0, %v419
    %v421 = vlaneseq
    %v422 = vshrl.u32 %v421, 7
    %v423 = vsub.s32 2, %v422
    %v424 = vrot.slane %v420, %v423
    %v425 = vmul.f32 %v220, %v424
    %v426 = vmul.f32 %v221, %v424
    %v427 = vmul.f32 %v425, %v240
    %v428 = vmul.f32 %v426, %v241
    %v429 = vlaneseq
    %v430 = vshrl.u32 %v429, 7
    %v431 = vsub.s32 3, %v430
    %v432 = vrot.slane %v420, %v431
    %v433 = vmul.f32 %v248, %v432
    %v434 = vmul.f32 %v249, %v432
    %v435 = vmul.f32 %v433, %v258
    %v436 = vmul.f32 %v434, %v259
    %v437 = vadd.f32 %v427, %v435
    %v438 = vadd.f32 %v428, %v436
    %v439 = vmul.f32 %v242, %v432
    %v440 = vmul.f32 %v243, %v432
    %v441 = vmul.f32 %v439, %v258
    %v442 = vmul.f32 %v440, %v259
    %v443 = vlaneseq
    %v444 = vshrl.u32 %v443, 7
    %v445 = vsub.s32 4, %v444
    %v446 = vrot.slane %v420, %v445
    %v447 = vmul.f32 %v266, %v446
    %v448 = vmul.f32 %v267, %v446
    %v449 = vmul.f32 %v447, %v276
    %v450 = vmul.f32 %v448, %v277
    %v451 = vadd.f32 %v441, %v449
    %v452 = vadd.f32 %v442, %v450
    %v453 = vmul.f32 %v260, %v446
    %v454 = vmul.f32 %v261, %v446
    %v455 = vmul.f32 %v453, %v276
    %v456 = vmul.f32 %v454, %v277
    %v457 = vlaneseq
    %v458 = vshrl.u32 %v457, 7
    %v459 = vsub.s32 5, %v458
    %v460 = vrot.slane %v420, %v459
    %v461 = vmul.f32 %v284, %v460
    %v462 = vmul.f32 %v285, %v460
    %v463 = vmul.f32 %v461, %v294
    %v464 = vmul.f32 %v462, %v295
    %v465 = vadd.f32 %v455, %v463
    %v466 = vadd.f32 %v456, %v464
    %v467 = vmul.f32 %v278, %v460
    %v468 = vmul.f32 %v279, %v460
    %v469 = vmul.f32 %v467, %v294
    %v470 = vmul.f32 %v468, %v295
    %v471 = vlaneseq
    %v472 = vshrl.u32 %v471, 7
    %v473 = vsub.s32 6, %v472
    %v474 = vrot.slane %v420, %v473
    %v475 = vmul.f32 %v302, %v474
    %v476 = vmul.f32 %v303, %v474
    %v477 = vmul.f32 %v475, %v312
    %v478 = vmul.f32 %v476, %v313
    %v479 = vadd.f32 %v469, %v477
    %v480 = vadd.f32 %v470, %v478
    %v481 = vmul.f32 %v296, %v474
    %v482 = vmul.f32 %v297, %v474
    %v483 = vmul.f32 %v481, %v312
    %v484 = vmul.f32 %v482, %v313
    %v485 = vlaneseq
    %v486 = vshrl.u32 %v485, 7
    %v487 = vsub.s32 7, %v486
    %v488 = vrot.slane %v420, %v487
    %v489 = vmul.f32 %v320, %v488
    %v490 = vmul.f32 %v321, %v488
    %v491 = vmul.f32 %v489, %v330
    %v492 = vmul.f32 %v490, %v331
    %v493 = vadd.f32 %v483, %v491
    %v494 = vadd.f32 %v484, %v492
    %v495 = vsub.f32 %v40, %v415
    %v496 = vmax.f32 %v495, 1e-06
    %v497 = vrcp.pop %v496
    %v498 = vmul.f32 1.0, %v497
    %v499 = vmul.f32 %v314, %v488
    %v500 = vmul.f32 %v315, %v488
    %v501 = vmul.f32 %v499, %v330
    %v502 = vmul.f32 %v500, %v331
    %v503 = vlaneseq
    %v504 = vshrl.u32 %v503, 7
    %v505 = vsub.s32 0, %v504
    %v506 = vrot.slane %v498, %v505
    %v507 = vmul.f32 %v342, %v506
    %v508 = vmul.f32 %v343, %v506
    %v509 = vmul.f32 %v507, %v352
    %v510 = vmul.f32 %v508, %v353
    %v511 = vadd.f32 %v501, %v509
    %v512 = vadd.f32 %v502, %v510
    %v513 = vmul.f32 %v336, %v506
    %v514 = vmul.f32 %v337, %v506
    %v515 = vmul.f32 %v513, %v352
    %v516 = vmul.f32 %v514, %v353
    %v517 = vlaneseq
    %v518 = vshrl.u32 %v517, 7
    %v519 = vsub.s32 1, %v518
    %v520 = vrot.slane %v498, %v519
    %v521 = vmul.f32 %v367, %v520
    %v522 = vmul.f32 %v368, %v520
    %v523 = vmul.f32 %v521, %v377
    %v524 = vmul.f32 %v522, %v378
    %v525 = vadd.f32 %v515, %v523
    %v526 = vadd.f32 %v516, %v524
    %v527 = vrot.slane %v40, 6
    %v529 = vsub.f32 %v40, %v527
    %v530 = vmax.f32 %v529, 1e-06
    %v531 = vrcp.pop %v530
    %v532 = vmul.f32 1.0, %v531
    %v533 = vmul.f32 %v361, %v520
    %v534 = vmul.f32 %v362, %v520
    %v535 = vmul.f32 %v533, %v377
    %v536 = vmul.f32 %v534, %v378
    %v537 = vlaneseq
    %v538 = vshrl.u32 %v537, 7
    %v539 = vsub.s32 2, %v538
    %v540 = vrot.slane %v532, %v539
    %v541 = vmul.f32 %v385, %v540
    %v542 = vmul.f32 %v386, %v540
    %v543 = vmul.f32 %v541, %v395
    %v544 = vmul.f32 %v542, %v396
    %v545 = vadd.f32 %v535, %v543
    %v546 = vadd.f32 %v536, %v544
    %v547 = vmul.f32 %v379, %v540
    %v548 = vmul.f32 %v380, %v540
    %v549 = vmul.f32 %v547, %v395
    %v550 = vmul.f32 %v548, %v396
    %v551 = vlaneseq
    %v552 = vshrl.u32 %v551, 7
    %v553 = vsub.s32 3, %v552
    %v554 = vrot.slane %v532, %v553
    %v555 = vmul.f32 %v403, %v554
    %v556 = vmul.f32 %v404, %v554
    %v557 = vmul.f32 %v555, %v413
    %v558 = vmul.f32 %v556, %v414
    %v559 = vadd.f32 %v549, %v557
    %v560 = vadd.f32 %v550, %v558
    %v561 = vrot.slane %v39, 5
    %v563 = vsub.f32 %v39, %v561
    %v564 = vmax.f32 %v563, 1e-06
    %v565 = vrcp.pop %v564
    %v566 = vmul.f32 1.0, %v565
    %v567 = vlaneseq
    %v568 = vshrl.u32 %v567, 7
    %v569 = vsub.s32 3, %v568
    %v570 = vrot.slane %v566, %v569
    %v571 = vmul.f32 %v220, %v570
    %v572 = vmul.f32 %v221, %v570
    %v573 = vmul.f32 %v571, %v437
    %v574 = vmul.f32 %v572, %v438
    %v575 = vlaneseq
    %v576 = vshrl.u32 %v575, 7
    %v577 = vsub.s32 4, %v576
    %v578 = vrot.slane %v566, %v577
    %v579 = vmul.f32 %v266, %v578
    %v580 = vmul.f32 %v267, %v578
    %v581 = vmul.f32 %v579, %v451
    %v582 = vmul.f32 %v580, %v452
    %v583 = vadd.f32 %v573, %v581
    %v584 = vadd.f32 %v574, %v582
    %v585 = vmul.f32 %v242, %v578
    %v586 = vmul.f32 %v243, %v578
    %v587 = vmul.f32 %v585, %v451
    %v588 = vmul.f32 %v586, %v452
    %v589 = vlaneseq
    %v590 = vshrl.u32 %v589, 7
    %v591 = vsub.s32 5, %v590
    %v592 = vrot.slane %v566, %v591
    %v593 = vmul.f32 %v284, %v592
    %v594 = vmul.f32 %v285, %v592
    %v595 = vmul.f32 %v593, %v465
    %v596 = vmul.f32 %v594, %v466
    %v597 = vadd.f32 %v587, %v595
    %v598 = vadd.f32 %v588, %v596
    %v599 = vmul.f32 %v260, %v592
    %v600 = vmul.f32 %v261, %v592
    %v601 = vmul.f32 %v599, %v465
    %v602 = vmul.f32 %v600, %v466
    %v603 = vlaneseq
    %v604 = vshrl.u32 %v603, 7
    %v605 = vsub.s32 6, %v604
    %v606 = vrot.slane %v566, %v605
    %v607 = vmul.f32 %v302, %v606
    %v608 = vmul.f32 %v303, %v606
    %v609 = vmul.f32 %v607, %v479
    %v610 = vmul.f32 %v608, %v480
    %v611 = vadd.f32 %v601, %v609
    %v612 = vadd.f32 %v602, %v610
    %v613 = vmul.f32 %v278, %v606
    %v614 = vmul.f32 %v279, %v606
    %v615 = vmul.f32 %v613, %v479
    %v616 = vmul.f32 %v614, %v480
    %v617 = vlaneseq
    %v618 = vshrl.u32 %v617, 7
    %v619 = vsub.s32 7, %v618
    %v620 = vrot.slane %v566, %v619
    %v621 = vmul.f32 %v320, %v620
    %v622 = vmul.f32 %v321, %v620
    %v623 = vmul.f32 %v621, %v493
    %v624 = vmul.f32 %v622, %v494
    %v625 = vadd.f32 %v615, %v623
    %v626 = vadd.f32 %v616, %v624
    %v627 = vsub.f32 %v40, %v561
    %v628 = vmax.f32 %v627, 1e-06
    %v629 = vrcp.pop %v628
    %v630 = vmul.f32 1.0, %v629
    %v631 = vmul.f32 %v296, %v620
    %v632 = vmul.f32 %v297, %v620
    %v633 = vmul.f32 %v631, %v493
    %v634 = vmul.f32 %v632, %v494
    %v635 = vlaneseq
    %v636 = vshrl.u32 %v635, 7
    %v637 = vsub.s32 0, %v636
    %v638 = vrot.slane %v630, %v637
    %v639 = vmul.f32 %v342, %v638
    %v640 = vmul.f32 %v343, %v638
    %v641 = vmul.f32 %v639, %v511
    %v642 = vmul.f32 %v640, %v512
    %v643 = vadd.f32 %v633, %v641
    %v644 = vadd.f32 %v634, %v642
    %v645 = vmul.f32 %v314, %v638
    %v646 = vmul.f32 %v315, %v638
    %v647 = vmul.f32 %v645, %v511
    %v648 = vmul.f32 %v646, %v512
    %v649 = vlaneseq
    %v650 = vshrl.u32 %v649, 7
    %v651 = vsub.s32 1, %v650
    %v652 = vrot.slane %v630, %v651
    %v653 = vmul.f32 %v367, %v652
    %v654 = vmul.f32 %v368, %v652
    %v655 = vmul.f32 %v653, %v525
    %v656 = vmul.f32 %v654, %v526
    %v657 = vadd.f32 %v647, %v655
    %v658 = vadd.f32 %v648, %v656
    %v659 = vmul.f32 %v336, %v652
    %v660 = vmul.f32 %v337, %v652
    %v661 = vmul.f32 %v659, %v525
    %v662 = vmul.f32 %v660, %v526
    %v663 = vlaneseq
    %v664 = vshrl.u32 %v663, 7
    %v665 = vsub.s32 2, %v664
    %v666 = vrot.slane %v630, %v665
    %v667 = vmul.f32 %v385, %v666
    %v668 = vmul.f32 %v386, %v666
    %v669 = vmul.f32 %v667, %v545
    %v670 = vmul.f32 %v668, %v546
    %v671 = vadd.f32 %v661, %v669
    %v672 = vadd.f32 %v662, %v670
    %v673 = vrot.slane %v40, 5
    %v675 = vsub.f32 %v40, %v673
    %v676 = vmax.f32 %v675, 1e-06
    %v677 = vrcp.pop %v676
    %v678 = vmul.f32 1.0, %v677
    %v679 = vmul.f32 %v361, %v666
    %v680 = vmul.f32 %v362, %v666
    %v681 = vmul.f32 %v679, %v545
    %v682 = vmul.f32 %v680, %v546
    %v683 = vlaneseq
    %v684 = vshrl.u32 %v683, 7
    %v685 = vsub.s32 3, %v684
    %v686 = vrot.slane %v678, %v685
    %v687 = vmul.f32 %v403, %v686
    %v688 = vmul.f32 %v404, %v686
    %v689 = vmul.f32 %v687, %v559
    %v690 = vmul.f32 %v688, %v560
    %v691 = vadd.f32 %v681, %v689
    %v692 = vadd.f32 %v682, %v690
    %v693 = vmul.f32 %v583, %v583
    %v694 = vmul.f32 %v584, %v584
    %v695 = vadd.f32 %v693, %v694
    %v696 = vrot.slane %v695, 4
    %v697 = vadd.f32 %v695, %v696
    %v698 = vrot.slane %v697, 2
    %v699 = vadd.f32 %v697, %v698
    %v700 = vrot.slane %v699, 1
    %v701 = vadd.f32 %v699, %v700
    %v702 = vmul.f32 %v583, %v597
    %v703 = vmul.f32 %v584, %v598
    %v704 = vadd.f32 %v702, %v703
    %v705 = vrot.slane %v704, 4
    %v706 = vadd.f32 %v704, %v705
    %v707 = vrot.slane %v706, 2
    %v708 = vadd.f32 %v706, %v707
    %v709 = vrot.slane %v708, 1
    %v710 = vadd.f32 %v708, %v709
    %v711 = vmul.f32 %v583, %v611
    %v712 = vmul.f32 %v584, %v612
    %v713 = vadd.f32 %v711, %v712
    %v714 = vrot.slane %v713, 4
    %v715 = vadd.f32 %v713, %v714
    %v716 = vrot.slane %v715, 2
    %v717 = vadd.f32 %v715, %v716
    %v718 = vrot.slane %v717, 1
    %v719 = vadd.f32 %v717, %v718
    %v720 = vmul.f32 %v583, %v625
    %v721 = vmul.f32 %v584, %v626
    %v722 = vadd.f32 %v720, %v721
    %v723 = vrot.slane %v722, 4
    %v724 = vadd.f32 %v722, %v723
    %v725 = vrot.slane %v724, 2
    %v726 = vadd.f32 %v724, %v725
    %v727 = vrot.slane %v726, 1
    %v728 = vadd.f32 %v726, %v727
    %v729 = vmul.f32 %v583, %v643
    %v730 = vmul.f32 %v584, %v644
    %v731 = vadd.f32 %v729, %v730
    %v732 = vrot.slane %v731, 4
    %v733 = vadd.f32 %v731, %v732
    %v734 = vrot.slane %v733, 2
    %v735 = vadd.f32 %v733, %v734
    %v736 = vrot.slane %v735, 1
    %v737 = vadd.f32 %v735, %v736
    %v738 = vmul.f32 %v583, %v657
    %v739 = vmul.f32 %v584, %v658
    %v740 = vadd.f32 %v738, %v739
    %v741 = vrot.slane %v740, 4
    %v742 = vadd.f32 %v740, %v741
    %v743 = vrot.slane %v742, 2
    %v744 = vadd.f32 %v742, %v743
    %v745 = vrot.slane %v744, 1
    %v746 = vadd.f32 %v744, %v745
    %v747 = vmul.f32 %v583, %v671
    %v748 = vmul.f32 %v584, %v672
    %v749 = vadd.f32 %v747, %v748
    %v750 = vrot.slane %v749, 4
    %v751 = vadd.f32 %v749, %v750
    %v752 = vrot.slane %v751, 2
    %v753 = vadd.f32 %v751, %v752
    %v754 = vrot.slane %v753, 1
    %v755 = vadd.f32 %v753, %v754
    %v756 = vmul.f32 %v583, %v691
    %v757 = vmul.f32 %v584, %v692
    %v758 = vadd.f32 %v756, %v757
    %v759 = vrot.slane %v758, 4
    %v760 = vadd.f32 %v758, %v759
    %v761 = vrot.slane %v760, 2
    %v762 = vadd.f32 %v760, %v761
    %v763 = vrot.slane %v762, 1
    %v764 = vadd.f32 %v762, %v763
    %v765 = vmul.f32 %v597, %v597
    %v766 = vmul.f32 %v598, %v598
    %v767 = vadd.f32 %v765, %v766
    %v768 = vrot.slane %v767, 4
    %v769 = vadd.f32 %v767, %v768
    %v770 = vrot.slane %v769, 2
    %v771 = vadd.f32 %v769, %v770
    %v772 = vrot.slane %v771, 1
    %v773 = vadd.f32 %v771, %v772
    %v774 = vmul.f32 %v597, %v611
    %v775 = vmul.f32 %v598, %v612
    %v776 = vadd.f32 %v774, %v775
    %v777 = vrot.slane %v776, 4
    %v778 = vadd.f32 %v776, %v777
    %v779 = vrot.slane %v778, 2
    %v780 = vadd.f32 %v778, %v779
    %v781 = vrot.slane %v780, 1
    %v782 = vadd.f32 %v780, %v781
    %v783 = vmul.f32 %v597, %v625
    %v784 = vmul.f32 %v598, %v626
    %v785 = vadd.f32 %v783, %v784
    %v786 = vrot.slane %v785, 4
    %v787 = vadd.f32 %v785, %v786
    %v788 = vrot.slane %v787, 2
    %v789 = vadd.f32 %v787, %v788
    %v790 = vrot.slane %v789, 1
    %v791 = vadd.f32 %v789, %v790
    %v792 = vmul.f32 %v597, %v643
    %v793 = vmul.f32 %v598, %v644
    %v794 = vadd.f32 %v792, %v793
    %v795 = vrot.slane %v794, 4
    %v796 = vadd.f32 %v794, %v795
    %v797 = vrot.slane %v796, 2
    %v798 = vadd.f32 %v796, %v797
    %v799 = vrot.slane %v798, 1
    %v800 = vadd.f32 %v798, %v799
    %v801 = vmul.f32 %v597, %v657
    %v802 = vmul.f32 %v598, %v658
    %v803 = vadd.f32 %v801, %v802
    %v804 = vrot.slane %v803, 4
    %v805 = vadd.f32 %v803, %v804
    %v806 = vrot.slane %v805, 2
    %v807 = vadd.f32 %v805, %v806
    %v808 = vrot.slane %v807, 1
    %v809 = vadd.f32 %v807, %v808
    %v810 = vmul.f32 %v597, %v671
    %v811 = vmul.f32 %v598, %v672
    %v812 = vadd.f32 %v810, %v811
    %v813 = vrot.slane %v812, 4
    %v814 = vadd.f32 %v812, %v813
    %v815 = vrot.slane %v814, 2
    %v816 = vadd.f32 %v814, %v815
    %v817 = vrot.slane %v816, 1
    %v818 = vadd.f32 %v816, %v817
    %v819 = vmul.f32 %v597, %v691
    %v820 = vmul.f32 %v598, %v692
    %v821 = vadd.f32 %v819, %v820
    %v822 = vrot.slane %v821, 4
    %v823 = vadd.f32 %v821, %v822
    %v824 = vrot.slane %v823, 2
    %v825 = vadd.f32 %v823, %v824
    %v826 = vrot.slane %v825, 1
    %v827 = vadd.f32 %v825, %v826
    %v828 = vmul.f32 %v611, %v611
    %v829 = vmul.f32 %v612, %v612
    %v830 = vadd.f32 %v828, %v829
    %v831 = vrot.slane %v830, 4
    %v832 = vadd.f32 %v830, %v831
    %v833 = vrot.slane %v832, 2
    %v834 = vadd.f32 %v832, %v833
    %v835 = vrot.slane %v834, 1
    %v836 = vadd.f32 %v834, %v835
    %v837 = vmul.f32 %v611, %v625
    %v838 = vmul.f32 %v612, %v626
    %v839 = vadd.f32 %v837, %v838
    %v840 = vrot.slane %v839, 4
    %v841 = vadd.f32 %v839, %v840
    %v842 = vrot.slane %v841, 2
    %v843 = vadd.f32 %v841, %v842
    %v844 = vrot.slane %v843, 1
    %v845 = vadd.f32 %v843, %v844
    %v846 = vmul.f32 %v611, %v643
    %v847 = vmul.f32 %v612, %v644
    %v848 = vadd.f32 %v846, %v847
    %v849 = vrot.slane %v848, 4
    %v850 = vadd.f32 %v848, %v849
    %v851 = vrot.slane %v850, 2
    %v852 = vadd.f32 %v850, %v851
    %v853 = vrot.slane %v852, 1
    %v854 = vadd.f32 %v852, %v853
    %v855 = vmul.f32 %v611, %v657
    %v856 = vmul.f32 %v612, %v658
    %v857 = vadd.f32 %v855, %v856
    %v858 = vrot.slane %v857, 4
    %v859 = vadd.f32 %v857, %v858
    %v860 = vrot.slane %v859, 2
    %v861 = vadd.f32 %v859, %v860
    %v862 = vrot.slane %v861, 1
    %v863 = vadd.f32 %v861, %v862
    %v864 = vmul.f32 %v611, %v671
    %v865 = vmul.f32 %v612, %v672
    %v866 = vadd.f32 %v864, %v865
    %v867 = vrot.slane %v866, 4
    %v868 = vadd.f32 %v866, %v867
    %v869 = vrot.slane %v868, 2
    %v870 = vadd.f32 %v868, %v869
    %v871 = vrot.slane %v870, 1
    %v872 = vadd.f32 %v870, %v871
    %v873 = vmul.f32 %v611, %v691
    %v874 = vmul.f32 %v612, %v692
    %v875 = vadd.f32 %v873, %v874
    %v876 = vrot.slane %v875, 4
    %v877 = vadd.f32 %v875, %v876
    %v878 = vrot.slane %v877, 2
    %v879 = vadd.f32 %v877, %v878
    %v880 = vrot.slane %v879, 1
    %v881 = vadd.f32 %v879, %v880
    %v882 = vmul.f32 %v625, %v625
    %v883 = vmul.f32 %v626, %v626
    %v884 = vadd.f32 %v882, %v883
    %v885 = vrot.slane %v884, 4
    %v886 = vadd.f32 %v884, %v885
    %v887 = vrot.slane %v886, 2
    %v888 = vadd.f32 %v886, %v887
    %v889 = vrot.slane %v888, 1
    %v890 = vadd.f32 %v888, %v889
    %v891 = vmul.f32 %v625, %v643
    %v892 = vmul.f32 %v626, %v644
    %v893 = vadd.f32 %v891, %v892
    %v894 = vrot.slane %v893, 4
    %v895 = vadd.f32 %v893, %v894
    %v896 = vrot.slane %v895, 2
    %v897 = vadd.f32 %v895, %v896
    %v898 = vrot.slane %v897, 1
    %v899 = vadd.f32 %v897, %v898
    %v900 = vmul.f32 %v625, %v657
    %v901 = vmul.f32 %v626, %v658
    %v902 = vadd.f32 %v900, %v901
    %v903 = vrot.slane %v902, 4
    %v904 = vadd.f32 %v902, %v903
    %v905 = vrot.slane %v904, 2
    %v906 = vadd.f32 %v904, %v905
    %v907 = vrot.slane %v906, 1
    %v908 = vadd.f32 %v906, %v907
    %v909 = vmul.f32 %v625, %v671
    %v910 = vmul.f32 %v626, %v672
    %v911 = vadd.f32 %v909, %v910
    %v912 = vrot.slane %v911, 4
    %v913 = vadd.f32 %v911, %v912
    %v914 = vrot.slane %v913, 2
    %v915 = vadd.f32 %v913, %v914
    %v916 = vrot.slane %v915, 1
    %v917 = vadd.f32 %v915, %v916
    %v918 = vmul.f32 %v625, %v691
    %v919 = vmul.f32 %v626, %v692
    %v920 = vadd.f32 %v918, %v919
    %v921 = vrot.slane %v920, 4
    %v922 = vadd.f32 %v920, %v921
    %v923 = vrot.slane %v922, 2
    %v924 = vadd.f32 %v922, %v923
    %v925 = vrot.slane %v924, 1
    %v926 = vadd.f32 %v924, %v925
    %v927 = vmul.f32 %v643, %v643
    %v928 = vmul.f32 %v644, %v644
    %v929 = vadd.f32 %v927, %v928
    %v930 = vrot.slane %v929, 4
    %v931 = vadd.f32 %v929, %v930
    %v932 = vrot.slane %v931, 2
    %v933 = vadd.f32 %v931, %v932
    %v934 = vrot.slane %v933, 1
    %v935 = vadd.f32 %v933, %v934
    %v936 = vmul.f32 %v643, %v657
    %v937 = vmul.f32 %v644, %v658
    %v938 = vadd.f32 %v936, %v937
    %v939 = vrot.slane %v938, 4
    %v940 = vadd.f32 %v938, %v939
    %v941 = vrot.slane %v940, 2
    %v942 = vadd.f32 %v940, %v941
    %v943 = vrot.slane %v942, 1
    %v944 = vadd.f32 %v942, %v943
    %v945 = vmul.f32 %v643, %v671
    %v946 = vmul.f32 %v644, %v672
    %v947 = vadd.f32 %v945, %v946
    %v948 = vrot.slane %v947, 4
    %v949 = vadd.f32 %v947, %v948
    %v950 = vrot.slane %v949, 2
    %v951 = vadd.f32 %v949, %v950
    %v952 = vrot.slane %v951, 1
    %v953 = vadd.f32 %v951, %v952
    %v954 = vmul.f32 %v643, %v691
    %v955 = vmul.f32 %v644, %v692
    %v956 = vadd.f32 %v954, %v955
    %v957 = vrot.slane %v956, 4
    %v958 = vadd.f32 %v956, %v957
    %v959 = vrot.slane %v958, 2
    %v960 = vadd.f32 %v958, %v959
    %v961 = vrot.slane %v960, 1
    %v962 = vadd.f32 %v960, %v961
    %v963 = vmul.f32 %v657, %v657
    %v964 = vmul.f32 %v658, %v658
    %v965 = vadd.f32 %v963, %v964
    %v966 = vrot.slane %v965, 4
    %v967 = vadd.f32 %v965, %v966
    %v968 = vrot.slane %v967, 2
    %v969 = vadd.f32 %v967, %v968
    %v970 = vrot.slane %v969, 1
    %v971 = vadd.f32 %v969, %v970
    %v972 = vmul.f32 %v657, %v671
    %v973 = vmul.f32 %v658, %v672
    %v974 = vadd.f32 %v972, %v973
    %v975 = vrot.slane %v974, 4
    %v976 = vadd.f32 %v974, %v975
    %v977 = vrot.slane %v976, 2
    %v978 = vadd.f32 %v976, %v977
    %v979 = vrot.slane %v978, 1
    %v980 = vadd.f32 %v978, %v979
    %v981 = vmul.f32 %v657, %v691
    %v982 = vmul.f32 %v658, %v692
    %v983 = vadd.f32 %v981, %v982
    %v984 = vrot.slane %v983, 4
    %v985 = vadd.f32 %v983, %v984
    %v986 = vrot.slane %v985, 2
    %v987 = vadd.f32 %v985, %v986
    %v988 = vrot.slane %v987, 1
    %v989 = vadd.f32 %v987, %v988
    %v990 = vmul.f32 %v671, %v671
    %v991 = vmul.f32 %v672, %v672
    %v992 = vadd.f32 %v990, %v991
    %v993 = vrot.slane %v992, 4
    %v994 = vadd.f32 %v992, %v993
    %v995 = vrot.slane %v994, 2
    %v996 = vadd.f32 %v994, %v995
    %v997 = vrot.slane %v996, 1
    %v998 = vadd.f32 %v996, %v997
    %v999 = vmul.f32 %v671, %v691
    %v1000 = vmul.f32 %v672, %v692
    %v1001 = vadd.f32 %v999, %v1000
    %v1002 = vrot.slane %v1001, 4
    %v1003 = vadd.f32 %v1001, %v1002
    %v1004 = vrot.slane %v1003, 2
    %v1005 = vadd.f32 %v1003, %v1004
    %v1006 = vrot.slane %v1005, 1
    %v1007 = vadd.f32 %v1005, %v1006
    %v1008 = vmul.f32 %v691, %v691
    %v1009 = vmul.f32 %v692, %v692
    %v1010 = vadd.f32 %v1008, %v1009
    %v1011 = vrot.slane %v1010, 4
    %v1012 = vadd.f32 %v1010, %v1011
    %v1013 = vrot.slane %v1012, 2
    %v1014 = vadd.f32 %v1012, %v1013
    %v1015 = vrot.slane %v1014, 1
    %v1016 = vadd.f32 %v1014, %v1015
    %v1017 = vadd.f32 %v701, 0.05
    %vm1018 = vcmask 1040384
    %v1019 = vsel %vm1018, %v1017, %v710
    %vm1020 = vcmask 1041408
    %v1021 = vsel %vm1020, %v1019, %v719
    %vm1022 = vcmask 1042432
    %v1023 = vsel %vm1022, %v1021, %v728
    %vm1024 = vcmask 1043456
    %v1025 = vsel %vm1024, %v1023, %v737
    %vm1026 = vcmask 1044480
    %v1027 = vsel %vm1026, %v1025, %v746
    %vm1028 = vcmask 1045504
    %v1029 = vsel %vm1028, %v1027, %v755
    %vm1030 = vcmask 1046528
    %v1031 = vsel %vm1030, %v1029, %v764
    %v1032 = vmul.f32 %v41, %v583
    %v1033 = vmul.f32 %v42, %v584
    %v1034 = vadd.f32 %v1032, %v1033
    %v1035 = vrot.slane %v1034, 4
    %v1036 = vadd.f32 %v1034, %v1035
    %v1037 = vrot.slane %v1036, 2
    %v1038 = vadd.f32 %v1036, %v1037
    %v1039 = vrot.slane %v1038, 1
    %v1040 = vadd.f32 %v1038, %v1039
    %v1041 = vmul.f32 %v43, %v583
    %v1042 = vmul.f32 %v44, %v584
    %v1043 = vadd.f32 %v1041, %v1042
    %v1044 = vrot.slane %v1043, 4
    %v1045 = vadd.f32 %v1043, %v1044
    %v1046 = vrot.slane %v1045, 2
    %v1047 = vadd.f32 %v1045, %v1046
    %v1048 = vrot.slane %v1047, 1
    %v1049 = vadd.f32 %v1047, %v1048
    %v1050 = vmul.f32 %v45, %v583
    %v1051 = vmul.f32 %v46, %v584
    %v1052 = vadd.f32 %v1050, %v1051
    %v1053 = vrot.slane %v1052, 4
    %v1054 = vadd.f32 %v1052, %v1053
    %v1055 = vrot.slane %v1054, 2
    %v1056 = vadd.f32 %v1054, %v1055
    %v1057 = vrot.slane %v1056, 1
    %v1058 = vadd.f32 %v1056, %v1057
    %v1059 = vsel %vm1018, %v1040, %v1049
    %v1060 = vsel %vm1020, %v1059, %v1058
    %v1061 = vadd.f32 %v773, 0.05
    %v1062 = vsel %vm1018, %v710, %v1061
    %v1063 = vsel %vm1020, %v1062, %v782
    %v1064 = vsel %vm1022, %v1063, %v791
    %v1065 = vsel %vm1024, %v1064, %v800
    %v1066 = vsel %vm1026, %v1065, %v809
    %v1067 = vsel %vm1028, %v1066, %v818
    %v1068 = vsel %vm1030, %v1067, %v827
    %v1069 = vmul.f32 %v41, %v597
    %v1070 = vmul.f32 %v42, %v598
    %v1071 = vadd.f32 %v1069, %v1070
    %v1072 = vrot.slane %v1071, 4
    %v1073 = vadd.f32 %v1071, %v1072
    %v1074 = vrot.slane %v1073, 2
    %v1075 = vadd.f32 %v1073, %v1074
    %v1076 = vrot.slane %v1075, 1
    %v1077 = vadd.f32 %v1075, %v1076
    %v1078 = vmul.f32 %v43, %v597
    %v1079 = vmul.f32 %v44, %v598
    %v1080 = vadd.f32 %v1078, %v1079
    %v1081 = vrot.slane %v1080, 4
    %v1082 = vadd.f32 %v1080, %v1081
    %v1083 = vrot.slane %v1082, 2
    %v1084 = vadd.f32 %v1082, %v1083
    %v1085 = vrot.slane %v1084, 1
    %v1086 = vadd.f32 %v1084, %v1085
    %v1087 = vmul.f32 %v45, %v597
    %v1088 = vmul.f32 %v46, %v598
    %v1089 = vadd.f32 %v1087, %v1088
    %v1090 = vrot.slane %v1089, 4
    %v1091 = vadd.f32 %v1089, %v1090
    %v1092 = vrot.slane %v1091, 2
    %v1093 = vadd.f32 %v1091, %v1092
    %v1094 = vrot.slane %v1093, 1
    %v1095 = vadd.f32 %v1093, %v1094
    %v1096 = vsel %vm1018, %v1077, %v1086
    %v1097 = vsel %vm1020, %v1096, %v1095
    %v1098 = vadd.f32 %v836, 0.05
    %v1099 = vsel %vm1018, %v719, %v782
    %v1100 = vsel %vm1020, %v1099, %v1098
    %v1101 = vsel %vm1022, %v1100, %v845
    %v1102 = vsel %vm1024, %v1101, %v854
    %v1103 = vsel %vm1026, %v1102, %v863
    %v1104 = vsel %vm1028, %v1103, %v872
    %v1105 = vsel %vm1030, %v1104, %v881
    %v1106 = vmul.f32 %v41, %v611
    %v1107 = vmul.f32 %v42, %v612
    %v1108 = vadd.f32 %v1106, %v1107
    %v1109 = vrot.slane %v1108, 4
    %v1110 = vadd.f32 %v1108, %v1109
    %v1111 = vrot.slane %v1110, 2
    %v1112 = vadd.f32 %v1110, %v1111
    %v1113 = vrot.slane %v1112, 1
    %v1114 = vadd.f32 %v1112, %v1113
    %v1115 = vmul.f32 %v43, %v611
    %v1116 = vmul.f32 %v44, %v612
    %v1117 = vadd.f32 %v1115, %v1116
    %v1118 = vrot.slane %v1117, 4
    %v1119 = vadd.f32 %v1117, %v1118
    %v1120 = vrot.slane %v1119, 2
    %v1121 = vadd.f32 %v1119, %v1120
    %v1122 = vrot.slane %v1121, 1
    %v1123 = vadd.f32 %v1121, %v1122
    %v1124 = vmul.f32 %v45, %v611
    %v1125 = vmul.f32 %v46, %v612
    %v1126 = vadd.f32 %v1124, %v1125
    %v1127 = vrot.slane %v1126, 4
    %v1128 = vadd.f32 %v1126, %v1127
    %v1129 = vrot.slane %v1128, 2
    %v1130 = vadd.f32 %v1128, %v1129
    %v1131 = vrot.slane %v1130, 1
    %v1132 = vadd.f32 %v1130, %v1131
    %v1133 = vsel %vm1018, %v1114, %v1123
    %v1134 = vsel %vm1020, %v1133, %v1132
    %v1135 = vadd.f32 %v890, 0.05
    %v1136 = vsel %vm1018, %v728, %v791
    %v1137 = vsel %vm1020, %v1136, %v845
    %v1138 = vsel %vm1022, %v1137, %v1135
    %v1139 = vsel %vm1024, %v1138, %v899
    %v1140 = vsel %vm1026, %v1139, %v908
    %v1141 = vsel %vm1028, %v1140, %v917
    %v1142 = vsel %vm1030, %v1141, %v926
    %v1143 = vmul.f32 %v41, %v625
    %v1144 = vmul.f32 %v42, %v626
    %v1145 = vadd.f32 %v1143, %v1144
    %v1146 = vrot.slane %v1145, 4
    %v1147 = vadd.f32 %v1145, %v1146
    %v1148 = vrot.slane %v1147, 2
    %v1149 = vadd.f32 %v1147, %v1148
    %v1150 = vrot.slane %v1149, 1
    %v1151 = vadd.f32 %v1149, %v1150
    %v1152 = vmul.f32 %v43, %v625
    %v1153 = vmul.f32 %v44, %v626
    %v1154 = vadd.f32 %v1152, %v1153
    %v1155 = vrot.slane %v1154, 4
    %v1156 = vadd.f32 %v1154, %v1155
    %v1157 = vrot.slane %v1156, 2
    %v1158 = vadd.f32 %v1156, %v1157
    %v1159 = vrot.slane %v1158, 1
    %v1160 = vadd.f32 %v1158, %v1159
    %v1161 = vmul.f32 %v45, %v625
    %v1162 = vmul.f32 %v46, %v626
    %v1163 = vadd.f32 %v1161, %v1162
    %v1164 = vrot.slane %v1163, 4
    %v1165 = vadd.f32 %v1163, %v1164
    %v1166 = vrot.slane %v1165, 2
    %v1167 = vadd.f32 %v1165, %v1166
    %v1168 = vrot.slane %v1167, 1
    %v1169 = vadd.f32 %v1167, %v1168
    %v1170 = vsel %vm1018, %v1151, %v1160
    %v1171 = vsel %vm1020, %v1170, %v1169
    %v1172 = vadd.f32 %v935, 0.05
    %v1173 = vsel %vm1018, %v737, %v800
    %v1174 = vsel %vm1020, %v1173, %v854
    %v1175 = vsel %vm1022, %v1174, %v899
    %v1176 = vsel %vm1024, %v1175, %v1172
    %v1177 = vsel %vm1026, %v1176, %v944
    %v1178 = vsel %vm1028, %v1177, %v953
    %v1179 = vsel %vm1030, %v1178, %v962
    %v1180 = vmul.f32 %v41, %v643
    %v1181 = vmul.f32 %v42, %v644
    %v1182 = vadd.f32 %v1180, %v1181
    %v1183 = vrot.slane %v1182, 4
    %v1184 = vadd.f32 %v1182, %v1183
    %v1185 = vrot.slane %v1184, 2
    %v1186 = vadd.f32 %v1184, %v1185
    %v1187 = vrot.slane %v1186, 1
    %v1188 = vadd.f32 %v1186, %v1187
    %v1189 = vmul.f32 %v43, %v643
    %v1190 = vmul.f32 %v44, %v644
    %v1191 = vadd.f32 %v1189, %v1190
    %v1192 = vrot.slane %v1191, 4
    %v1193 = vadd.f32 %v1191, %v1192
    %v1194 = vrot.slane %v1193, 2
    %v1195 = vadd.f32 %v1193, %v1194
    %v1196 = vrot.slane %v1195, 1
    %v1197 = vadd.f32 %v1195, %v1196
    %v1198 = vmul.f32 %v45, %v643
    %v1199 = vmul.f32 %v46, %v644
    %v1200 = vadd.f32 %v1198, %v1199
    %v1201 = vrot.slane %v1200, 4
    %v1202 = vadd.f32 %v1200, %v1201
    %v1203 = vrot.slane %v1202, 2
    %v1204 = vadd.f32 %v1202, %v1203
    %v1205 = vrot.slane %v1204, 1
    %v1206 = vadd.f32 %v1204, %v1205
    %v1207 = vsel %vm1018, %v1188, %v1197
    %v1208 = vsel %vm1020, %v1207, %v1206
    %v1209 = vadd.f32 %v971, 0.05
    %v1210 = vsel %vm1018, %v746, %v809
    %v1211 = vsel %vm1020, %v1210, %v863
    %v1212 = vsel %vm1022, %v1211, %v908
    %v1213 = vsel %vm1024, %v1212, %v944
    %v1214 = vsel %vm1026, %v1213, %v1209
    %v1215 = vsel %vm1028, %v1214, %v980
    %v1216 = vsel %vm1030, %v1215, %v989
    %v1217 = vmul.f32 %v41, %v657
    %v1218 = vmul.f32 %v42, %v658
    %v1219 = vadd.f32 %v1217, %v1218
    %v1220 = vrot.slane %v1219, 4
    %v1221 = vadd.f32 %v1219, %v1220
    %v1222 = vrot.slane %v1221, 2
    %v1223 = vadd.f32 %v1221, %v1222
    %v1224 = vrot.slane %v1223, 1
    %v1225 = vadd.f32 %v1223, %v1224
    %v1226 = vmul.f32 %v43, %v657
    %v1227 = vmul.f32 %v44, %v658
    %v1228 = vadd.f32 %v1226, %v1227
    %v1229 = vrot.slane %v1228, 4
    %v1230 = vadd.f32 %v1228, %v1229
    %v1231 = vrot.slane %v1230, 2
    %v1232 = vadd.f32 %v1230, %v1231
    %v1233 = vrot.slane %v1232, 1
    %v1234 = vadd.f32 %v1232, %v1233
    %v1235 = vmul.f32 %v45, %v657
    %v1236 = vmul.f32 %v46, %v658
    %v1237 = vadd.f32 %v1235, %v1236
    %v1238 = vrot.slane %v1237, 4
    %v1239 = vadd.f32 %v1237, %v1238
    %v1240 = vrot.slane %v1239, 2
    %v1241 = vadd.f32 %v1239, %v1240
    %v1242 = vrot.slane %v1241, 1
    %v1243 = vadd.f32 %v1241, %v1242
    %v1244 = vsel %vm1018, %v1225, %v1234
    %v1245 = vsel %vm1020, %v1244, %v1243
    %v1246 = vadd.f32 %v998, 0.05
    %v1247 = vsel %vm1018, %v755, %v818
    %v1248 = vsel %vm1020, %v1247, %v872
    %v1249 = vsel %vm1022, %v1248, %v917
    %v1250 = vsel %vm1024, %v1249, %v953
    %v1251 = vsel %vm1026, %v1250, %v980
    %v1252 = vsel %vm1028, %v1251, %v1246
    %v1253 = vsel %vm1030, %v1252, %v1007
    %v1254 = vmul.f32 %v41, %v671
    %v1255 = vmul.f32 %v42, %v672
    %v1256 = vadd.f32 %v1254, %v1255
    %v1257 = vrot.slane %v1256, 4
    %v1258 = vadd.f32 %v1256, %v1257
    %v1259 = vrot.slane %v1258, 2
    %v1260 = vadd.f32 %v1258, %v1259
    %v1261 = vrot.slane %v1260, 1
    %v1262 = vadd.f32 %v1260, %v1261
    %v1263 = vmul.f32 %v43, %v671
    %v1264 = vmul.f32 %v44, %v672
    %v1265 = vadd.f32 %v1263, %v1264
    %v1266 = vrot.slane %v1265, 4
    %v1267 = vadd.f32 %v1265, %v1266
    %v1268 = vrot.slane %v1267, 2
    %v1269 = vadd.f32 %v1267, %v1268
    %v1270 = vrot.slane %v1269, 1
    %v1271 = vadd.f32 %v1269, %v1270
    %v1272 = vmul.f32 %v45, %v671
    %v1273 = vmul.f32 %v46, %v672
    %v1274 = vadd.f32 %v1272, %v1273
    %v1275 = vrot.slane %v1274, 4
    %v1276 = vadd.f32 %v1274, %v1275
    %v1277 = vrot.slane %v1276, 2
    %v1278 = vadd.f32 %v1276, %v1277
    %v1279 = vrot.slane %v1278, 1
    %v1280 = vadd.f32 %v1278, %v1279
    %v1281 = vsel %vm1018, %v1262, %v1271
    %v1282 = vsel %vm1020, %v1281, %v1280
    %v1283 = vadd.f32 %v1016, 0.05
    %v1284 = vsel %vm1018, %v764, %v827
    %v1285 = vsel %vm1020, %v1284, %v881
    %v1286 = vsel %vm1022, %v1285, %v926
    %v1287 = vsel %vm1024, %v1286, %v962
    %v1288 = vsel %vm1026, %v1287, %v989
    %v1289 = vsel %vm1028, %v1288, %v1007
    %v1290 = vsel %vm1030, %v1289, %v1283
    %v1291 = vmul.f32 %v41, %v691
    %v1292 = vmul.f32 %v42, %v692
    %v1293 = vadd.f32 %v1291, %v1292
    %v1294 = vrot.slane %v1293, 4
    %v1295 = vadd.f32 %v1293, %v1294
    %v1296 = vrot.slane %v1295, 2
    %v1297 = vadd.f32 %v1295, %v1296
    %v1298 = vrot.slane %v1297, 1
    %v1299 = vadd.f32 %v1297, %v1298
    %v1300 = vmul.f32 %v43, %v691
    %v1301 = vmul.f32 %v44, %v692
    %v1302 = vadd.f32 %v1300, %v1301
    %v1303 = vrot.slane %v1302, 4
    %v1304 = vadd.f32 %v1302, %v1303
    %v1305 = vrot.slane %v1304, 2
    %v1306 = vadd.f32 %v1304, %v1305
    %v1307 = vrot.slane %v1306, 1
    %v1308 = vadd.f32 %v1306, %v1307
    %v1309 = vmul.f32 %v45, %v691
    %v1310 = vmul.f32 %v46, %v692
    %v1311 = vadd.f32 %v1309, %v1310
    %v1312 = vrot.slane %v1311, 4
    %v1313 = vadd.f32 %v1311, %v1312
    %v1314 = vrot.slane %v1313, 2
    %v1315 = vadd.f32 %v1313, %v1314
    %v1316 = vrot.slane %v1315, 1
    %v1317 = vadd.f32 %v1315, %v1316
    %v1318 = vsel %vm1018, %v1299, %v1308
    %v1319 = vsel %vm1020, %v1318, %v1317
    %v1320 = vand.u32 2147483647, %v1031
    %vm1321 = vcmp.gt.f32.partialorder %v1320, 1e-30
    %v1322 = vsel %vm1321, %v1031, 1e-30
    %v1323 = vrcp.pop %v1322
    %v1324 = vmul.f32 %v1322, %v1323
    %v1325 = vsub.f32 2.0, %v1324
    %v1326 = vmul.f32 %v1323, %v1325
    %v1327 = vlaneseq
    %v1328 = vshrl.u32 %v1327, 7
    %v1329 = vsub.s32 0, %v1328
    %v1330 = vrot.slane %v1326, %v1329
    %v1331 = vmul.f32 %v1031, %v1330
    %v1332 = vmul.f32 %v1060, %v1330
    %v1333 = vlaneseq
    %v1334 = vshrl.u32 %v1333, 7
    %v1335 = vsub.s32 0, %v1334
    %v1336 = vrot.slane %v1068, %v1335
    %v1337 = vmul.f32 %v1331, %v1336
    %v1338 = vsub.f32 %v1068, %v1337
    %v1339 = vmul.f32 %v1332, %v1336
    %v1340 = vsub.f32 %v1097, %v1339
    %v1341 = vlaneseq
    %v1342 = vshrl.u32 %v1341, 7
    %v1343 = vsub.s32 0, %v1342
    %v1344 = vrot.slane %v1105, %v1343
    %v1345 = vmul.f32 %v1331, %v1344
    %v1346 = vsub.f32 %v1105, %v1345
    %v1347 = vmul.f32 %v1332, %v1344
    %v1348 = vsub.f32 %v1134, %v1347
    %v1349 = vlaneseq
    %v1350 = vshrl.u32 %v1349, 7
    %v1351 = vsub.s32 0, %v1350
    %v1352 = vrot.slane %v1142, %v1351
    %v1353 = vmul.f32 %v1331, %v1352
    %v1354 = vsub.f32 %v1142, %v1353
    %v1355 = vmul.f32 %v1332, %v1352
    %v1356 = vsub.f32 %v1171, %v1355
    %v1357 = vlaneseq
    %v1358 = vshrl.u32 %v1357, 7
    %v1359 = vsub.s32 0, %v1358
    %v1360 = vrot.slane %v1179, %v1359
    %v1361 = vmul.f32 %v1331, %v1360
    %v1362 = vsub.f32 %v1179, %v1361
    %v1363 = vmul.f32 %v1332, %v1360
    %v1364 = vsub.f32 %v1208, %v1363
    %v1365 = vlaneseq
    %v1366 = vshrl.u32 %v1365, 7
    %v1367 = vsub.s32 0, %v1366
    %v1368 = vrot.slane %v1216, %v1367
    %v1369 = vmul.f32 %v1331, %v1368
    %v1370 = vsub.f32 %v1216, %v1369
    %v1371 = vmul.f32 %v1332, %v1368
    %v1372 = vsub.f32 %v1245, %v1371
    %v1373 = vlaneseq
    %v1374 = vshrl.u32 %v1373, 7
    %v1375 = vsub.s32 0, %v1374
    %v1376 = vrot.slane %v1253, %v1375
    %v1377 = vmul.f32 %v1331, %v1376
    %v1378 = vsub.f32 %v1253, %v1377
    %v1379 = vmul.f32 %v1332, %v1376
    %v1380 = vsub.f32 %v1282, %v1379
    %v1381 = vlaneseq
    %v1382 = vshrl.u32 %v1381, 7
    %v1383 = vsub.s32 0, %v1382
    %v1384 = vrot.slane %v1290, %v1383
    %v1385 = vmul.f32 %v1331, %v1384
    %v1386 = vsub.f32 %v1290, %v1385
    %v1387 = vmul.f32 %v1332, %v1384
    %v1388 = vsub.f32 %v1319, %v1387
    %v1389 = vand.u32 2147483647, %v1338
    %vm1390 = vcmp.gt.f32.partialorder %v1389, 1e-30
    %v1391 = vsel %vm1390, %v1338, 1e-30
    %v1392 = vrcp.pop %v1391
    %v1393 = vmul.f32 %v1391, %v1392
    %v1394 = vsub.f32 2.0, %v1393
    %v1395 = vmul.f32 %v1392, %v1394
    %v1396 = vlaneseq
    %v1397 = vshrl.u32 %v1396, 7
    %v1398 = vsub.s32 1, %v1397
    %v1399 = vrot.slane %v1395, %v1398
    %v1400 = vmul.f32 %v1338, %v1399
    %v1401 = vmul.f32 %v1340, %v1399
    %v1402 = vlaneseq
    %v1403 = vshrl.u32 %v1402, 7
    %v1404 = vsub.s32 1, %v1403
    %v1405 = vrot.slane %v1331, %v1404
    %v1406 = vmul.f32 %v1400, %v1405
    %v1407 = vsub.f32 %v1331, %v1406
    %v1408 = vmul.f32 %v1401, %v1405
    %v1409 = vsub.f32 %v1332, %v1408
    %v1410 = vlaneseq
    %v1411 = vshrl.u32 %v1410, 7
    %v1412 = vsub.s32 1, %v1411
    %v1413 = vrot.slane %v1346, %v1412
    %v1414 = vmul.f32 %v1400, %v1413
    %v1415 = vsub.f32 %v1346, %v1414
    %v1416 = vmul.f32 %v1401, %v1413
    %v1417 = vsub.f32 %v1348, %v1416
    %v1418 = vlaneseq
    %v1419 = vshrl.u32 %v1418, 7
    %v1420 = vsub.s32 1, %v1419
    %v1421 = vrot.slane %v1354, %v1420
    %v1422 = vmul.f32 %v1400, %v1421
    %v1423 = vsub.f32 %v1354, %v1422
    %v1424 = vmul.f32 %v1401, %v1421
    %v1425 = vsub.f32 %v1356, %v1424
    %v1426 = vlaneseq
    %v1427 = vshrl.u32 %v1426, 7
    %v1428 = vsub.s32 1, %v1427
    %v1429 = vrot.slane %v1362, %v1428
    %v1430 = vmul.f32 %v1400, %v1429
    %v1431 = vsub.f32 %v1362, %v1430
    %v1432 = vmul.f32 %v1401, %v1429
    %v1433 = vsub.f32 %v1364, %v1432
    %v1434 = vlaneseq
    %v1435 = vshrl.u32 %v1434, 7
    %v1436 = vsub.s32 1, %v1435
    %v1437 = vrot.slane %v1370, %v1436
    %v1438 = vmul.f32 %v1400, %v1437
    %v1439 = vsub.f32 %v1370, %v1438
    %v1440 = vmul.f32 %v1401, %v1437
    %v1441 = vsub.f32 %v1372, %v1440
    %v1442 = vlaneseq
    %v1443 = vshrl.u32 %v1442, 7
    %v1444 = vsub.s32 1, %v1443
    %v1445 = vrot.slane %v1378, %v1444
    %v1446 = vmul.f32 %v1400, %v1445
    %v1447 = vsub.f32 %v1378, %v1446
    %v1448 = vmul.f32 %v1401, %v1445
    %v1449 = vsub.f32 %v1380, %v1448
    %v1450 = vlaneseq
    %v1451 = vshrl.u32 %v1450, 7
    %v1452 = vsub.s32 1, %v1451
    %v1453 = vrot.slane %v1386, %v1452
    %v1454 = vmul.f32 %v1400, %v1453
    %v1455 = vsub.f32 %v1386, %v1454
    %v1456 = vmul.f32 %v1401, %v1453
    %v1457 = vsub.f32 %v1388, %v1456
    %v1458 = vand.u32 2147483647, %v1415
    %vm1459 = vcmp.gt.f32.partialorder %v1458, 1e-30
    %v1460 = vsel %vm1459, %v1415, 1e-30
    %v1461 = vrcp.pop %v1460
    %v1462 = vmul.f32 %v1460, %v1461
    %v1463 = vsub.f32 2.0, %v1462
    %v1464 = vmul.f32 %v1461, %v1463
    %v1465 = vlaneseq
    %v1466 = vshrl.u32 %v1465, 7
    %v1467 = vsub.s32 2, %v1466
    %v1468 = vrot.slane %v1464, %v1467
    %v1469 = vmul.f32 %v1415, %v1468
    %v1470 = vmul.f32 %v1417, %v1468
    %v1471 = vlaneseq
    %v1472 = vshrl.u32 %v1471, 7
    %v1473 = vsub.s32 2, %v1472
    %v1474 = vrot.slane %v1407, %v1473
    %v1475 = vmul.f32 %v1469, %v1474
    %v1476 = vsub.f32 %v1407, %v1475
    %v1477 = vmul.f32 %v1470, %v1474
    %v1478 = vsub.f32 %v1409, %v1477
    %v1479 = vlaneseq
    %v1480 = vshrl.u32 %v1479, 7
    %v1481 = vsub.s32 2, %v1480
    %v1482 = vrot.slane %v1400, %v1481
    %v1483 = vmul.f32 %v1469, %v1482
    %v1484 = vsub.f32 %v1400, %v1483
    %v1485 = vmul.f32 %v1470, %v1482
    %v1486 = vsub.f32 %v1401, %v1485
    %v1487 = vlaneseq
    %v1488 = vshrl.u32 %v1487, 7
    %v1489 = vsub.s32 2, %v1488
    %v1490 = vrot.slane %v1423, %v1489
    %v1491 = vmul.f32 %v1469, %v1490
    %v1492 = vsub.f32 %v1423, %v1491
    %v1493 = vmul.f32 %v1470, %v1490
    %v1494 = vsub.f32 %v1425, %v1493
    %v1495 = vlaneseq
    %v1496 = vshrl.u32 %v1495, 7
    %v1497 = vsub.s32 2, %v1496
    %v1498 = vrot.slane %v1431, %v1497
    %v1499 = vmul.f32 %v1469, %v1498
    %v1500 = vsub.f32 %v1431, %v1499
    %v1501 = vmul.f32 %v1470, %v1498
    %v1502 = vsub.f32 %v1433, %v1501
    %v1503 = vlaneseq
    %v1504 = vshrl.u32 %v1503, 7
    %v1505 = vsub.s32 2, %v1504
    %v1506 = vrot.slane %v1439, %v1505
    %v1507 = vmul.f32 %v1469, %v1506
    %v1508 = vsub.f32 %v1439, %v1507
    %v1509 = vmul.f32 %v1470, %v1506
    %v1510 = vsub.f32 %v1441, %v1509
    %v1511 = vlaneseq
    %v1512 = vshrl.u32 %v1511, 7
    %v1513 = vsub.s32 2, %v1512
    %v1514 = vrot.slane %v1447, %v1513
    %v1515 = vmul.f32 %v1469, %v1514
    %v1516 = vsub.f32 %v1447, %v1515
    %v1517 = vmul.f32 %v1470, %v1514
    %v1518 = vsub.f32 %v1449, %v1517
    %v1519 = vlaneseq
    %v1520 = vshrl.u32 %v1519, 7
    %v1521 = vsub.s32 2, %v1520
    %v1522 = vrot.slane %v1455, %v1521
    %v1523 = vmul.f32 %v1469, %v1522
    %v1524 = vsub.f32 %v1455, %v1523
    %v1525 = vmul.f32 %v1470, %v1522
    %v1526 = vsub.f32 %v1457, %v1525
    %v1527 = vand.u32 2147483647, %v1492
    %vm1528 = vcmp.gt.f32.partialorder %v1527, 1e-30
    %v1529 = vsel %vm1528, %v1492, 1e-30
    %v1530 = vrcp.pop %v1529
    %v1531 = vmul.f32 %v1529, %v1530
    %v1532 = vsub.f32 2.0, %v1531
    %v1533 = vmul.f32 %v1530, %v1532
    %v1534 = vlaneseq
    %v1535 = vshrl.u32 %v1534, 7
    %v1536 = vsub.s32 3, %v1535
    %v1537 = vrot.slane %v1533, %v1536
    %v1538 = vmul.f32 %v1492, %v1537
    %v1539 = vmul.f32 %v1494, %v1537
    %v1540 = vlaneseq
    %v1541 = vshrl.u32 %v1540, 7
    %v1542 = vsub.s32 3, %v1541
    %v1543 = vrot.slane %v1476, %v1542
    %v1544 = vmul.f32 %v1538, %v1543
    %v1545 = vsub.f32 %v1476, %v1544
    %v1546 = vmul.f32 %v1539, %v1543
    %v1547 = vsub.f32 %v1478, %v1546
    %v1548 = vlaneseq
    %v1549 = vshrl.u32 %v1548, 7
    %v1550 = vsub.s32 3, %v1549
    %v1551 = vrot.slane %v1484, %v1550
    %v1552 = vmul.f32 %v1538, %v1551
    %v1553 = vsub.f32 %v1484, %v1552
    %v1554 = vmul.f32 %v1539, %v1551
    %v1555 = vsub.f32 %v1486, %v1554
    %v1556 = vlaneseq
    %v1557 = vshrl.u32 %v1556, 7
    %v1558 = vsub.s32 3, %v1557
    %v1559 = vrot.slane %v1469, %v1558
    %v1560 = vmul.f32 %v1538, %v1559
    %v1561 = vsub.f32 %v1469, %v1560
    %v1562 = vmul.f32 %v1539, %v1559
    %v1563 = vsub.f32 %v1470, %v1562
    %v1564 = vlaneseq
    %v1565 = vshrl.u32 %v1564, 7
    %v1566 = vsub.s32 3, %v1565
    %v1567 = vrot.slane %v1500, %v1566
    %v1568 = vmul.f32 %v1538, %v1567
    %v1569 = vsub.f32 %v1500, %v1568
    %v1570 = vmul.f32 %v1539, %v1567
    %v1571 = vsub.f32 %v1502, %v1570
    %v1572 = vlaneseq
    %v1573 = vshrl.u32 %v1572, 7
    %v1574 = vsub.s32 3, %v1573
    %v1575 = vrot.slane %v1508, %v1574
    %v1576 = vmul.f32 %v1538, %v1575
    %v1577 = vsub.f32 %v1508, %v1576
    %v1578 = vmul.f32 %v1539, %v1575
    %v1579 = vsub.f32 %v1510, %v1578
    %v1580 = vlaneseq
    %v1581 = vshrl.u32 %v1580, 7
    %v1582 = vsub.s32 3, %v1581
    %v1583 = vrot.slane %v1516, %v1582
    %v1584 = vmul.f32 %v1538, %v1583
    %v1585 = vsub.f32 %v1516, %v1584
    %v1586 = vmul.f32 %v1539, %v1583
    %v1587 = vsub.f32 %v1518, %v1586
    %v1588 = vlaneseq
    %v1589 = vshrl.u32 %v1588, 7
    %v1590 = vsub.s32 3, %v1589
    %v1591 = vrot.slane %v1524, %v1590
    %v1592 = vmul.f32 %v1538, %v1591
    %v1593 = vsub.f32 %v1524, %v1592
    %v1594 = vmul.f32 %v1539, %v1591
    %v1595 = vsub.f32 %v1526, %v1594
    %v1596 = vand.u32 2147483647, %v1569
    %vm1597 = vcmp.gt.f32.partialorder %v1596, 1e-30
    %v1598 = vsel %vm1597, %v1569, 1e-30
    %v1599 = vrcp.pop %v1598
    %v1600 = vmul.f32 %v1598, %v1599
    %v1601 = vsub.f32 2.0, %v1600
    %v1602 = vmul.f32 %v1599, %v1601
    %v1603 = vlaneseq
    %v1604 = vshrl.u32 %v1603, 7
    %v1605 = vsub.s32 4, %v1604
    %v1606 = vrot.slane %v1602, %v1605
    %v1607 = vmul.f32 %v1569, %v1606
    %v1608 = vmul.f32 %v1571, %v1606
    %v1609 = vlaneseq
    %v1610 = vshrl.u32 %v1609, 7
    %v1611 = vsub.s32 4, %v1610
    %v1612 = vrot.slane %v1545, %v1611
    %v1613 = vmul.f32 %v1607, %v1612
    %v1614 = vsub.f32 %v1545, %v1613
    %v1615 = vmul.f32 %v1608, %v1612
    %v1616 = vsub.f32 %v1547, %v1615
    %v1617 = vlaneseq
    %v1618 = vshrl.u32 %v1617, 7
    %v1619 = vsub.s32 4, %v1618
    %v1620 = vrot.slane %v1553, %v1619
    %v1621 = vmul.f32 %v1607, %v1620
    %v1622 = vsub.f32 %v1553, %v1621
    %v1623 = vmul.f32 %v1608, %v1620
    %v1624 = vsub.f32 %v1555, %v1623
    %v1625 = vlaneseq
    %v1626 = vshrl.u32 %v1625, 7
    %v1627 = vsub.s32 4, %v1626
    %v1628 = vrot.slane %v1561, %v1627
    %v1629 = vmul.f32 %v1607, %v1628
    %v1630 = vsub.f32 %v1561, %v1629
    %v1631 = vmul.f32 %v1608, %v1628
    %v1632 = vsub.f32 %v1563, %v1631
    %v1633 = vlaneseq
    %v1634 = vshrl.u32 %v1633, 7
    %v1635 = vsub.s32 4, %v1634
    %v1636 = vrot.slane %v1538, %v1635
    %v1637 = vmul.f32 %v1607, %v1636
    %v1638 = vsub.f32 %v1538, %v1637
    %v1639 = vmul.f32 %v1608, %v1636
    %v1640 = vsub.f32 %v1539, %v1639
    %v1641 = vlaneseq
    %v1642 = vshrl.u32 %v1641, 7
    %v1643 = vsub.s32 4, %v1642
    %v1644 = vrot.slane %v1577, %v1643
    %v1645 = vmul.f32 %v1607, %v1644
    %v1646 = vsub.f32 %v1577, %v1645
    %v1647 = vmul.f32 %v1608, %v1644
    %v1648 = vsub.f32 %v1579, %v1647
    %v1649 = vlaneseq
    %v1650 = vshrl.u32 %v1649, 7
    %v1651 = vsub.s32 4, %v1650
    %v1652 = vrot.slane %v1585, %v1651
    %v1653 = vmul.f32 %v1607, %v1652
    %v1654 = vsub.f32 %v1585, %v1653
    %v1655 = vmul.f32 %v1608, %v1652
    %v1656 = vsub.f32 %v1587, %v1655
    %v1657 = vlaneseq
    %v1658 = vshrl.u32 %v1657, 7
    %v1659 = vsub.s32 4, %v1658
    %v1660 = vrot.slane %v1593, %v1659
    %v1661 = vmul.f32 %v1607, %v1660
    %v1662 = vsub.f32 %v1593, %v1661
    %v1663 = vmul.f32 %v1608, %v1660
    %v1664 = vsub.f32 %v1595, %v1663
    %v1665 = vand.u32 2147483647, %v1646
    %vm1666 = vcmp.gt.f32.partialorder %v1665, 1e-30
    %v1667 = vsel %vm1666, %v1646, 1e-30
    %v1668 = vrcp.pop %v1667
    %v1669 = vmul.f32 %v1667, %v1668
    %v1670 = vsub.f32 2.0, %v1669
    %v1671 = vmul.f32 %v1668, %v1670
    %v1672 = vlaneseq
    %v1673 = vshrl.u32 %v1672, 7
    %v1674 = vsub.s32 5, %v1673
    %v1675 = vrot.slane %v1671, %v1674
    %v1676 = vmul.f32 %v1646, %v1675
    %v1677 = vmul.f32 %v1648, %v1675
    %v1678 = vlaneseq
    %v1679 = vshrl.u32 %v1678, 7
    %v1680 = vsub.s32 5, %v1679
    %v1681 = vrot.slane %v1614, %v1680
    %v1682 = vmul.f32 %v1676, %v1681
    %v1683 = vsub.f32 %v1614, %v1682
    %v1684 = vmul.f32 %v1677, %v1681
    %v1685 = vsub.f32 %v1616, %v1684
    %v1686 = vlaneseq
    %v1687 = vshrl.u32 %v1686, 7
    %v1688 = vsub.s32 5, %v1687
    %v1689 = vrot.slane %v1622, %v1688
    %v1690 = vmul.f32 %v1676, %v1689
    %v1691 = vsub.f32 %v1622, %v1690
    %v1692 = vmul.f32 %v1677, %v1689
    %v1693 = vsub.f32 %v1624, %v1692
    %v1694 = vlaneseq
    %v1695 = vshrl.u32 %v1694, 7
    %v1696 = vsub.s32 5, %v1695
    %v1697 = vrot.slane %v1630, %v1696
    %v1698 = vmul.f32 %v1676, %v1697
    %v1699 = vsub.f32 %v1630, %v1698
    %v1700 = vmul.f32 %v1677, %v1697
    %v1701 = vsub.f32 %v1632, %v1700
    %v1702 = vlaneseq
    %v1703 = vshrl.u32 %v1702, 7
    %v1704 = vsub.s32 5, %v1703
    %v1705 = vrot.slane %v1638, %v1704
    %v1706 = vmul.f32 %v1676, %v1705
    %v1707 = vsub.f32 %v1638, %v1706
    %v1708 = vmul.f32 %v1677, %v1705
    %v1709 = vsub.f32 %v1640, %v1708
    %v1710 = vlaneseq
    %v1711 = vshrl.u32 %v1710, 7
    %v1712 = vsub.s32 5, %v1711
    %v1713 = vrot.slane %v1607, %v1712
    %v1714 = vmul.f32 %v1676, %v1713
    %v1715 = vsub.f32 %v1607, %v1714
    %v1716 = vmul.f32 %v1677, %v1713
    %v1717 = vsub.f32 %v1608, %v1716
    %v1718 = vlaneseq
    %v1719 = vshrl.u32 %v1718, 7
    %v1720 = vsub.s32 5, %v1719
    %v1721 = vrot.slane %v1654, %v1720
    %v1722 = vmul.f32 %v1676, %v1721
    %v1723 = vsub.f32 %v1654, %v1722
    %v1724 = vmul.f32 %v1677, %v1721
    %v1725 = vsub.f32 %v1656, %v1724
    %v1726 = vlaneseq
    %v1727 = vshrl.u32 %v1726, 7
    %v1728 = vsub.s32 5, %v1727
    %v1729 = vrot.slane %v1662, %v1728
    %v1730 = vmul.f32 %v1676, %v1729
    %v1731 = vsub.f32 %v1662, %v1730
    %v1732 = vmul.f32 %v1677, %v1729
    %v1733 = vsub.f32 %v1664, %v1732
    %v1734 = vand.u32 2147483647, %v1723
    %vm1735 = vcmp.gt.f32.partialorder %v1734, 1e-30
    %v1736 = vsel %vm1735, %v1723, 1e-30
    %v1737 = vrcp.pop %v1736
    %v1738 = vmul.f32 %v1736, %v1737
    %v1739 = vsub.f32 2.0, %v1738
    %v1740 = vmul.f32 %v1737, %v1739
    %v1741 = vlaneseq
    %v1742 = vshrl.u32 %v1741, 7
    %v1743 = vsub.s32 6, %v1742
    %v1744 = vrot.slane %v1740, %v1743
    %v1745 = vmul.f32 %v1723, %v1744
    %v1746 = vmul.f32 %v1725, %v1744
    %v1747 = vlaneseq
    %v1748 = vshrl.u32 %v1747, 7
    %v1749 = vsub.s32 6, %v1748
    %v1750 = vrot.slane %v1683, %v1749
    %v1751 = vmul.f32 %v1745, %v1750
    %v1752 = vsub.f32 %v1683, %v1751
    %v1753 = vmul.f32 %v1746, %v1750
    %v1754 = vsub.f32 %v1685, %v1753
    %v1755 = vlaneseq
    %v1756 = vshrl.u32 %v1755, 7
    %v1757 = vsub.s32 6, %v1756
    %v1758 = vrot.slane %v1691, %v1757
    %v1759 = vmul.f32 %v1745, %v1758
    %v1760 = vsub.f32 %v1691, %v1759
    %v1761 = vmul.f32 %v1746, %v1758
    %v1762 = vsub.f32 %v1693, %v1761
    %v1763 = vlaneseq
    %v1764 = vshrl.u32 %v1763, 7
    %v1765 = vsub.s32 6, %v1764
    %v1766 = vrot.slane %v1699, %v1765
    %v1767 = vmul.f32 %v1745, %v1766
    %v1768 = vsub.f32 %v1699, %v1767
    %v1769 = vmul.f32 %v1746, %v1766
    %v1770 = vsub.f32 %v1701, %v1769
    %v1771 = vlaneseq
    %v1772 = vshrl.u32 %v1771, 7
    %v1773 = vsub.s32 6, %v1772
    %v1774 = vrot.slane %v1707, %v1773
    %v1775 = vmul.f32 %v1745, %v1774
    %v1776 = vsub.f32 %v1707, %v1775
    %v1777 = vmul.f32 %v1746, %v1774
    %v1778 = vsub.f32 %v1709, %v1777
    %v1779 = vlaneseq
    %v1780 = vshrl.u32 %v1779, 7
    %v1781 = vsub.s32 6, %v1780
    %v1782 = vrot.slane %v1715, %v1781
    %v1783 = vmul.f32 %v1745, %v1782
    %v1784 = vsub.f32 %v1715, %v1783
    %v1785 = vmul.f32 %v1746, %v1782
    %v1786 = vsub.f32 %v1717, %v1785
    %v1787 = vlaneseq
    %v1788 = vshrl.u32 %v1787, 7
    %v1789 = vsub.s32 6, %v1788
    %v1790 = vrot.slane %v1676, %v1789
    %v1791 = vmul.f32 %v1745, %v1790
    %v1792 = vsub.f32 %v1676, %v1791
    %v1793 = vmul.f32 %v1746, %v1790
    %v1794 = vsub.f32 %v1677, %v1793
    %v1795 = vlaneseq
    %v1796 = vshrl.u32 %v1795, 7
    %v1797 = vsub.s32 6, %v1796
    %v1798 = vrot.slane %v1731, %v1797
    %v1799 = vmul.f32 %v1745, %v1798
    %v1800 = vsub.f32 %v1731, %v1799
    %v1801 = vmul.f32 %v1746, %v1798
    %v1802 = vsub.f32 %v1733, %v1801
    %v1803 = vand.u32 2147483647, %v1800
    %vm1804 = vcmp.gt.f32.partialorder %v1803, 1e-30
    %v1805 = vsel %vm1804, %v1800, 1e-30
    %v1806 = vrcp.pop %v1805
    %v1807 = vmul.f32 %v1805, %v1806
    %v1808 = vsub.f32 2.0, %v1807
    %v1809 = vmul.f32 %v1806, %v1808
    %v1810 = vlaneseq
    %v1811 = vshrl.u32 %v1810, 7
    %v1812 = vsub.s32 7, %v1811
    %v1813 = vrot.slane %v1809, %v1812
    %v1814 = vmul.f32 %v1802, %v1813
    %v1815 = vlaneseq
    %v1816 = vshrl.u32 %v1815, 7
    %v1817 = vsub.s32 7, %v1816
    %v1818 = vrot.slane %v1752, %v1817
    %v1819 = vmul.f32 %v1814, %v1818
    %v1820 = vsub.f32 %v1754, %v1819
    %v1821 = vlaneseq
    %v1822 = vshrl.u32 %v1821, 7
    %v1823 = vsub.s32 7, %v1822
    %v1824 = vrot.slane %v1760, %v1823
    %v1825 = vmul.f32 %v1814, %v1824
    %v1826 = vsub.f32 %v1762, %v1825
    %v1827 = vlaneseq
    %v1828 = vshrl.u32 %v1827, 7
    %v1829 = vsub.s32 7, %v1828
    %v1830 = vrot.slane %v1768, %v1829
    %v1831 = vmul.f32 %v1814, %v1830
    %v1832 = vsub.f32 %v1770, %v1831
    %v1833 = vlaneseq
    %v1834 = vshrl.u32 %v1833, 7
    %v1835 = vsub.s32 7, %v1834
    %v1836 = vrot.slane %v1776, %v1835
    %v1837 = vmul.f32 %v1814, %v1836
    %v1838 = vsub.f32 %v1778, %v1837
    %v1839 = vlaneseq
    %v1840 = vshrl.u32 %v1839, 7
    %v1841 = vsub.s32 7, %v1840
    %v1842 = vrot.slane %v1784, %v1841
    %v1843 = vmul.f32 %v1814, %v1842
    %v1844 = vsub.f32 %v1786, %v1843
    %v1845 = vlaneseq
    %v1846 = vshrl.u32 %v1845, 7
    %v1847 = vsub.s32 7, %v1846
    %v1848 = vrot.slane %v1792, %v1847
    %v1849 = vmul.f32 %v1814, %v1848
    %v1850 = vsub.f32 %v1794, %v1849
    %v1851 = vlaneseq
    %v1852 = vshrl.u32 %v1851, 7
    %v1853 = vsub.s32 7, %v1852
    %v1854 = vrot.slane %v1745, %v1853
    %v1855 = vmul.f32 %v1814, %v1854
    %v1856 = vsub.f32 %v1746, %v1855
    %1857 = vst [vmem:[%s2] sm:$0x7] %v1820
    %1858 = vst [vmem:[%s2 + $0x4] sm:$0x7] %v1826
    %1859 = vst [vmem:[%s2 + $0x8] sm:$0x7] %v1832
    %1860 = vst [vmem:[%s2 + $0xc] sm:$0x7] %v1838
    %1861 = vst [vmem:[%s2 + $0x10] sm:$0x7] %v1844
    %1862 = vst [vmem:[%s2 + $0x14] sm:$0x7] %v1850
    %1863 = vst [vmem:[%s2 + $0x18] sm:$0x7] %v1856
    %1864 = vst [vmem:[%s2 + $0x1c] sm:$0x7] %v1814
    // Predicated region
    $region18: #{tpu_custom_call.1} parent=1 // pred_check
      _
    $region19: #{tpu_custom_call.1} parent=1 // pred_check_branch
      %1866 = sbr.rel (0) target = $region21
    $region20: #{tpu_custom_call.1} parent=1 // pred_region
      _
    $region21: #{tpu_custom_call.1} parent=1 // pred_fallthru
      _
    // Predicated region
    $region22: #{tpu_custom_call.1} parent=1 // pred_check
      _
    $region23: #{tpu_custom_call.1} parent=1 // pred_check_branch
      %1868 = sbr.rel (0) target = $region25
    $region24: #{tpu_custom_call.1} parent=1 // pred_region
      _
    $region25: #{tpu_custom_call.1} parent=1 // pred_fallthru
      _
    %1869 = vsyncpa [#allocation3], 1
    %1870 = vsyncpa [#allocation5], 1

</llo_original>
